<compile_context>
chip_gen: v6e
topology: v6e:2x2x1
jax: 0.10.0
libtpu: 0.0.40
codegen_flags: <defaults>
</compile_context>

<pallas_src>
import math

import jax
import jax.numpy as jnp
import numpy as np
from jax.experimental import pallas as pl
from jax.experimental.pallas import tpu as pltpu

# ---------------- problem sizes (consistent with the module) -----------------
BATCH = 2
SEQ = 8
GLOBAL_DIM = 32
LOCAL_DIM = 16
NUM_HEADS = 8
EMBED = GLOBAL_DIM * 2                     # MHA embed size = 64
HEAD_DIM = EMBED // NUM_HEADS              # 8
OUT_DIM = GLOBAL_DIM + LOCAL_DIM           # 48
HEADS_PER_HALF = GLOBAL_DIM // HEAD_DIM    # 4 (heads 0..3 read g, 4..7 read la)
SCALE = 1.0 / math.sqrt(float(EMBED))

# ---------------- packed-operand layout ---------------------------------------
ONES_LANE = GLOBAL_DIM + LOCAL_DIM         # 48: constant-1 lane of the activations
XW = 56                                    # activation lanes: g(32)|l(16)|1|pad(7)
PROJ_W = 64                                # per-head projection lanes: q(8)|k(8)|vw(48)
HEAD_ROWS = XW                             # 56 rows per per-head weight block
W_HEADS_ROWS = NUM_HEADS * HEAD_ROWS       # 448
FIN_OFF = W_HEADS_ROWS                     # 448: output-network layer-1 block (56 rows)
W2_OFF = FIN_OFF + XW                      # 504: output-network layer-2 block (48 rows)
B2_OFF = W2_OFF + OUT_DIM                  # 552: final bias row
SLAB_ROWS = B2_OFF + 8                     # 560 (padded to a multiple of 8)
SLAB_W = 128                               # lane-dense slab / output width


# ================================ kernel ======================================
def _fusion_kernel(x_ref, w_ref, o_ref):
    f32 = jnp.float32
    rows = x_ref.shape[0]                     # bb * SEQ
    bb = rows // SEQ

    x = x_ref[...]                                                     # [R, 56]
    w_heads = w_ref[0:W_HEADS_ROWS, 0:PROJ_W].reshape(
        NUM_HEADS, HEAD_ROWS, PROJ_W)                                  # [8, 56, 64]
    w_fin = w_ref[FIN_OFF:FIN_OFF + XW, 0:OUT_DIM]                     # [56, 48]
    w_out = w_ref[W2_OFF:W2_OFF + OUT_DIM, :]                          # [48, 128]
    b_out = w_ref[B2_OFF:B2_OFF + 1, :]                                # [1, 128]

    # Fused head-major projection: one batched MXU matmul (batch = heads)
    # produces q | k | (Wfc,W1a-folded V) per head.  local_dim_adjust and all
    # projection biases are folded into the weights / the ones-lane of x, so
    # the output is already laid out head-major for the attention einsums.
    xh = jnp.broadcast_to(x[None, :, :], (NUM_HEADS, rows, XW))
    proj = jnp.einsum('hrk,hkd->hrd', xh, w_heads,
                      preferred_element_type=f32)                      # [8, R, 64]

    q = proj[:, :, 0:HEAD_DIM].reshape(NUM_HEADS * bb, SEQ, HEAD_DIM)
    k = proj[:, :, HEAD_DIM:2 * HEAD_DIM].reshape(NUM_HEADS * bb, SEQ, HEAD_DIM)
    vw = proj[:, :, 2 * HEAD_DIM:].reshape(NUM_HEADS * bb, SEQ, OUT_DIM)

    # Attention batched over (head, batch element): per-element energies only
    # (no cross-batch terms, no mask) and ONE vectorised softmax for all heads.
    e = jnp.einsum('bqd,bkd->bqk', q, k, preferred_element_type=f32) * SCALE
    e = e - jnp.max(e, axis=-1, keepdims=True)
    p = jnp.exp(e)
    # approx=True would use the EUP vrcp; kept exact so the 2e-4 f32 parity
    # check in __main__ holds unconditionally (flip once tolerance is relaxed).
    p = p * pl.reciprocal(jnp.sum(p, axis=-1, keepdims=True), approx=False)
    attn = jnp.einsum('bqk,bkd->bqd', p, vw, preferred_element_type=f32)
    attn = attn.reshape(NUM_HEADS, rows, OUT_DIM).sum(axis=0)          # [R, 48]

    # output_network: h1 = relu(attn + x @ w_fin)   (all layer-1 biases ride on
    # the ones-lane of x); out = h1 @ w_out + b_out, already padded to 128
    # lanes -> unmasked full-vreg stores.
    h1 = jnp.maximum(attn + jnp.dot(x, w_fin, preferred_element_type=f32), 0.0)
    o_ref[...] = jnp.dot(h1, w_out, preferred_element_type=f32) + b_out


# ====================== host-side weight folding (run once) ===================
def prepare_weights(params):
    """Fold the whole module into one 128-lane f32 slab.  Pure NumPy: call once
    at init and reuse the returned array for every forward call."""
    wadj, badj, wq, wk, wv, wfc, bfc, w1, b1, w2, b2 = [
        np.asarray(p, np.float32) for p in params]

    wadj_t = wadj.T                        # [16, 32]
    wq_t, wk_t, wv_t = wq.T, wk.T, wv.T    # [8, 8] (shared across heads)
    wfc_t = wfc.T                          # [64, 32]
    w1_t = w1.T                            # [64, 48]
    w1a, w1b = w1_t[:GLOBAL_DIM], w1_t[GLOBAL_DIM:]   # refined part, g part

    slab = np.zeros((SLAB_ROWS, SLAB_W), np.float32)

    for h in range(NUM_HEADS):
        blk = np.zeros((HEAD_ROWS, PROJ_W), np.float32)
        # value path with fc_out and W1a folded in: [8, 48]
        vw_chain = wv_t @ wfc_t[h * HEAD_DIM:(h + 1) * HEAD_DIM] @ w1a
        if h < HEADS_PER_HALF:             # heads 0..3 read the g lanes of x
            r0 = h * HEAD_DIM
            blk[r0:r0 + HEAD_DIM, 0:HEAD_DIM] = wq_t
            blk[r0:r0 + HEAD_DIM, HEAD_DIM:2 * HEAD_DIM] = wk_t
            blk[r0:r0 + HEAD_DIM, 2 * HEAD_DIM:] = vw_chain
        else:                              # heads 4..7 read the l lanes (Wadj folded)
            hh = h - HEADS_PER_HALF
            adj = wadj_t[:, hh * HEAD_DIM:(hh + 1) * HEAD_DIM]    # [16, 8]
            bad = badj[hh * HEAD_DIM:(hh + 1) * HEAD_DIM]         # [8]
            blk[GLOBAL_DIM:ONES_LANE, 0:HEAD_DIM] = adj @ wq_t
            blk[GLOBAL_DIM:ONES_LANE, HEAD_DIM:2 * HEAD_DIM] = adj @ wk_t
            blk[GLOBAL_DIM:ONES_LANE, 2 * HEAD_DIM:] = adj @ vw_chain
            blk[ONES_LANE, 0:HEAD_DIM] = bad @ wq_t
            blk[ONES_LANE, HEAD_DIM:2 * HEAD_DIM] = bad @ wk_t
            blk[ONES_LANE, 2 * HEAD_DIM:] = bad @ vw_chain
        slab[h * HEAD_ROWS:(h + 1) * HEAD_ROWS, 0:PROJ_W] = blk

    # output network, layer 1:  h1 = attn + [g | l | 1] @ w_fin
    #   rows 0:32  -> g @ W1b
    #   rows 32:48 -> l @ (Wadj^T W1a)        (the la contribution)
    #   row  48    -> b1 + badj@W1a + bfc@W1a (all layer-1 biases folded)
    slab[FIN_OFF:FIN_OFF + GLOBAL_DIM, 0:OUT_DIM] = w1b
    slab[FIN_OFF + GLOBAL_DIM:FIN_OFF + ONES_LANE, 0:OUT_DIM] = wadj_t @ w1a
    slab[FIN_OFF + ONES_LANE, 0:OUT_DIM] = b1 + badj @ w1a + bfc @ w1a

    # output network, layer 2 (output lanes padded to 128 for unmasked stores)
    slab[W2_OFF:W2_OFF + OUT_DIM, 0:OUT_DIM] = w2.T
    slab[B2_OFF, 0:OUT_DIM] = b2
    return jnp.asarray(slab)


# ================================ wrapper ======================================
def _pick_batch_block(n):
    """Batch elements per grid step."""
    if n * SEQ <= 512:
        return n            # one step: fixed per-step overhead dominates below this
    for bb in range(64, 0, -8):   # multiple-of-8 blocks keep the (8,128) tiling legal
        if n % bb == 0:
            return bb
    # TODO(synk): large batches with no multiple-of-8 divisor fall back to a
    # single (VMEM-heavy) step; a pad-and-mask path would be needed for those.
    return n


def feature_fusion_module2(global_features, local_features, weight_slab):
    """global: [N,S,32] f32, local: [N,S,16] f32  ->  [N,S,48] f32."""
    n, s, g = global_features.shape
    ld = local_features.shape[-1]
    assert (g, ld, s) == (GLOBAL_DIM, LOCAL_DIM, SEQ)
    rows = n * SEQ

    # Lane-dense activation slab [g | l | 1 | 0-pad], built outside the kernel
    # (free XLA reshape/concat) so the kernel sees one plain 2-D tile.
    x_aug = jnp.concatenate(
        [global_features.reshape(rows, GLOBAL_DIM),
         local_features.reshape(rows, LOCAL_DIM),
         jnp.ones((rows, 1), jnp.float32),
         jnp.zeros((rows, XW - ONES_LANE - 1), jnp.float32)],
        axis=-1)

    bb = _pick_batch_block(n)
    n_steps = n // bb

    out_padded = pl.pallas_call(
        _fusion_kernel,
        out_shape=jax.ShapeDtypeStruct((rows, SLAB_W), jnp.float32),
        grid=(n_steps,),
        in_specs=[
            pl.BlockSpec((bb * SEQ, XW), lambda b: (b, 0)),
            pl.BlockSpec((SLAB_ROWS, SLAB_W), lambda b: (0, 0)),
        ],
        out_specs=pl.BlockSpec((bb * SEQ, SLAB_W), lambda b: (b, 0)),
        compiler_params=pltpu.CompilerParams(
            dimension_semantics=("parallel",)),
    )(x_aug, weight_slab)

    # Lanes 48:128 are zero padding (kept so in-kernel stores stay unmasked).
    return out_padded[:, :OUT_DIM].reshape(n, SEQ, OUT_DIM)


# ============================ pure-JAX reference ===============================
def reference_forward(global_features, local_features, params):
    """Mirrors the PyTorch forward exactly (unfolded weights)."""
    (wadj, badj, wq, wk, wv, wfc, bfc, w1, b1, w2, b2) = params
    la = local_features @ wadj.T + badj                         # [N,S,32]
    comb = jnp.concatenate([global_features, la], axis=-1)      # [N,S,64]
    N, S, _ = comb.shape
    c = comb.reshape(N, S, NUM_HEADS, HEAD_DIM)
    q = c @ wq.T
    k = c @ wk.T
    v = c @ wv.T
    energy = jnp.einsum('nqhd,nkhd->nhqk', q, k)
    attn = jax.nn.softmax(energy / math.sqrt(EMBED), axis=3)
    o = jnp.einsum('nhql,nlhd->nqhd', attn, v).reshape(N, S, EMBED)
    flow = o @ wfc.T + bfc                                      # [N,S,32]
    refined = la + flow
    final = jnp.concatenate([refined, global_features], axis=-1)
    h1 = jax.nn.relu(final @ w1.T + b1)
    return h1 @ w2.T + b2


def init_params(key):
    """Deterministic parameter init (PyTorch Linear weight shapes: [out, in])."""
    ks = jax.random.split(key, 11)

    def lin(k, out_d, in_d):
        bound = 1.0 / math.sqrt(in_d)
        return jax.random.uniform(k, (out_d, in_d), jnp.float32, -bound, bound)

    def bias(k, out_d, in_d):
        bound = 1.0 / math.sqrt(in_d)
        return jax.random.uniform(k, (out_d,), jnp.float32, -bound, bound)

    wadj = lin(ks[0], GLOBAL_DIM, LOCAL_DIM)
    badj = bias(ks[1], GLOBAL_DIM, LOCAL_DIM)
    wq = lin(ks[2], HEAD_DIM, HEAD_DIM)
    wk = lin(ks[3], HEAD_DIM, HEAD_DIM)
    wv = lin(ks[4], HEAD_DIM, HEAD_DIM)
    wfc = lin(ks[5], GLOBAL_DIM, EMBED)
    bfc = bias(ks[6], GLOBAL_DIM, EMBED)
    w1 = lin(ks[7], OUT_DIM, EMBED)
    b1 = bias(ks[8], OUT_DIM, EMBED)
    w2 = lin(ks[9], OUT_DIM, OUT_DIM)
    b2 = bias(ks[10], OUT_DIM, OUT_DIM)
    return (wadj, badj, wq, wk, wv, wfc, bfc, w1, b1, w2, b2)


if __name__ == "__main__":
    key = jax.random.PRNGKey(0)
    k_g, k_l, k_p = jax.random.split(key, 3)

    global_features = jax.random.normal(k_g, (BATCH, SEQ, GLOBAL_DIM), jnp.float32)
    local_features = jax.random.normal(k_l, (BATCH, SEQ, LOCAL_DIM), jnp.float32)
    params = init_params(k_p)

    weight_slab = prepare_weights(params)        # host-side, run once

    out = jax.block_until_ready(
        feature_fusion_module2(global_features, local_features, weight_slab))
    ref = jax.block_until_ready(
        reference_forward(global_features, local_features, params))

    np.testing.assert_allclose(np.asarray(out), np.asarray(ref),
                               rtol=2e-4, atol=2e-4)
    print("KERNEL_OK")
</pallas_src>

<mosaic_0001>
module attributes {stable_mosaic.version = 11 : i64} {
  func.func @_fusion_kernel(%arg0: i32, %arg1: memref<16x56xf32, #tpu.memory_space<vmem>>, %arg2: memref<560x128xf32, #tpu.memory_space<vmem>>, %arg3: memref<16x128xf32, #tpu.memory_space<vmem>>) attributes {dimension_semantics = [#tpu.dimension_semantics<parallel>], iteration_bounds = array<i64: 1>, scalar_prefetch = 0 : i64, scratch_operands = 0 : i64, tpu.core_type = #tpu.core_type<tc>, window_params = [{transform_indices = @transform_0, window_bounds = array<i64: 16, 56>}, {pipeline_mode = #tpu.pipeline_mode<synchronous>, transform_indices = @transform_1, window_bounds = array<i64: 560, 128>}, {transform_indices = @transform_2, window_bounds = array<i64: 16, 128>}]} {
    %c0 = arith.constant 0 : index
    %c0_0 = arith.constant 0 : index
    %0 = vector.load %arg1[%c0, %c0_0] : memref<16x56xf32, #tpu.memory_space<vmem>>, vector<16x56xf32>
    %c0_1 = arith.constant 0 : index
    %c0_2 = arith.constant 0 : index
    %1 = vector.load %arg2[%c0_1, %c0_2] : memref<560x128xf32, #tpu.memory_space<vmem>>, vector<448x64xf32>
    %2 = vector.shape_cast %1 : vector<448x64xf32> to vector<8x56x64xf32>
    %c448 = arith.constant 448 : index
    %c0_3 = arith.constant 0 : index
    %3 = vector.load %arg2[%c448, %c0_3] : memref<560x128xf32, #tpu.memory_space<vmem>>, vector<56x48xf32>
    %c504 = arith.constant 504 : index
    %c0_4 = arith.constant 0 : index
    %4 = vector.load %arg2[%c504, %c0_4] : memref<560x128xf32, #tpu.memory_space<vmem>>, vector<48x128xf32>
    %c552 = arith.constant 552 : index
    %c0_5 = arith.constant 0 : index
    %5 = vector.load %arg2[%c552, %c0_5] : memref<560x128xf32, #tpu.memory_space<vmem>>, vector<1x128xf32>
    %6 = vector.shape_cast %0 : vector<16x56xf32> to vector<1x16x56xf32>
    %7 = vector.shape_cast %6 : vector<1x16x56xf32> to vector<1x16x56xf32>
    %8 = vector.broadcast %7 : vector<1x16x56xf32> to vector<8x16x56xf32>
    "tpu.trace_start"() <{level = 10 : i32, message = "hrk,hkd->hrd"}> : () -> ()
    %cst = arith.constant dense<0.000000e+00> : vector<8x16x64xf32>
    %9 = tpu.matmul %8, %2, %cst {dimension_numbers = #tpu.dot_dimension_numbers<[2], [1], [1], [2], [0, 0, 0, 1, 1, 2], [0], [0]>} : vector<8x16x56xf32>, vector<8x56x64xf32>, vector<8x16x64xf32> -> vector<8x16x64xf32>
    "tpu.trace_stop"() : () -> ()
    %10 = vector.extract_strided_slice %9 {offsets = [0, 0, 0], sizes = [8, 16, 8], strides = [1, 1, 1]} : vector<8x16x64xf32> to vector<8x16x8xf32>
    %11 = vector.shape_cast %10 : vector<8x16x8xf32> to vector<16x8x8xf32>
    %12 = vector.extract_strided_slice %9 {offsets = [0, 0, 8], sizes = [8, 16, 8], strides = [1, 1, 1]} : vector<8x16x64xf32> to vector<8x16x8xf32>
    %13 = vector.shape_cast %12 : vector<8x16x8xf32> to vector<16x8x8xf32>
    %14 = vector.extract_strided_slice %9 {offsets = [0, 0, 16], sizes = [8, 16, 48], strides = [1, 1, 1]} : vector<8x16x64xf32> to vector<8x16x48xf32>
    %15 = vector.shape_cast %14 : vector<8x16x48xf32> to vector<16x8x48xf32>
    "tpu.trace_start"() <{level = 10 : i32, message = "bqd,bkd->bqk"}> : () -> ()
    %cst_6 = arith.constant dense<0.000000e+00> : vector<16x8x8xf32>
    %16 = tpu.matmul %11, %13, %cst_6 {dimension_numbers = #tpu.dot_dimension_numbers<[2], [2], [1], [1], [0, 0, 0, 1, 1, 1], [0], [0]>} : vector<16x8x8xf32>, vector<16x8x8xf32>, vector<16x8x8xf32> -> vector<16x8x8xf32>
    "tpu.trace_stop"() : () -> ()
    %cst_7 = arith.constant 1.250000e-01 : f32
    %17 = vector.broadcast %cst_7 : f32 to vector<16x8x8xf32>
    %18 = arith.mulf %16, %17 : vector<16x8x8xf32>
    %cst_8 = arith.constant dense<0xFF800000> : vector<16x8xf32>
    %19 = vector.multi_reduction <maximumf>, %18, %cst_8 [2] : vector<16x8x8xf32> to vector<16x8xf32>
    %20 = vector.shape_cast %19 : vector<16x8xf32> to vector<16x8x1xf32>
    %21 = vector.broadcast %20 : vector<16x8x1xf32> to vector<16x8x8xf32>
    %22 = arith.subf %18, %21 : vector<16x8x8xf32>
    %23 = math.exp %22 : vector<16x8x8xf32>
    %cst_9 = arith.constant dense<0.000000e+00> : vector<16x8xf32>
    %24 = vector.multi_reduction <add>, %23, %cst_9 [2] : vector<16x8x8xf32> to vector<16x8xf32>
    %25 = vector.shape_cast %24 : vector<16x8xf32> to vector<16x8x1xf32>
    %26 = tpu.reciprocal %25 : vector<16x8x1xf32> -> vector<16x8x1xf32>
    %27 = vector.broadcast %26 : vector<16x8x1xf32> to vector<16x8x8xf32>
    %28 = arith.mulf %23, %27 : vector<16x8x8xf32>
    "tpu.trace_start"() <{level = 10 : i32, message = "bqk,bkd->bqd"}> : () -> ()
    %cst_10 = arith.constant dense<0.000000e+00> : vector<16x8x48xf32>
    %29 = tpu.matmul %28, %15, %cst_10 {dimension_numbers = #tpu.dot_dimension_numbers<[2], [1], [1], [2], [0, 0, 0, 1, 1, 2], [0], [0]>} : vector<16x8x8xf32>, vector<16x8x48xf32>, vector<16x8x48xf32> -> vector<16x8x48xf32>
    "tpu.trace_stop"() : () -> ()
    %30 = vector.shape_cast %29 : vector<16x8x48xf32> to vector<8x16x48xf32>
    %cst_11 = arith.constant dense<0.000000e+00> : vector<16x48xf32>
    %31 = vector.multi_reduction <add>, %30, %cst_11 [0] : vector<8x16x48xf32> to vector<16x48xf32>
    %cst_12 = arith.constant dense<0.000000e+00> : vector<16x48xf32>
    %32 = tpu.matmul %0, %3, %cst_12 {dimension_numbers = #tpu.dot_dimension_numbers<[1], [0], [0], [1], [0, 0, 1, 1], [], []>} : vector<16x56xf32>, vector<56x48xf32>, vector<16x48xf32> -> vector<16x48xf32>
    %33 = arith.addf %31, %32 : vector<16x48xf32>
    %cst_13 = arith.constant 0.000000e+00 : f32
    %34 = vector.broadcast %cst_13 : f32 to vector<16x48xf32>
    %35 = arith.maximumf %33, %34 : vector<16x48xf32>
    %cst_14 = arith.constant dense<0.000000e+00> : vector<16x128xf32>
    %36 = tpu.matmul %35, %4, %cst_14 {dimension_numbers = #tpu.dot_dimension_numbers<[1], [0], [0], [1], [0, 0, 1, 1], [], []>} : vector<16x48xf32>, vector<48x128xf32>, vector<16x128xf32> -> vector<16x128xf32>
    %37 = vector.broadcast %5 : vector<1x128xf32> to vector<16x128xf32>
    %38 = arith.addf %36, %37 : vector<16x128xf32>
    %c0_15 = arith.constant 0 : index
    %c0_16 = arith.constant 0 : index
    %39 = vector.load %arg3[%c0_15, %c0_16] : memref<16x128xf32, #tpu.memory_space<vmem>>, vector<16x128xf32>
    tpu.vector_store %arg3[%c0_15, %c0_16], %38 {strides = array<i32>} : memref<16x128xf32, #tpu.memory_space<vmem>>, vector<16x128xf32>,
    return
  }
  func.func @transform_0(%arg0: i32) -> (i32, i32) {
    %c0_i32 = arith.constant 0 : i32
    %c0_i32_0 = arith.constant 0 : i32
    return %arg0, %c0_i32 : i32, i32
  }
  func.func @transform_1(%arg0: i32) -> (i32, i32) {
    %c0_i32 = arith.constant 0 : i32
    %c0_i32_0 = arith.constant 0 : i32
    %c0_i32_1 = arith.constant 0 : i32
    return %c0_i32, %c0_i32_0 : i32, i32
  }
  func.func @transform_2(%arg0: i32) -> (i32, i32) {
    %c0_i32 = arith.constant 0 : i32
    %c0_i32_0 = arith.constant 0 : i32
    return %arg0, %c0_i32 : i32, i32
  }
}

</mosaic_0001>

<llo_original>
// kernel: tpu_custom_call.1
$region0: #{tpu_custom_call.1}
  #allocation0 [shape = 'u32[]', space=smem, size = 0x4, offset = 0x4, fixed_abs, tag = 'smem constant byte address 0x4 - core index']
  #allocation1 [shape = 'u32[144,128]{1,0:T(1,128)}', space=vmem, size = 0x12000, scoped, tag = 'internal scratch']
  %s0 = inlined_call_operand.hbm [shape: f32[16,56], index: 0, kind: input, shape index: {}]
  %s1 = inlined_call_operand.hbm [shape: f32[560,128], index: 1, kind: input, shape index: {}]
  %s2 = inlined_call_operand.hbm [shape: f32[16,128], index: 2, kind: output, shape index: {}]
  %s3 = sld [smem:[#allocation0]]
  $region26: #{tpu_custom_call.1} parent=0
    _
  %s5 = ssub.s32 1, %s3
  %s6 = scalar_select 0, %s5, %s3
  $region1: #{tpu_custom_call.1} parent=0
    #allocation2 [shape = 'u8[8192]{0}', space=vmem, size = 0x2000, scoped, tag = 'input window, operand 0, single buffered']
    #allocation3 [shape = 's32[1]{0}', space=sflag, size = 0x4, scoped, tag = 'scoped memory for tpu_custom_call.1']
    #allocation4 [shape = 's32[1]{0}', space=sflag, size = 0x4, scoped, tag = 'scoped memory for tpu_custom_call.1']
    #allocation5 [shape = 'u8[286720]{0}', space=vmem, size = 0x46000, scoped, tag = 'input window, operand 1, single buffered']
    #allocation6 [shape = 's32[1]{0}', space=sflag, size = 0x4, scoped, tag = 'scoped memory for tpu_custom_call.1']
    #allocation7 [shape = 'u8[8192]{0}', space=vmem, size = 0x2000, scoped, tag = 'output window, operand 0, single buffered']
    %7 = vsyncpa [#allocation3], 0
    %8 = vsyncpa [#allocation6], 0
    %9 = vsyncpa [#allocation4], 0
    // Predicated region
    $region2: #{tpu_custom_call.1} parent=1 // pred_check
      _
    $region3: #{tpu_custom_call.1} parent=1 // pred_check_branch
      %11 = sbr.rel (0) target = $region5
    $region4: #{tpu_custom_call.1} parent=1 // pred_region
      %s13 = ssub.s32 256, 256
      %14 = vsyncadd [#allocation3], %s13
      %s15 = sshll.u32 [#allocation2], 4
      %s16 = int_to_ptr.vmem [resolvable:$true] %s15
      %21 = dma.hbm_to_vmem [thread:$0]  %s0, 256, %s16, [#allocation3], 128, 128, 8
    $region5: #{tpu_custom_call.1} parent=1 // pred_fallthru
      _
    // Predicated region
    $region6: #{tpu_custom_call.1} parent=1 // pred_check
      _
    $region7: #{tpu_custom_call.1} parent=1 // pred_check_branch
      %23 = sbr.rel (0) target = $region9
    $region8: #{tpu_custom_call.1} parent=1 // pred_region
      %s25 = ssub.s32 8960, 8960
      %26 = vsyncadd [#allocation6], %s25
      %s27 = sshll.u32 [#allocation5], 4
      %s28 = int_to_ptr.vmem [resolvable:$true] %s27
      %33 = dma.hbm_to_vmem [thread:$0]  %s1, 8960, %s28, [#allocation6], 128, 128, 8
    $region9: #{tpu_custom_call.1} parent=1 // pred_fallthru
      _
    // Predicated region
    $region10: #{tpu_custom_call.1} parent=1 // pred_check
      _
    $region11: #{tpu_custom_call.1} parent=1 // pred_check_branch
      %35 = sbr.rel (0) target = $region13
    $region12: #{tpu_custom_call.1} parent=1 // pred_region
      %36 = dma.done [#allocation3], 256
    $region13: #{tpu_custom_call.1} parent=1 // pred_fallthru
      _
    // Predicated region
    $region14: #{tpu_custom_call.1} parent=1 // pred_check
      _
    $region15: #{tpu_custom_call.1} parent=1 // pred_check_branch
      %38 = sbr.rel (0) target = $region17
    $region16: #{tpu_custom_call.1} parent=1 // pred_region
      %39 = dma.done [#allocation6], 8960
    $region17: #{tpu_custom_call.1} parent=1 // pred_fallthru
      _
    %v40 = vld [vmem:[#allocation2] sm:$0xff]
    %v41 = vld [vmem:[#allocation2 + $0x8] sm:$0xff]
    %v42 = vld [vmem:[#allocation5] sm:$0xff]
    %v43 = vld [vmem:[#allocation5 + $0x8] sm:$0xff]
    %v44 = vld [vmem:[#allocation5 + $0x10] sm:$0xff]
    %v45 = vld [vmem:[#allocation5 + $0x18] sm:$0xff]
    %v46 = vld [vmem:[#allocation5 + $0x20] sm:$0xff]
    %v47 = vld [vmem:[#allocation5 + $0x28] sm:$0xff]
    %v48 = vld [vmem:[#allocation5 + $0x30] sm:$0xff]
    %v49 = vld [vmem:[#allocation5 + $0x38] sm:$0xff]
    %v50 = vld [vmem:[#allocation5 + $0x40] sm:$0xff]
    %v51 = vld [vmem:[#allocation5 + $0x48] sm:$0xff]
    %v52 = vld [vmem:[#allocation5 + $0x50] sm:$0xff]
    %v53 = vld [vmem:[#allocation5 + $0x58] sm:$0xff]
    %v54 = vld [vmem:[#allocation5 + $0x60] sm:$0xff]
    %v55 = vld [vmem:[#allocation5 + $0x68] sm:$0xff]
    %v56 = vld [vmem:[#allocation5 + $0x70] sm:$0xff]
    %v57 = vld [vmem:[#allocation5 + $0x78] sm:$0xff]
    %v58 = vld [vmem:[#allocation5 + $0x80] sm:$0xff]
    %v59 = vld [vmem:[#allocation5 + $0x88] sm:$0xff]
    %v60 = vld [vmem:[#allocation5 + $0x90] sm:$0xff]
    %v61 = vld [vmem:[#allocation5 + $0x98] sm:$0xff]
    %v62 = vld [vmem:[#allocation5 + $0xa0] sm:$0xff]
    %v63 = vld [vmem:[#allocation5 + $0xa8] sm:$0xff]
    %v64 = vld [vmem:[#allocation5 + $0xb0] sm:$0xff]
    %v65 = vld [vmem:[#allocation5 + $0xb8] sm:$0xff]
    %v66 = vld [vmem:[#allocation5 + $0xc0] sm:$0xff]
    %v67 = vld [vmem:[#allocation5 + $0xc8] sm:$0xff]
    %v68 = vld [vmem:[#allocation5 + $0xd0] sm:$0xff]
    %v69 = vld [vmem:[#allocation5 + $0xd8] sm:$0xff]
    %v70 = vld [vmem:[#allocation5 + $0xe0] sm:$0xff]
    %v71 = vld [vmem:[#allocation5 + $0xe8] sm:$0xff]
    %v72 = vld [vmem:[#allocation5 + $0xf0] sm:$0xff]
    %v73 = vld [vmem:[#allocation5 + $0xf8] sm:$0xff]
    %v74 = vld [vmem:[#allocation5 + $0x100] sm:$0xff]
    %v75 = vld [vmem:[#allocation5 + $0x108] sm:$0xff]
    %v76 = vld [vmem:[#allocation5 + $0x110] sm:$0xff]
    %v77 = vld [vmem:[#allocation5 + $0x118] sm:$0xff]
    %v78 = vld [vmem:[#allocation5 + $0x120] sm:$0xff]
    %v79 = vld [vmem:[#allocation5 + $0x128] sm:$0xff]
    %v80 = vld [vmem:[#allocation5 + $0x130] sm:$0xff]
    %v81 = vld [vmem:[#allocation5 + $0x138] sm:$0xff]
    %v82 = vld [vmem:[#allocation5 + $0x140] sm:$0xff]
    %v83 = vld [vmem:[#allocation5 + $0x148] sm:$0xff]
    %v84 = vld [vmem:[#allocation5 + $0x150] sm:$0xff]
    %v85 = vld [vmem:[#allocation5 + $0x158] sm:$0xff]
    %v86 = vld [vmem:[#allocation5 + $0x160] sm:$0xff]
    %v87 = vld [vmem:[#allocation5 + $0x168] sm:$0xff]
    %v88 = vld [vmem:[#allocation5 + $0x170] sm:$0xff]
    %v89 = vld [vmem:[#allocation5 + $0x178] sm:$0xff]
    %v90 = vld [vmem:[#allocation5 + $0x180] sm:$0xff]
    %v91 = vld [vmem:[#allocation5 + $0x188] sm:$0xff]
    %v92 = vld [vmem:[#allocation5 + $0x190] sm:$0xff]
    %v93 = vld [vmem:[#allocation5 + $0x198] sm:$0xff]
    %v94 = vld [vmem:[#allocation5 + $0x1a0] sm:$0xff]
    %v95 = vld [vmem:[#allocation5 + $0x1a8] sm:$0xff]
    %v96 = vld [vmem:[#allocation5 + $0x1b0] sm:$0xff]
    %v97 = vld [vmem:[#allocation5 + $0x1b8] sm:$0xff]
    %v98 = vld [vmem:[#allocation5 + $0x1c0] sm:$0xff]
    %v99 = vld [vmem:[#allocation5 + $0x1c8] sm:$0xff]
    %v100 = vld [vmem:[#allocation5 + $0x1d0] sm:$0xff]
    %v101 = vld [vmem:[#allocation5 + $0x1d8] sm:$0xff]
    %v102 = vld [vmem:[#allocation5 + $0x1e0] sm:$0xff]
    %v103 = vld [vmem:[#allocation5 + $0x1e8] sm:$0xff]
    %v104 = vld [vmem:[#allocation5 + $0x1f0] sm:$0xff]
    %v105 = vld [vmem:[#allocation5 + $0x1f8] sm:$0xff]
    %v106 = vld [vmem:[#allocation5 + $0x200] sm:$0xff]
    %v107 = vld [vmem:[#allocation5 + $0x208] sm:$0xff]
    %v108 = vld [vmem:[#allocation5 + $0x210] sm:$0xff]
    %v109 = vld [vmem:[#allocation5 + $0x218] sm:$0xff]
    %v110 = vld [vmem:[#allocation5 + $0x220] sm:$0xff]
    %v111 = vld [vmem:[#allocation5 + $0x228] sm:$0x1]
    %vm112 = vcmask 457728
    %v114 = vsel %vm112, %v40, 0
    %v117 = vsel %vm112, %v41, 0
    %119 = vmatprep.subr.mxu0 0.0
    %120 = vmatpush1.msra.mxu0 0.0
    %121 = vmatprep.subr.mxu0 0.0
    %122 = vmatpush1.msra.mxu0 0.0
    %123 = vmatprep.subr.mxu0 0.0
    %124 = vmatpush1.msra.mxu0 0.0
    %125 = vmatprep.subr.mxu0 0.0
    %126 = vmatpush1.msra.mxu0 0.0
    %127 = vmatprep.subr.mxu0 0.0
    %128 = vmatpush1.msra.mxu0 0.0
    %129 = vmatprep.subr.mxu0 0.0
    %130 = vmatpush1.msra.mxu0 0.0
    %131 = vmatprep.subr.mxu0 0.0
    %132 = vmatpush1.msra.mxu0 0.0
    %133 = vmatprep.subr.mxu0 0.0
    %134 = vmatpush1.msra.mxu0 0.0
    %135 = vmatprep.subr.mxu0 0.0
    %136 = vmatpush1.msra.mxu0 0.0
    %137 = vmatprep.subr.mxu0 0.0
    %138 = vmatpush1.msra.mxu0 %v48
    %139 = vmatprep.subr.mxu0 0.0
    %140 = vmatpush1.msra.mxu0 %v47
    %141 = vmatprep.subr.mxu0 0.0
    %142 = vmatpush1.msra.mxu0 %v46
    %143 = vmatprep.subr.mxu0 0.0
    %144 = vmatpush1.msra.mxu0 %v45
    %145 = vmatprep.subr.mxu0 0.0
    %146 = vmatpush1.msra.mxu0 %v44
    %147 = vmatprep.subr.mxu0 0.0
    %148 = vmatpush1.msra.mxu0 %v43
    %149 = vmatprep.subr.mxu0 0.0
    %150 = vmatpush1.msra.mxu0 %v42
    %151 = vmatprep.subr.mxu0 0.0
    %152 = vmatpush2.msra.mxu0 0.0
    %153 = vmatprep.subr.mxu0 0.0
    %154 = vmatpush2.msra.mxu0 0.0
    %155 = vmatprep.subr.mxu0 0.0
    %156 = vmatpush2.msra.mxu0 0.0
    %157 = vmatprep.subr.mxu0 0.0
    %158 = vmatpush2.msra.mxu0 0.0
    %159 = vmatprep.subr.mxu0 0.0
    %160 = vmatpush2.msra.mxu0 0.0
    %161 = vmatprep.subr.mxu0 0.0
    %162 = vmatpush2.msra.mxu0 0.0
    %163 = vmatprep.subr.mxu0 0.0
    %164 = vmatpush2.msra.mxu0 0.0
    %165 = vmatprep.subr.mxu0 0.0
    %166 = vmatpush2.msra.mxu0 0.0
    %167 = vmatprep.subr.mxu0 0.0
    %168 = vmatpush2.msra.mxu0 0.0
    %169 = vmatprep.subr.mxu0 0.0
    %170 = vmatpush2.msra.mxu0 0.0
    %171 = vmatprep.subr.mxu0 0.0
    %172 = vmatpush2.msra.mxu0 0.0
    %173 = vmatprep.subr.mxu0 0.0
    %174 = vmatpush2.msra.mxu0 0.0
    %175 = vmatprep.subr.mxu0 0.0
    %176 = vmatpush2.msra.mxu0 0.0
    %177 = vmatprep.subr.mxu0 0.0
    %178 = vmatpush2.msra.mxu0 0.0
    %179 = vmatprep.subr.mxu0 0.0
    %180 = vmatpush2.msra.mxu0 0.0
    %181 = vmatprep.subr.mxu0 0.0
    %182 = vmatpush2.msra.mxu0 0.0
    %183 = vmatprep.mubr.f32.mxu0 0.0
    %184 = vmatmul.mubr.f32.gmra.mxu0 %v114
    %v185 = vpop.f32.mrf.mxu0
    %v186 = vadd.f32 0.0, %v185
    %v187 = vpop.f32.mrf.mxu0
    %188 = vmatprep.mubr.f32.mxu0 0.0
    %189 = vmatmul.mubr.f32.gmra.mxu0 %v117
    %v190 = vpop.f32.mrf.mxu0
    %v191 = vadd.f32 0.0, %v190
    %v192 = vpop.f32.mrf.mxu0
    %193 = vdwg.mxu0
    %194 = vmatprep.subr.mxu0 0.0
    %195 = vmatpush1.msra.mxu0 0.0
    %196 = vmatprep.subr.mxu0 0.0
    %197 = vmatpush1.msra.mxu0 0.0
    %198 = vmatprep.subr.mxu0 0.0
    %199 = vmatpush1.msra.mxu0 0.0
    %200 = vmatprep.subr.mxu0 0.0
    %201 = vmatpush1.msra.mxu0 0.0
    %202 = vmatprep.subr.mxu0 0.0
    %203 = vmatpush1.msra.mxu0 0.0
    %204 = vmatprep.subr.mxu0 0.0
    %205 = vmatpush1.msra.mxu0 0.0
    %206 = vmatprep.subr.mxu0 0.0
    %207 = vmatpush1.msra.mxu0 0.0
    %208 = vmatprep.subr.mxu0 0.0
    %209 = vmatpush1.msra.mxu0 0.0
    %210 = vmatprep.subr.mxu0 0.0
    %211 = vmatpush1.msra.mxu0 0.0
    %212 = vmatprep.subr.mxu0 0.0
    %213 = vmatpush1.msra.mxu0 %v55
    %214 = vmatprep.subr.mxu0 0.0
    %215 = vmatpush1.msra.mxu0 %v54
    %216 = vmatprep.subr.mxu0 0.0
    %217 = vmatpush1.msra.mxu0 %v53
    %218 = vmatprep.subr.mxu0 0.0
    %219 = vmatpush1.msra.mxu0 %v52
    %220 = vmatprep.subr.mxu0 0.0
    %221 = vmatpush1.msra.mxu0 %v51
    %222 = vmatprep.subr.mxu0 0.0
    %223 = vmatpush1.msra.mxu0 %v50
    %224 = vmatprep.subr.mxu0 0.0
    %225 = vmatpush1.msra.mxu0 %v49
    %226 = vmatprep.subr.mxu0 0.0
    %227 = vmatpush2.msra.mxu0 0.0
    %228 = vmatprep.subr.mxu0 0.0
    %229 = vmatpush2.msra.mxu0 0.0
    %230 = vmatprep.subr.mxu0 0.0
    %231 = vmatpush2.msra.mxu0 0.0
    %232 = vmatprep.subr.mxu0 0.0
    %233 = vmatpush2.msra.mxu0 0.0
    %234 = vmatprep.subr.mxu0 0.0
    %235 = vmatpush2.msra.mxu0 0.0
    %236 = vmatprep.subr.mxu0 0.0
    %237 = vmatpush2.msra.mxu0 0.0
    %238 = vmatprep.subr.mxu0 0.0
    %239 = vmatpush2.msra.mxu0 0.0
    %240 = vmatprep.subr.mxu0 0.0
    %241 = vmatpush2.msra.mxu0 0.0
    %242 = vmatprep.subr.mxu0 0.0
    %243 = vmatpush2.msra.mxu0 0.0
    %244 = vmatprep.subr.mxu0 0.0
    %245 = vmatpush2.msra.mxu0 0.0
    %246 = vmatprep.subr.mxu0 0.0
    %247 = vmatpush2.msra.mxu0 0.0
    %248 = vmatprep.subr.mxu0 0.0
    %249 = vmatpush2.msra.mxu0 0.0
    %250 = vmatprep.subr.mxu0 0.0
    %251 = vmatpush2.msra.mxu0 0.0
    %252 = vmatprep.subr.mxu0 0.0
    %253 = vmatpush2.msra.mxu0 0.0
    %254 = vmatprep.subr.mxu0 0.0
    %255 = vmatpush2.msra.mxu0 0.0
    %256 = vmatprep.subr.mxu0 0.0
    %257 = vmatpush2.msra.mxu0 0.0
    %258 = vmatprep.mubr.f32.mxu0 0.0
    %259 = vmatmul.mubr.f32.gmra.mxu0 %v114
    %v260 = vpop.f32.mrf.mxu0
    %v261 = vadd.f32 0.0, %v260
    %v262 = vpop.f32.mrf.mxu0
    %263 = vmatprep.mubr.f32.mxu0 0.0
    %264 = vmatmul.mubr.f32.gmra.mxu0 %v117
    %v265 = vpop.f32.mrf.mxu0
    %v266 = vadd.f32 0.0, %v265
    %v267 = vpop.f32.mrf.mxu0
    %268 = vdwg.mxu0
    %269 = vmatprep.subr.mxu0 0.0
    %270 = vmatpush1.msra.mxu0 0.0
    %271 = vmatprep.subr.mxu0 0.0
    %272 = vmatpush1.msra.mxu0 0.0
    %273 = vmatprep.subr.mxu0 0.0
    %274 = vmatpush1.msra.mxu0 0.0
    %275 = vmatprep.subr.mxu0 0.0
    %276 = vmatpush1.msra.mxu0 0.0
    %277 = vmatprep.subr.mxu0 0.0
    %278 = vmatpush1.msra.mxu0 0.0
    %279 = vmatprep.subr.mxu0 0.0
    %280 = vmatpush1.msra.mxu0 0.0
    %281 = vmatprep.subr.mxu0 0.0
    %282 = vmatpush1.msra.mxu0 0.0
    %283 = vmatprep.subr.mxu0 0.0
    %284 = vmatpush1.msra.mxu0 0.0
    %285 = vmatprep.subr.mxu0 0.0
    %286 = vmatpush1.msra.mxu0 0.0
    %287 = vmatprep.subr.mxu0 0.0
    %288 = vmatpush1.msra.mxu0 %v62
    %289 = vmatprep.subr.mxu0 0.0
    %290 = vmatpush1.msra.mxu0 %v61
    %291 = vmatprep.subr.mxu0 0.0
    %292 = vmatpush1.msra.mxu0 %v60
    %293 = vmatprep.subr.mxu0 0.0
    %294 = vmatpush1.msra.mxu0 %v59
    %295 = vmatprep.subr.mxu0 0.0
    %296 = vmatpush1.msra.mxu0 %v58
    %297 = vmatprep.subr.mxu0 0.0
    %298 = vmatpush1.msra.mxu0 %v57
    %299 = vmatprep.subr.mxu0 0.0
    %300 = vmatpush1.msra.mxu0 %v56
    %301 = vmatprep.subr.mxu0 0.0
    %302 = vmatpush2.msra.mxu0 0.0
    %303 = vmatprep.subr.mxu0 0.0
    %304 = vmatpush2.msra.mxu0 0.0
    %305 = vmatprep.subr.mxu0 0.0
    %306 = vmatpush2.msra.mxu0 0.0
    %307 = vmatprep.subr.mxu0 0.0
    %308 = vmatpush2.msra.mxu0 0.0
    %309 = vmatprep.subr.mxu0 0.0
    %310 = vmatpush2.msra.mxu0 0.0
    %311 = vmatprep.subr.mxu0 0.0
    %312 = vmatpush2.msra.mxu0 0.0
    %313 = vmatprep.subr.mxu0 0.0
    %314 = vmatpush2.msra.mxu0 0.0
    %315 = vmatprep.subr.mxu0 0.0
    %316 = vmatpush2.msra.mxu0 0.0
    %317 = vmatprep.subr.mxu0 0.0
    %318 = vmatpush2.msra.mxu0 0.0
    %319 = vmatprep.subr.mxu0 0.0
    %320 = vmatpush2.msra.mxu0 0.0
    %321 = vmatprep.subr.mxu0 0.0
    %322 = vmatpush2.msra.mxu0 0.0
    %323 = vmatprep.subr.mxu0 0.0
    %324 = vmatpush2.msra.mxu0 0.0
    %325 = vmatprep.subr.mxu0 0.0
    %326 = vmatpush2.msra.mxu0 0.0
    %327 = vmatprep.subr.mxu0 0.0
    %328 = vmatpush2.msra.mxu0 0.0
    %329 = vmatprep.subr.mxu0 0.0
    %330 = vmatpush2.msra.mxu0 0.0
    %331 = vmatprep.subr.mxu0 0.0
    %332 = vmatpush2.msra.mxu0 0.0
    %333 = vmatprep.mubr.f32.mxu0 0.0
    %334 = vmatmul.mubr.f32.gmra.mxu0 %v114
    %v335 = vpop.f32.mrf.mxu0
    %v336 = vadd.f32 0.0, %v335
    %v337 = vpop.f32.mrf.mxu0
    %338 = vmatprep.mubr.f32.mxu0 0.0
    %339 = vmatmul.mubr.f32.gmra.mxu0 %v117
    %v340 = vpop.f32.mrf.mxu0
    %v341 = vadd.f32 0.0, %v340
    %v342 = vpop.f32.mrf.mxu0
    %343 = vdwg.mxu0
    %344 = vmatprep.subr.mxu0 0.0
    %345 = vmatpush1.msra.mxu0 0.0
    %346 = vmatprep.subr.mxu0 0.0
    %347 = vmatpush1.msra.mxu0 0.0
    %348 = vmatprep.subr.mxu0 0.0
    %349 = vmatpush1.msra.mxu0 0.0
    %350 = vmatprep.subr.mxu0 0.0
    %351 = vmatpush1.msra.mxu0 0.0
    %352 = vmatprep.subr.mxu0 0.0
    %353 = vmatpush1.msra.mxu0 0.0
    %354 = vmatprep.subr.mxu0 0.0
    %355 = vmatpush1.msra.mxu0 0.0
    %356 = vmatprep.subr.mxu0 0.0
    %357 = vmatpush1.msra.mxu0 0.0
    %358 = vmatprep.subr.mxu0 0.0
    %359 = vmatpush1.msra.mxu0 0.0
    %360 = vmatprep.subr.mxu0 0.0
    %361 = vmatpush1.msra.mxu0 0.0
    %362 = vmatprep.subr.mxu0 0.0
    %363 = vmatpush1.msra.mxu0 %v69
    %364 = vmatprep.subr.mxu0 0.0
    %365 = vmatpush1.msra.mxu0 %v68
    %366 = vmatprep.subr.mxu0 0.0
    %367 = vmatpush1.msra.mxu0 %v67
    %368 = vmatprep.subr.mxu0 0.0
    %369 = vmatpush1.msra.mxu0 %v66
    %370 = vmatprep.subr.mxu0 0.0
    %371 = vmatpush1.msra.mxu0 %v65
    %372 = vmatprep.subr.mxu0 0.0
    %373 = vmatpush1.msra.mxu0 %v64
    %374 = vmatprep.subr.mxu0 0.0
    %375 = vmatpush1.msra.mxu0 %v63
    %376 = vmatprep.subr.mxu0 0.0
    %377 = vmatpush2.msra.mxu0 0.0
    %378 = vmatprep.subr.mxu0 0.0
    %379 = vmatpush2.msra.mxu0 0.0
    %380 = vmatprep.subr.mxu0 0.0
    %381 = vmatpush2.msra.mxu0 0.0
    %382 = vmatprep.subr.mxu0 0.0
    %383 = vmatpush2.msra.mxu0 0.0
    %384 = vmatprep.subr.mxu0 0.0
    %385 = vmatpush2.msra.mxu0 0.0
    %386 = vmatprep.subr.mxu0 0.0
    %387 = vmatpush2.msra.mxu0 0.0
    %388 = vmatprep.subr.mxu0 0.0
    %389 = vmatpush2.msra.mxu0 0.0
    %390 = vmatprep.subr.mxu0 0.0
    %391 = vmatpush2.msra.mxu0 0.0
    %392 = vmatprep.subr.mxu0 0.0
    %393 = vmatpush2.msra.mxu0 0.0
    %394 = vmatprep.subr.mxu0 0.0
    %395 = vmatpush2.msra.mxu0 0.0
    %396 = vmatprep.subr.mxu0 0.0
    %397 = vmatpush2.msra.mxu0 0.0
    %398 = vmatprep.subr.mxu0 0.0
    %399 = vmatpush2.msra.mxu0 0.0
    %400 = vmatprep.subr.mxu0 0.0
    %401 = vmatpush2.msra.mxu0 0.0
    %402 = vmatprep.subr.mxu0 0.0
    %403 = vmatpush2.msra.mxu0 0.0
    %404 = vmatprep.subr.mxu0 0.0
    %405 = vmatpush2.msra.mxu0 0.0
    %406 = vmatprep.subr.mxu0 0.0
    %407 = vmatpush2.msra.mxu0 0.0
    %408 = vmatprep.mubr.f32.mxu0 0.0
    %409 = vmatmul.mubr.f32.gmra.mxu0 %v114
    %v410 = vpop.f32.mrf.mxu0
    %v411 = vadd.f32 0.0, %v410
    %v412 = vpop.f32.mrf.mxu0
    %413 = vmatprep.mubr.f32.mxu0 0.0
    %414 = vmatmul.mubr.f32.gmra.mxu0 %v117
    %v415 = vpop.f32.mrf.mxu0
    %v416 = vadd.f32 0.0, %v415
    %v417 = vpop.f32.mrf.mxu0
    %418 = vdwg.mxu0
    %419 = vmatprep.subr.mxu0 0.0
    %420 = vmatpush1.msra.mxu0 0.0
    %421 = vmatprep.subr.mxu0 0.0
    %422 = vmatpush1.msra.mxu0 0.0
    %423 = vmatprep.subr.mxu0 0.0
    %424 = vmatpush1.msra.mxu0 0.0
    %425 = vmatprep.subr.mxu0 0.0
    %426 = vmatpush1.msra.mxu0 0.0
    %427 = vmatprep.subr.mxu0 0.0
    %428 = vmatpush1.msra.mxu0 0.0
    %429 = vmatprep.subr.mxu0 0.0
    %430 = vmatpush1.msra.mxu0 0.0
    %431 = vmatprep.subr.mxu0 0.0
    %432 = vmatpush1.msra.mxu0 0.0
    %433 = vmatprep.subr.mxu0 0.0
    %434 = vmatpush1.msra.mxu0 0.0
    %435 = vmatprep.subr.mxu0 0.0
    %436 = vmatpush1.msra.mxu0 0.0
    %437 = vmatprep.subr.mxu0 0.0
    %438 = vmatpush1.msra.mxu0 %v76
    %439 = vmatprep.subr.mxu0 0.0
    %440 = vmatpush1.msra.mxu0 %v75
    %441 = vmatprep.subr.mxu0 0.0
    %442 = vmatpush1.msra.mxu0 %v74
    %443 = vmatprep.subr.mxu0 0.0
    %444 = vmatpush1.msra.mxu0 %v73
    %445 = vmatprep.subr.mxu0 0.0
    %446 = vmatpush1.msra.mxu0 %v72
    %447 = vmatprep.subr.mxu0 0.0
    %448 = vmatpush1.msra.mxu0 %v71
    %449 = vmatprep.subr.mxu0 0.0
    %450 = vmatpush1.msra.mxu0 %v70
    %451 = vmatprep.subr.mxu0 0.0
    %452 = vmatpush2.msra.mxu0 0.0
    %453 = vmatprep.subr.mxu0 0.0
    %454 = vmatpush2.msra.mxu0 0.0
    %455 = vmatprep.subr.mxu0 0.0
    %456 = vmatpush2.msra.mxu0 0.0
    %457 = vmatprep.subr.mxu0 0.0
    %458 = vmatpush2.msra.mxu0 0.0
    %459 = vmatprep.subr.mxu0 0.0
    %460 = vmatpush2.msra.mxu0 0.0
    %461 = vmatprep.subr.mxu0 0.0
    %462 = vmatpush2.msra.mxu0 0.0
    %463 = vmatprep.subr.mxu0 0.0
    %464 = vmatpush2.msra.mxu0 0.0
    %465 = vmatprep.subr.mxu0 0.0
    %466 = vmatpush2.msra.mxu0 0.0
    %467 = vmatprep.subr.mxu0 0.0
    %468 = vmatpush2.msra.mxu0 0.0
    %469 = vmatprep.subr.mxu0 0.0
    %470 = vmatpush2.msra.mxu0 0.0
    %471 = vmatprep.subr.mxu0 0.0
    %472 = vmatpush2.msra.mxu0 0.0
    %473 = vmatprep.subr.mxu0 0.0
    %474 = vmatpush2.msra.mxu0 0.0
    %475 = vmatprep.subr.mxu0 0.0
    %476 = vmatpush2.msra.mxu0 0.0
    %477 = vmatprep.subr.mxu0 0.0
    %478 = vmatpush2.msra.mxu0 0.0
    %479 = vmatprep.subr.mxu0 0.0
    %480 = vmatpush2.msra.mxu0 0.0
    %481 = vmatprep.subr.mxu0 0.0
    %482 = vmatpush2.msra.mxu0 0.0
    %483 = vmatprep.mubr.f32.mxu0 0.0
    %484 = vmatmul.mubr.f32.gmra.mxu0 %v114
    %v485 = vpop.f32.mrf.mxu0
    %v486 = vadd.f32 0.0, %v485
    %v487 = vpop.f32.mrf.mxu0
    %488 = vmatprep.mubr.f32.mxu0 0.0
    %489 = vmatmul.mubr.f32.gmra.mxu0 %v117
    %v490 = vpop.f32.mrf.mxu0
    %v491 = vadd.f32 0.0, %v490
    %v492 = vpop.f32.mrf.mxu0
    %493 = vdwg.mxu0
    %494 = vmatprep.subr.mxu0 0.0
    %495 = vmatpush1.msra.mxu0 0.0
    %496 = vmatprep.subr.mxu0 0.0
    %497 = vmatpush1.msra.mxu0 0.0
    %498 = vmatprep.subr.mxu0 0.0
    %499 = vmatpush1.msra.mxu0 0.0
    %500 = vmatprep.subr.mxu0 0.0
    %501 = vmatpush1.msra.mxu0 0.0
    %502 = vmatprep.subr.mxu0 0.0
    %503 = vmatpush1.msra.mxu0 0.0
    %504 = vmatprep.subr.mxu0 0.0
    %505 = vmatpush1.msra.mxu0 0.0
    %506 = vmatprep.subr.mxu0 0.0
    %507 = vmatpush1.msra.mxu0 0.0
    %508 = vmatprep.subr.mxu0 0.0
    %509 = vmatpush1.msra.mxu0 0.0
    %510 = vmatprep.subr.mxu0 0.0
    %511 = vmatpush1.msra.mxu0 0.0
    %512 = vmatprep.subr.mxu0 0.0
    %513 = vmatpush1.msra.mxu0 %v83
    %514 = vmatprep.subr.mxu0 0.0
    %515 = vmatpush1.msra.mxu0 %v82
    %516 = vmatprep.subr.mxu0 0.0
    %517 = vmatpush1.msra.mxu0 %v81
    %518 = vmatprep.subr.mxu0 0.0
    %519 = vmatpush1.msra.mxu0 %v80
    %520 = vmatprep.subr.mxu0 0.0
    %521 = vmatpush1.msra.mxu0 %v79
    %522 = vmatprep.subr.mxu0 0.0
    %523 = vmatpush1.msra.mxu0 %v78
    %524 = vmatprep.subr.mxu0 0.0
    %525 = vmatpush1.msra.mxu0 %v77
    %526 = vmatprep.subr.mxu0 0.0
    %527 = vmatpush2.msra.mxu0 0.0
    %528 = vmatprep.subr.mxu0 0.0
    %529 = vmatpush2.msra.mxu0 0.0
    %530 = vmatprep.subr.mxu0 0.0
    %531 = vmatpush2.msra.mxu0 0.0
    %532 = vmatprep.subr.mxu0 0.0
    %533 = vmatpush2.msra.mxu0 0.0
    %534 = vmatprep.subr.mxu0 0.0
    %535 = vmatpush2.msra.mxu0 0.0
    %536 = vmatprep.subr.mxu0 0.0
    %537 = vmatpush2.msra.mxu0 0.0
    %538 = vmatprep.subr.mxu0 0.0
    %539 = vmatpush2.msra.mxu0 0.0
    %540 = vmatprep.subr.mxu0 0.0
    %541 = vmatpush2.msra.mxu0 0.0
    %542 = vmatprep.subr.mxu0 0.0
    %543 = vmatpush2.msra.mxu0 0.0
    %544 = vmatprep.subr.mxu0 0.0
    %545 = vmatpush2.msra.mxu0 0.0
    %546 = vmatprep.subr.mxu0 0.0
    %547 = vmatpush2.msra.mxu0 0.0
    %548 = vmatprep.subr.mxu0 0.0
    %549 = vmatpush2.msra.mxu0 0.0
    %550 = vmatprep.subr.mxu0 0.0
    %551 = vmatpush2.msra.mxu0 0.0
    %552 = vmatprep.subr.mxu0 0.0
    %553 = vmatpush2.msra.mxu0 0.0
    %554 = vmatprep.subr.mxu0 0.0
    %555 = vmatpush2.msra.mxu0 0.0
    %556 = vmatprep.subr.mxu0 0.0
    %557 = vmatpush2.msra.mxu0 0.0
    %558 = vmatprep.mubr.f32.mxu0 0.0
    %559 = vmatmul.mubr.f32.gmra.mxu0 %v114
    %v560 = vpop.f32.mrf.mxu0
    %v561 = vadd.f32 0.0, %v560
    %v562 = vpop.f32.mrf.mxu0
    %563 = vmatprep.mubr.f32.mxu0 0.0
    %564 = vmatmul.mubr.f32.gmra.mxu0 %v117
    %v565 = vpop.f32.mrf.mxu0
    %v566 = vadd.f32 0.0, %v565
    %v567 = vpop.f32.mrf.mxu0
    %568 = vdwg.mxu0
    %569 = vmatprep.subr.mxu0 0.0
    %570 = vmatpush1.msra.mxu0 0.0
    %571 = vmatprep.subr.mxu0 0.0
    %572 = vmatpush1.msra.mxu0 0.0
    %573 = vmatprep.subr.mxu0 0.0
    %574 = vmatpush1.msra.mxu0 0.0
    %575 = vmatprep.subr.mxu0 0.0
    %576 = vmatpush1.msra.mxu0 0.0
    %577 = vmatprep.subr.mxu0 0.0
    %578 = vmatpush1.msra.mxu0 0.0
    %579 = vmatprep.subr.mxu0 0.0
    %580 = vmatpush1.msra.mxu0 0.0
    %581 = vmatprep.subr.mxu0 0.0
    %582 = vmatpush1.msra.mxu0 0.0
    %583 = vmatprep.subr.mxu0 0.0
    %584 = vmatpush1.msra.mxu0 0.0
    %585 = vmatprep.subr.mxu0 0.0
    %586 = vmatpush1.msra.mxu0 0.0
    %587 = vmatprep.subr.mxu0 0.0
    %588 = vmatpush1.msra.mxu0 %v90
    %589 = vmatprep.subr.mxu0 0.0
    %590 = vmatpush1.msra.mxu0 %v89
    %591 = vmatprep.subr.mxu0 0.0
    %592 = vmatpush1.msra.mxu0 %v88
    %593 = vmatprep.subr.mxu0 0.0
    %594 = vmatpush1.msra.mxu0 %v87
    %595 = vmatprep.subr.mxu0 0.0
    %596 = vmatpush1.msra.mxu0 %v86
    %597 = vmatprep.subr.mxu0 0.0
    %598 = vmatpush1.msra.mxu0 %v85
    %599 = vmatprep.subr.mxu0 0.0
    %600 = vmatpush1.msra.mxu0 %v84
    %601 = vmatprep.subr.mxu0 0.0
    %602 = vmatpush2.msra.mxu0 0.0
    %603 = vmatprep.subr.mxu0 0.0
    %604 = vmatpush2.msra.mxu0 0.0
    %605 = vmatprep.subr.mxu0 0.0
    %606 = vmatpush2.msra.mxu0 0.0
    %607 = vmatprep.subr.mxu0 0.0
    %608 = vmatpush2.msra.mxu0 0.0
    %609 = vmatprep.subr.mxu0 0.0
    %610 = vmatpush2.msra.mxu0 0.0
    %611 = vmatprep.subr.mxu0 0.0
    %612 = vmatpush2.msra.mxu0 0.0
    %613 = vmatprep.subr.mxu0 0.0
    %614 = vmatpush2.msra.mxu0 0.0
    %615 = vmatprep.subr.mxu0 0.0
    %616 = vmatpush2.msra.mxu0 0.0
    %617 = vmatprep.subr.mxu0 0.0
    %618 = vmatpush2.msra.mxu0 0.0
    %619 = vmatprep.subr.mxu0 0.0
    %620 = vmatpush2.msra.mxu0 0.0
    %621 = vmatprep.subr.mxu0 0.0
    %622 = vmatpush2.msra.mxu0 0.0
    %623 = vmatprep.subr.mxu0 0.0
    %624 = vmatpush2.msra.mxu0 0.0
    %625 = vmatprep.subr.mxu0 0.0
    %626 = vmatpush2.msra.mxu0 0.0
    %627 = vmatprep.subr.mxu0 0.0
    %628 = vmatpush2.msra.mxu0 0.0
    %629 = vmatprep.subr.mxu0 0.0
    %630 = vmatpush2.msra.mxu0 0.0
    %631 = vmatprep.subr.mxu0 0.0
    %632 = vmatpush2.msra.mxu0 0.0
    %633 = vmatprep.mubr.f32.mxu0 0.0
    %634 = vmatmul.mubr.f32.gmra.mxu0 %v114
    %v635 = vpop.f32.mrf.mxu0
    %v636 = vadd.f32 0.0, %v635
    %v637 = vpop.f32.mrf.mxu0
    %638 = vmatprep.mubr.f32.mxu0 0.0
    %639 = vmatmul.mubr.f32.gmra.mxu0 %v117
    %v640 = vpop.f32.mrf.mxu0
    %v641 = vadd.f32 0.0, %v640
    %v642 = vpop.f32.mrf.mxu0
    %643 = vdwg.mxu0
    %644 = vmatprep.subr.mxu0 0.0
    %645 = vmatpush1.msra.mxu0 0.0
    %646 = vmatprep.subr.mxu0 0.0
    %647 = vmatpush1.msra.mxu0 0.0
    %648 = vmatprep.subr.mxu0 0.0
    %649 = vmatpush1.msra.mxu0 0.0
    %650 = vmatprep.subr.mxu0 0.0
    %651 = vmatpush1.msra.mxu0 0.0
    %652 = vmatprep.subr.mxu0 0.0
    %653 = vmatpush1.msra.mxu0 0.0
    %654 = vmatprep.subr.mxu0 0.0
    %655 = vmatpush1.msra.mxu0 0.0
    %656 = vmatprep.subr.mxu0 0.0
    %657 = vmatpush1.msra.mxu0 0.0
    %658 = vmatprep.subr.mxu0 0.0
    %659 = vmatpush1.msra.mxu0 0.0
    %660 = vmatprep.subr.mxu0 0.0
    %661 = vmatpush1.msra.mxu0 0.0
    %662 = vmatprep.subr.mxu0 0.0
    %663 = vmatpush1.msra.mxu0 %v97
    %664 = vmatprep.subr.mxu0 0.0
    %665 = vmatpush1.msra.mxu0 %v96
    %666 = vmatprep.subr.mxu0 0.0
    %667 = vmatpush1.msra.mxu0 %v95
    %668 = vmatprep.subr.mxu0 0.0
    %669 = vmatpush1.msra.mxu0 %v94
    %670 = vmatprep.subr.mxu0 0.0
    %671 = vmatpush1.msra.mxu0 %v93
    %672 = vmatprep.subr.mxu0 0.0
    %673 = vmatpush1.msra.mxu0 %v92
    %674 = vmatprep.subr.mxu0 0.0
    %675 = vmatpush1.msra.mxu0 %v91
    %676 = vmatprep.subr.mxu0 0.0
    %677 = vmatpush2.msra.mxu0 0.0
    %678 = vmatprep.subr.mxu0 0.0
    %679 = vmatpush2.msra.mxu0 0.0
    %680 = vmatprep.subr.mxu0 0.0
    %681 = vmatpush2.msra.mxu0 0.0
    %682 = vmatprep.subr.mxu0 0.0
    %683 = vmatpush2.msra.mxu0 0.0
    %684 = vmatprep.subr.mxu0 0.0
    %685 = vmatpush2.msra.mxu0 0.0
    %686 = vmatprep.subr.mxu0 0.0
    %687 = vmatpush2.msra.mxu0 0.0
    %688 = vmatprep.subr.mxu0 0.0
    %689 = vmatpush2.msra.mxu0 0.0
    %690 = vmatprep.subr.mxu0 0.0
    %691 = vmatpush2.msra.mxu0 0.0
    %692 = vmatprep.subr.mxu0 0.0
    %693 = vmatpush2.msra.mxu0 0.0
    %694 = vmatprep.subr.mxu0 0.0
    %695 = vmatpush2.msra.mxu0 0.0
    %696 = vmatprep.subr.mxu0 0.0
    %697 = vmatpush2.msra.mxu0 0.0
    %698 = vmatprep.subr.mxu0 0.0
    %699 = vmatpush2.msra.mxu0 0.0
    %700 = vmatprep.subr.mxu0 0.0
    %701 = vmatpush2.msra.mxu0 0.0
    %702 = vmatprep.subr.mxu0 0.0
    %703 = vmatpush2.msra.mxu0 0.0
    %704 = vmatprep.subr.mxu0 0.0
    %705 = vmatpush2.msra.mxu0 0.0
    %706 = vmatprep.subr.mxu0 0.0
    %707 = vmatpush2.msra.mxu0 0.0
    %708 = vmatprep.mubr.f32.mxu0 0.0
    %709 = vmatmul.mubr.f32.gmra.mxu0 %v114
    %v710 = vpop.f32.mrf.mxu0
    %v711 = vadd.f32 0.0, %v710
    %v712 = vpop.f32.mrf.mxu0
    %713 = vmatprep.mubr.f32.mxu0 0.0
    %714 = vmatmul.mubr.f32.gmra.mxu0 %v117
    %v715 = vpop.f32.mrf.mxu0
    %v716 = vadd.f32 0.0, %v715
    %v717 = vpop.f32.mrf.mxu0
    %718 = vdwg.mxu0
    %720 = vrot.lane.b32.xlu0 %v186, 120
    %v721 = vpop.permute.xlu0 %720
    %vm722 = vcmask 64512
    %v723 = vsel %vm722, %v186, 0
    %v725 = vsel %vm722, %v721, 0
    %727 = vmatprep.subr.mxu0 0.0
    %728 = vmatpush1.xpose.msra.mxu0 0.0
    %729 = vmatprep.subr.mxu0 0.0
    %730 = vmatpush1.xpose.msra.mxu0 0.0
    %731 = vmatprep.subr.mxu0 0.0
    %732 = vmatpush1.xpose.msra.mxu0 0.0
    %733 = vmatprep.subr.mxu0 0.0
    %734 = vmatpush1.xpose.msra.mxu0 0.0
    %735 = vmatprep.subr.mxu0 0.0
    %736 = vmatpush1.xpose.msra.mxu0 0.0
    %737 = vmatprep.subr.mxu0 0.0
    %738 = vmatpush1.xpose.msra.mxu0 0.0
    %739 = vmatprep.subr.mxu0 0.0
    %740 = vmatpush1.xpose.msra.mxu0 0.0
    %741 = vmatprep.subr.mxu0 0.0
    %742 = vmatpush1.xpose.msra.mxu0 0.0
    %743 = vmatprep.subr.mxu0 0.0
    %744 = vmatpush1.xpose.msra.mxu0 0.0
    %745 = vmatprep.subr.mxu0 0.0
    %746 = vmatpush1.xpose.msra.mxu0 0.0
    %747 = vmatprep.subr.mxu0 0.0
    %748 = vmatpush1.xpose.msra.mxu0 0.0
    %749 = vmatprep.subr.mxu0 0.0
    %750 = vmatpush1.xpose.msra.mxu0 0.0
    %751 = vmatprep.subr.mxu0 0.0
    %752 = vmatpush1.xpose.msra.mxu0 0.0
    %753 = vmatprep.subr.mxu0 0.0
    %754 = vmatpush1.xpose.msra.mxu0 0.0
    %755 = vmatprep.subr.mxu0 0.0
    %756 = vmatpush1.xpose.msra.mxu0 0.0
    %757 = vmatprep.subr.mxu0 0.0
    %758 = vmatpush1.xpose.msra.mxu0 %v725
    %759 = vmatprep.subr.mxu0 0.0
    %760 = vmatpush2.xpose.msra.mxu0 0.0
    %761 = vmatprep.subr.mxu0 0.0
    %762 = vmatpush2.xpose.msra.mxu0 0.0
    %763 = vmatprep.subr.mxu0 0.0
    %764 = vmatpush2.xpose.msra.mxu0 0.0
    %765 = vmatprep.subr.mxu0 0.0
    %766 = vmatpush2.xpose.msra.mxu0 0.0
    %767 = vmatprep.subr.mxu0 0.0
    %768 = vmatpush2.xpose.msra.mxu0 0.0
    %769 = vmatprep.subr.mxu0 0.0
    %770 = vmatpush2.xpose.msra.mxu0 0.0
    %771 = vmatprep.subr.mxu0 0.0
    %772 = vmatpush2.xpose.msra.mxu0 0.0
    %773 = vmatprep.subr.mxu0 0.0
    %774 = vmatpush2.xpose.msra.mxu0 0.0
    %775 = vmatprep.subr.mxu0 0.0
    %776 = vmatpush2.xpose.msra.mxu0 0.0
    %777 = vmatprep.subr.mxu0 0.0
    %778 = vmatpush2.xpose.msra.mxu0 0.0
    %779 = vmatprep.subr.mxu0 0.0
    %780 = vmatpush2.xpose.msra.mxu0 0.0
    %781 = vmatprep.subr.mxu0 0.0
    %782 = vmatpush2.xpose.msra.mxu0 0.0
    %783 = vmatprep.subr.mxu0 0.0
    %784 = vmatpush2.xpose.msra.mxu0 0.0
    %785 = vmatprep.subr.mxu0 0.0
    %786 = vmatpush2.xpose.msra.mxu0 0.0
    %787 = vmatprep.subr.mxu0 0.0
    %788 = vmatpush2.xpose.msra.mxu0 0.0
    %789 = vmatprep.subr.mxu0 0.0
    %790 = vmatpush2.xpose.msra.mxu0 0.0
    %791 = vmatprep.mubr.f32.mxu0 0.0
    %792 = vmatmul.mubr.f32.gmra.mxu0 %v723
    %v793 = vpop.f32.mrf.mxu0
    %v794 = vadd.f32 0.0, %v793
    %v795 = vpop.f32.mrf.mxu0
    %796 = vdwg.mxu0
    %798 = vrot.lane.b32.xlu0 %v191, 120
    %v799 = vpop.permute.xlu0 %798
    %v800 = vsel %vm722, %v191, 0
    %v802 = vsel %vm722, %v799, 0
    %804 = vmatprep.subr.mxu0 0.0
    %805 = vmatpush1.xpose.msra.mxu0 0.0
    %806 = vmatprep.subr.mxu0 0.0
    %807 = vmatpush1.xpose.msra.mxu0 0.0
    %808 = vmatprep.subr.mxu0 0.0
    %809 = vmatpush1.xpose.msra.mxu0 0.0
    %810 = vmatprep.subr.mxu0 0.0
    %811 = vmatpush1.xpose.msra.mxu0 0.0
    %812 = vmatprep.subr.mxu0 0.0
    %813 = vmatpush1.xpose.msra.mxu0 0.0
    %814 = vmatprep.subr.mxu0 0.0
    %815 = vmatpush1.xpose.msra.mxu0 0.0
    %816 = vmatprep.subr.mxu0 0.0
    %817 = vmatpush1.xpose.msra.mxu0 0.0
    %818 = vmatprep.subr.mxu0 0.0
    %819 = vmatpush1.xpose.msra.mxu0 0.0
    %820 = vmatprep.subr.mxu0 0.0
    %821 = vmatpush1.xpose.msra.mxu0 0.0
    %822 = vmatprep.subr.mxu0 0.0
    %823 = vmatpush1.xpose.msra.mxu0 0.0
    %824 = vmatprep.subr.mxu0 0.0
    %825 = vmatpush1.xpose.msra.mxu0 0.0
    %826 = vmatprep.subr.mxu0 0.0
    %827 = vmatpush1.xpose.msra.mxu0 0.0
    %828 = vmatprep.subr.mxu0 0.0
    %829 = vmatpush1.xpose.msra.mxu0 0.0
    %830 = vmatprep.subr.mxu0 0.0
    %831 = vmatpush1.xpose.msra.mxu0 0.0
    %832 = vmatprep.subr.mxu0 0.0
    %833 = vmatpush1.xpose.msra.mxu0 0.0
    %834 = vmatprep.subr.mxu0 0.0
    %835 = vmatpush1.xpose.msra.mxu0 %v802
    %836 = vmatprep.subr.mxu0 0.0
    %837 = vmatpush2.xpose.msra.mxu0 0.0
    %838 = vmatprep.subr.mxu0 0.0
    %839 = vmatpush2.xpose.msra.mxu0 0.0
    %840 = vmatprep.subr.mxu0 0.0
    %841 = vmatpush2.xpose.msra.mxu0 0.0
    %842 = vmatprep.subr.mxu0 0.0
    %843 = vmatpush2.xpose.msra.mxu0 0.0
    %844 = vmatprep.subr.mxu0 0.0
    %845 = vmatpush2.xpose.msra.mxu0 0.0
    %846 = vmatprep.subr.mxu0 0.0
    %847 = vmatpush2.xpose.msra.mxu0 0.0
    %848 = vmatprep.subr.mxu0 0.0
    %849 = vmatpush2.xpose.msra.mxu0 0.0
    %850 = vmatprep.subr.mxu0 0.0
    %851 = vmatpush2.xpose.msra.mxu0 0.0
    %852 = vmatprep.subr.mxu0 0.0
    %853 = vmatpush2.xpose.msra.mxu0 0.0
    %854 = vmatprep.subr.mxu0 0.0
    %855 = vmatpush2.xpose.msra.mxu0 0.0
    %856 = vmatprep.subr.mxu0 0.0
    %857 = vmatpush2.xpose.msra.mxu0 0.0
    %858 = vmatprep.subr.mxu0 0.0
    %859 = vmatpush2.xpose.msra.mxu0 0.0
    %860 = vmatprep.subr.mxu0 0.0
    %861 = vmatpush2.xpose.msra.mxu0 0.0
    %862 = vmatprep.subr.mxu0 0.0
    %863 = vmatpush2.xpose.msra.mxu0 0.0
    %864 = vmatprep.subr.mxu0 0.0
    %865 = vmatpush2.xpose.msra.mxu0 0.0
    %866 = vmatprep.subr.mxu0 0.0
    %867 = vmatpush2.xpose.msra.mxu0 0.0
    %868 = vmatprep.mubr.f32.mxu0 0.0
    %869 = vmatmul.mubr.f32.gmra.mxu0 %v800
    %v870 = vpop.f32.mrf.mxu0
    %v871 = vadd.f32 0.0, %v870
    %v872 = vpop.f32.mrf.mxu0
    %873 = vdwg.mxu0
    %875 = vrot.lane.b32.xlu0 %v261, 120
    %v876 = vpop.permute.xlu0 %875
    %v877 = vsel %vm722, %v261, 0
    %v879 = vsel %vm722, %v876, 0
    %881 = vmatprep.subr.mxu0 0.0
    %882 = vmatpush1.xpose.msra.mxu0 0.0
    %883 = vmatprep.subr.mxu0 0.0
    %884 = vmatpush1.xpose.msra.mxu0 0.0
    %885 = vmatprep.subr.mxu0 0.0
    %886 = vmatpush1.xpose.msra.mxu0 0.0
    %887 = vmatprep.subr.mxu0 0.0
    %888 = vmatpush1.xpose.msra.mxu0 0.0
    %889 = vmatprep.subr.mxu0 0.0
    %890 = vmatpush1.xpose.msra.mxu0 0.0
    %891 = vmatprep.subr.mxu0 0.0
    %892 = vmatpush1.xpose.msra.mxu0 0.0
    %893 = vmatprep.subr.mxu0 0.0
    %894 = vmatpush1.xpose.msra.mxu0 0.0
    %895 = vmatprep.subr.mxu0 0.0
    %896 = vmatpush1.xpose.msra.mxu0 0.0
    %897 = vmatprep.subr.mxu0 0.0
    %898 = vmatpush1.xpose.msra.mxu0 0.0
    %899 = vmatprep.subr.mxu0 0.0
    %900 = vmatpush1.xpose.msra.mxu0 0.0
    %901 = vmatprep.subr.mxu0 0.0
    %902 = vmatpush1.xpose.msra.mxu0 0.0
    %903 = vmatprep.subr.mxu0 0.0
    %904 = vmatpush1.xpose.msra.mxu0 0.0
    %905 = vmatprep.subr.mxu0 0.0
    %906 = vmatpush1.xpose.msra.mxu0 0.0
    %907 = vmatprep.subr.mxu0 0.0
    %908 = vmatpush1.xpose.msra.mxu0 0.0
    %909 = vmatprep.subr.mxu0 0.0
    %910 = vmatpush1.xpose.msra.mxu0 0.0
    %911 = vmatprep.subr.mxu0 0.0
    %912 = vmatpush1.xpose.msra.mxu0 %v879
    %913 = vmatprep.subr.mxu0 0.0
    %914 = vmatpush2.xpose.msra.mxu0 0.0
    %915 = vmatprep.subr.mxu0 0.0
    %916 = vmatpush2.xpose.msra.mxu0 0.0
    %917 = vmatprep.subr.mxu0 0.0
    %918 = vmatpush2.xpose.msra.mxu0 0.0
    %919 = vmatprep.subr.mxu0 0.0
    %920 = vmatpush2.xpose.msra.mxu0 0.0
    %921 = vmatprep.subr.mxu0 0.0
    %922 = vmatpush2.xpose.msra.mxu0 0.0
    %923 = vmatprep.subr.mxu0 0.0
    %924 = vmatpush2.xpose.msra.mxu0 0.0
    %925 = vmatprep.subr.mxu0 0.0
    %926 = vmatpush2.xpose.msra.mxu0 0.0
    %927 = vmatprep.subr.mxu0 0.0
    %928 = vmatpush2.xpose.msra.mxu0 0.0
    %929 = vmatprep.subr.mxu0 0.0
    %930 = vmatpush2.xpose.msra.mxu0 0.0
    %931 = vmatprep.subr.mxu0 0.0
    %932 = vmatpush2.xpose.msra.mxu0 0.0
    %933 = vmatprep.subr.mxu0 0.0
    %934 = vmatpush2.xpose.msra.mxu0 0.0
    %935 = vmatprep.subr.mxu0 0.0
    %936 = vmatpush2.xpose.msra.mxu0 0.0
    %937 = vmatprep.subr.mxu0 0.0
    %938 = vmatpush2.xpose.msra.mxu0 0.0
    %939 = vmatprep.subr.mxu0 0.0
    %940 = vmatpush2.xpose.msra.mxu0 0.0
    %941 = vmatprep.subr.mxu0 0.0
    %942 = vmatpush2.xpose.msra.mxu0 0.0
    %943 = vmatprep.subr.mxu0 0.0
    %944 = vmatpush2.xpose.msra.mxu0 0.0
    %945 = vmatprep.mubr.f32.mxu0 0.0
    %946 = vmatmul.mubr.f32.gmra.mxu0 %v877
    %v947 = vpop.f32.mrf.mxu0
    %v948 = vadd.f32 0.0, %v947
    %v949 = vpop.f32.mrf.mxu0
    %950 = vdwg.mxu0
    %952 = vrot.lane.b32.xlu0 %v266, 120
    %v953 = vpop.permute.xlu0 %952
    %v954 = vsel %vm722, %v266, 0
    %v956 = vsel %vm722, %v953, 0
    %958 = vmatprep.subr.mxu0 0.0
    %959 = vmatpush1.xpose.msra.mxu0 0.0
    %960 = vmatprep.subr.mxu0 0.0
    %961 = vmatpush1.xpose.msra.mxu0 0.0
    %962 = vmatprep.subr.mxu0 0.0
    %963 = vmatpush1.xpose.msra.mxu0 0.0
    %964 = vmatprep.subr.mxu0 0.0
    %965 = vmatpush1.xpose.msra.mxu0 0.0
    %966 = vmatprep.subr.mxu0 0.0
    %967 = vmatpush1.xpose.msra.mxu0 0.0
    %968 = vmatprep.subr.mxu0 0.0
    %969 = vmatpush1.xpose.msra.mxu0 0.0
    %970 = vmatprep.subr.mxu0 0.0
    %971 = vmatpush1.xpose.msra.mxu0 0.0
    %972 = vmatprep.subr.mxu0 0.0
    %973 = vmatpush1.xpose.msra.mxu0 0.0
    %974 = vmatprep.subr.mxu0 0.0
    %975 = vmatpush1.xpose.msra.mxu0 0.0
    %976 = vmatprep.subr.mxu0 0.0
    %977 = vmatpush1.xpose.msra.mxu0 0.0
    %978 = vmatprep.subr.mxu0 0.0
    %979 = vmatpush1.xpose.msra.mxu0 0.0
    %980 = vmatprep.subr.mxu0 0.0
    %981 = vmatpush1.xpose.msra.mxu0 0.0
    %982 = vmatprep.subr.mxu0 0.0
    %983 = vmatpush1.xpose.msra.mxu0 0.0
    %984 = vmatprep.subr.mxu0 0.0
    %985 = vmatpush1.xpose.msra.mxu0 0.0
    %986 = vmatprep.subr.mxu0 0.0
    %987 = vmatpush1.xpose.msra.mxu0 0.0
    %988 = vmatprep.subr.mxu0 0.0
    %989 = vmatpush1.xpose.msra.mxu0 %v956
    %990 = vmatprep.subr.mxu0 0.0
    %991 = vmatpush2.xpose.msra.mxu0 0.0
    %992 = vmatprep.subr.mxu0 0.0
    %993 = vmatpush2.xpose.msra.mxu0 0.0
    %994 = vmatprep.subr.mxu0 0.0
    %995 = vmatpush2.xpose.msra.mxu0 0.0
    %996 = vmatprep.subr.mxu0 0.0
    %997 = vmatpush2.xpose.msra.mxu0 0.0
    %998 = vmatprep.subr.mxu0 0.0
    %999 = vmatpush2.xpose.msra.mxu0 0.0
    %1000 = vmatprep.subr.mxu0 0.0
    %1001 = vmatpush2.xpose.msra.mxu0 0.0
    %1002 = vmatprep.subr.mxu0 0.0
    %1003 = vmatpush2.xpose.msra.mxu0 0.0
    %1004 = vmatprep.subr.mxu0 0.0
    %1005 = vmatpush2.xpose.msra.mxu0 0.0
    %1006 = vmatprep.subr.mxu0 0.0
    %1007 = vmatpush2.xpose.msra.mxu0 0.0
    %1008 = vmatprep.subr.mxu0 0.0
    %1009 = vmatpush2.xpose.msra.mxu0 0.0
    %1010 = vmatprep.subr.mxu0 0.0
    %1011 = vmatpush2.xpose.msra.mxu0 0.0
    %1012 = vmatprep.subr.mxu0 0.0
    %1013 = vmatpush2.xpose.msra.mxu0 0.0
    %1014 = vmatprep.subr.mxu0 0.0
    %1015 = vmatpush2.xpose.msra.mxu0 0.0
    %1016 = vmatprep.subr.mxu0 0.0
    %1017 = vmatpush2.xpose.msra.mxu0 0.0
    %1018 = vmatprep.subr.mxu0 0.0
    %1019 = vmatpush2.xpose.msra.mxu0 0.0
    %1020 = vmatprep.subr.mxu0 0.0
    %1021 = vmatpush2.xpose.msra.mxu0 0.0
    %1022 = vmatprep.mubr.f32.mxu0 0.0
    %1023 = vmatmul.mubr.f32.gmra.mxu0 %v954
    %v1024 = vpop.f32.mrf.mxu0
    %v1025 = vadd.f32 0.0, %v1024
    %v1026 = vpop.f32.mrf.mxu0
    %1027 = vdwg.mxu0
    %1029 = vrot.lane.b32.xlu0 %v336, 120
    %v1030 = vpop.permute.xlu0 %1029
    %v1031 = vsel %vm722, %v336, 0
    %v1033 = vsel %vm722, %v1030, 0
    %1035 = vmatprep.subr.mxu0 0.0
    %1036 = vmatpush1.xpose.msra.mxu0 0.0
    %1037 = vmatprep.subr.mxu0 0.0
    %1038 = vmatpush1.xpose.msra.mxu0 0.0
    %1039 = vmatprep.subr.mxu0 0.0
    %1040 = vmatpush1.xpose.msra.mxu0 0.0
    %1041 = vmatprep.subr.mxu0 0.0
    %1042 = vmatpush1.xpose.msra.mxu0 0.0
    %1043 = vmatprep.subr.mxu0 0.0
    %1044 = vmatpush1.xpose.msra.mxu0 0.0
    %1045 = vmatprep.subr.mxu0 0.0
    %1046 = vmatpush1.xpose.msra.mxu0 0.0
    %1047 = vmatprep.subr.mxu0 0.0
    %1048 = vmatpush1.xpose.msra.mxu0 0.0
    %1049 = vmatprep.subr.mxu0 0.0
    %1050 = vmatpush1.xpose.msra.mxu0 0.0
    %1051 = vmatprep.subr.mxu0 0.0
    %1052 = vmatpush1.xpose.msra.mxu0 0.0
    %1053 = vmatprep.subr.mxu0 0.0
    %1054 = vmatpush1.xpose.msra.mxu0 0.0
    %1055 = vmatprep.subr.mxu0 0.0
    %1056 = vmatpush1.xpose.msra.mxu0 0.0
    %1057 = vmatprep.subr.mxu0 0.0
    %1058 = vmatpush1.xpose.msra.mxu0 0.0
    %1059 = vmatprep.subr.mxu0 0.0
    %1060 = vmatpush1.xpose.msra.mxu0 0.0
    %1061 = vmatprep.subr.mxu0 0.0
    %1062 = vmatpush1.xpose.msra.mxu0 0.0
    %1063 = vmatprep.subr.mxu0 0.0
    %1064 = vmatpush1.xpose.msra.mxu0 0.0
    %1065 = vmatprep.subr.mxu0 0.0
    %1066 = vmatpush1.xpose.msra.mxu0 %v1033
    %1067 = vmatprep.subr.mxu0 0.0
    %1068 = vmatpush2.xpose.msra.mxu0 0.0
    %1069 = vmatprep.subr.mxu0 0.0
    %1070 = vmatpush2.xpose.msra.mxu0 0.0
    %1071 = vmatprep.subr.mxu0 0.0
    %1072 = vmatpush2.xpose.msra.mxu0 0.0
    %1073 = vmatprep.subr.mxu0 0.0
    %1074 = vmatpush2.xpose.msra.mxu0 0.0
    %1075 = vmatprep.subr.mxu0 0.0
    %1076 = vmatpush2.xpose.msra.mxu0 0.0
    %1077 = vmatprep.subr.mxu0 0.0
    %1078 = vmatpush2.xpose.msra.mxu0 0.0
    %1079 = vmatprep.subr.mxu0 0.0
    %1080 = vmatpush2.xpose.msra.mxu0 0.0
    %1081 = vmatprep.subr.mxu0 0.0
    %1082 = vmatpush2.xpose.msra.mxu0 0.0
    %1083 = vmatprep.subr.mxu0 0.0
    %1084 = vmatpush2.xpose.msra.mxu0 0.0
    %1085 = vmatprep.subr.mxu0 0.0
    %1086 = vmatpush2.xpose.msra.mxu0 0.0
    %1087 = vmatprep.subr.mxu0 0.0
    %1088 = vmatpush2.xpose.msra.mxu0 0.0
    %1089 = vmatprep.subr.mxu0 0.0
    %1090 = vmatpush2.xpose.msra.mxu0 0.0
    %1091 = vmatprep.subr.mxu0 0.0
    %1092 = vmatpush2.xpose.msra.mxu0 0.0
    %1093 = vmatprep.subr.mxu0 0.0
    %1094 = vmatpush2.xpose.msra.mxu0 0.0
    %1095 = vmatprep.subr.mxu0 0.0
    %1096 = vmatpush2.xpose.msra.mxu0 0.0
    %1097 = vmatprep.subr.mxu0 0.0
    %1098 = vmatpush2.xpose.msra.mxu0 0.0
    %1099 = vmatprep.mubr.f32.mxu0 0.0
    %1100 = vmatmul.mubr.f32.gmra.mxu0 %v1031
    %v1101 = vpop.f32.mrf.mxu0
    %v1102 = vadd.f32 0.0, %v1101
    %v1103 = vpop.f32.mrf.mxu0
    %1104 = vdwg.mxu0
    %1106 = vrot.lane.b32.xlu0 %v341, 120
    %v1107 = vpop.permute.xlu0 %1106
    %v1108 = vsel %vm722, %v341, 0
    %v1110 = vsel %vm722, %v1107, 0
    %1112 = vmatprep.subr.mxu0 0.0
    %1113 = vmatpush1.xpose.msra.mxu0 0.0
    %1114 = vmatprep.subr.mxu0 0.0
    %1115 = vmatpush1.xpose.msra.mxu0 0.0
    %1116 = vmatprep.subr.mxu0 0.0
    %1117 = vmatpush1.xpose.msra.mxu0 0.0
    %1118 = vmatprep.subr.mxu0 0.0
    %1119 = vmatpush1.xpose.msra.mxu0 0.0
    %1120 = vmatprep.subr.mxu0 0.0
    %1121 = vmatpush1.xpose.msra.mxu0 0.0
    %1122 = vmatprep.subr.mxu0 0.0
    %1123 = vmatpush1.xpose.msra.mxu0 0.0
    %1124 = vmatprep.subr.mxu0 0.0
    %1125 = vmatpush1.xpose.msra.mxu0 0.0
    %1126 = vmatprep.subr.mxu0 0.0
    %1127 = vmatpush1.xpose.msra.mxu0 0.0
    %1128 = vmatprep.subr.mxu0 0.0
    %1129 = vmatpush1.xpose.msra.mxu0 0.0
    %1130 = vmatprep.subr.mxu0 0.0
    %1131 = vmatpush1.xpose.msra.mxu0 0.0
    %1132 = vmatprep.subr.mxu0 0.0
    %1133 = vmatpush1.xpose.msra.mxu0 0.0
    %1134 = vmatprep.subr.mxu0 0.0
    %1135 = vmatpush1.xpose.msra.mxu0 0.0
    %1136 = vmatprep.subr.mxu0 0.0
    %1137 = vmatpush1.xpose.msra.mxu0 0.0
    %1138 = vmatprep.subr.mxu0 0.0
    %1139 = vmatpush1.xpose.msra.mxu0 0.0
    %1140 = vmatprep.subr.mxu0 0.0
    %1141 = vmatpush1.xpose.msra.mxu0 0.0
    %1142 = vmatprep.subr.mxu0 0.0
    %1143 = vmatpush1.xpose.msra.mxu0 %v1110
    %1144 = vmatprep.subr.mxu0 0.0
    %1145 = vmatpush2.xpose.msra.mxu0 0.0
    %1146 = vmatprep.subr.mxu0 0.0
    %1147 = vmatpush2.xpose.msra.mxu0 0.0
    %1148 = vmatprep.subr.mxu0 0.0
    %1149 = vmatpush2.xpose.msra.mxu0 0.0
    %1150 = vmatprep.subr.mxu0 0.0
    %1151 = vmatpush2.xpose.msra.mxu0 0.0
    %1152 = vmatprep.subr.mxu0 0.0
    %1153 = vmatpush2.xpose.msra.mxu0 0.0
    %1154 = vmatprep.subr.mxu0 0.0
    %1155 = vmatpush2.xpose.msra.mxu0 0.0
    %1156 = vmatprep.subr.mxu0 0.0
    %1157 = vmatpush2.xpose.msra.mxu0 0.0
    %1158 = vmatprep.subr.mxu0 0.0
    %1159 = vmatpush2.xpose.msra.mxu0 0.0
    %1160 = vmatprep.subr.mxu0 0.0
    %1161 = vmatpush2.xpose.msra.mxu0 0.0
    %1162 = vmatprep.subr.mxu0 0.0
    %1163 = vmatpush2.xpose.msra.mxu0 0.0
    %1164 = vmatprep.subr.mxu0 0.0
    %1165 = vmatpush2.xpose.msra.mxu0 0.0
    %1166 = vmatprep.subr.mxu0 0.0
    %1167 = vmatpush2.xpose.msra.mxu0 0.0
    %1168 = vmatprep.subr.mxu0 0.0
    %1169 = vmatpush2.xpose.msra.mxu0 0.0
    %1170 = vmatprep.subr.mxu0 0.0
    %1171 = vmatpush2.xpose.msra.mxu0 0.0
    %1172 = vmatprep.subr.mxu0 0.0
    %1173 = vmatpush2.xpose.msra.mxu0 0.0
    %1174 = vmatprep.subr.mxu0 0.0
    %1175 = vmatpush2.xpose.msra.mxu0 0.0
    %1176 = vmatprep.mubr.f32.mxu0 0.0
    %1177 = vmatmul.mubr.f32.gmra.mxu0 %v1108
    %v1178 = vpop.f32.mrf.mxu0
    %v1179 = vadd.f32 0.0, %v1178
    %v1180 = vpop.f32.mrf.mxu0
    %1181 = vdwg.mxu0
    %1183 = vrot.lane.b32.xlu0 %v411, 120
    %v1184 = vpop.permute.xlu0 %1183
    %v1185 = vsel %vm722, %v411, 0
    %v1187 = vsel %vm722, %v1184, 0
    %1189 = vmatprep.subr.mxu0 0.0
    %1190 = vmatpush1.xpose.msra.mxu0 0.0
    %1191 = vmatprep.subr.mxu0 0.0
    %1192 = vmatpush1.xpose.msra.mxu0 0.0
    %1193 = vmatprep.subr.mxu0 0.0
    %1194 = vmatpush1.xpose.msra.mxu0 0.0
    %1195 = vmatprep.subr.mxu0 0.0
    %1196 = vmatpush1.xpose.msra.mxu0 0.0
    %1197 = vmatprep.subr.mxu0 0.0
    %1198 = vmatpush1.xpose.msra.mxu0 0.0
    %1199 = vmatprep.subr.mxu0 0.0
    %1200 = vmatpush1.xpose.msra.mxu0 0.0
    %1201 = vmatprep.subr.mxu0 0.0
    %1202 = vmatpush1.xpose.msra.mxu0 0.0
    %1203 = vmatprep.subr.mxu0 0.0
    %1204 = vmatpush1.xpose.msra.mxu0 0.0
    %1205 = vmatprep.subr.mxu0 0.0
    %1206 = vmatpush1.xpose.msra.mxu0 0.0
    %1207 = vmatprep.subr.mxu0 0.0
    %1208 = vmatpush1.xpose.msra.mxu0 0.0
    %1209 = vmatprep.subr.mxu0 0.0
    %1210 = vmatpush1.xpose.msra.mxu0 0.0
    %1211 = vmatprep.subr.mxu0 0.0
    %1212 = vmatpush1.xpose.msra.mxu0 0.0
    %1213 = vmatprep.subr.mxu0 0.0
    %1214 = vmatpush1.xpose.msra.mxu0 0.0
    %1215 = vmatprep.subr.mxu0 0.0
    %1216 = vmatpush1.xpose.msra.mxu0 0.0
    %1217 = vmatprep.subr.mxu0 0.0
    %1218 = vmatpush1.xpose.msra.mxu0 0.0
    %1219 = vmatprep.subr.mxu0 0.0
    %1220 = vmatpush1.xpose.msra.mxu0 %v1187
    %1221 = vmatprep.subr.mxu0 0.0
    %1222 = vmatpush2.xpose.msra.mxu0 0.0
    %1223 = vmatprep.subr.mxu0 0.0
    %1224 = vmatpush2.xpose.msra.mxu0 0.0
    %1225 = vmatprep.subr.mxu0 0.0
    %1226 = vmatpush2.xpose.msra.mxu0 0.0
    %1227 = vmatprep.subr.mxu0 0.0
    %1228 = vmatpush2.xpose.msra.mxu0 0.0
    %1229 = vmatprep.subr.mxu0 0.0
    %1230 = vmatpush2.xpose.msra.mxu0 0.0
    %1231 = vmatprep.subr.mxu0 0.0
    %1232 = vmatpush2.xpose.msra.mxu0 0.0
    %1233 = vmatprep.subr.mxu0 0.0
    %1234 = vmatpush2.xpose.msra.mxu0 0.0
    %1235 = vmatprep.subr.mxu0 0.0
    %1236 = vmatpush2.xpose.msra.mxu0 0.0
    %1237 = vmatprep.subr.mxu0 0.0
    %1238 = vmatpush2.xpose.msra.mxu0 0.0
    %1239 = vmatprep.subr.mxu0 0.0
    %1240 = vmatpush2.xpose.msra.mxu0 0.0
    %1241 = vmatprep.subr.mxu0 0.0
    %1242 = vmatpush2.xpose.msra.mxu0 0.0
    %1243 = vmatprep.subr.mxu0 0.0
    %1244 = vmatpush2.xpose.msra.mxu0 0.0
    %1245 = vmatprep.subr.mxu0 0.0
    %1246 = vmatpush2.xpose.msra.mxu0 0.0
    %1247 = vmatprep.subr.mxu0 0.0
    %1248 = vmatpush2.xpose.msra.mxu0 0.0
    %1249 = vmatprep.subr.mxu0 0.0
    %1250 = vmatpush2.xpose.msra.mxu0 0.0
    %1251 = vmatprep.subr.mxu0 0.0
    %1252 = vmatpush2.xpose.msra.mxu0 0.0
    %1253 = vmatprep.mubr.f32.mxu0 0.0
    %1254 = vmatmul.mubr.f32.gmra.mxu0 %v1185
    %v1255 = vpop.f32.mrf.mxu0
    %v1256 = vadd.f32 0.0, %v1255
    %v1257 = vpop.f32.mrf.mxu0
    %1258 = vdwg.mxu0
    %1260 = vrot.lane.b32.xlu0 %v416, 120
    %v1261 = vpop.permute.xlu0 %1260
    %v1262 = vsel %vm722, %v416, 0
    %v1264 = vsel %vm722, %v1261, 0
    %1266 = vmatprep.subr.mxu0 0.0
    %1267 = vmatpush1.xpose.msra.mxu0 0.0
    %1268 = vmatprep.subr.mxu0 0.0
    %1269 = vmatpush1.xpose.msra.mxu0 0.0
    %1270 = vmatprep.subr.mxu0 0.0
    %1271 = vmatpush1.xpose.msra.mxu0 0.0
    %1272 = vmatprep.subr.mxu0 0.0
    %1273 = vmatpush1.xpose.msra.mxu0 0.0
    %1274 = vmatprep.subr.mxu0 0.0
    %1275 = vmatpush1.xpose.msra.mxu0 0.0
    %1276 = vmatprep.subr.mxu0 0.0
    %1277 = vmatpush1.xpose.msra.mxu0 0.0
    %1278 = vmatprep.subr.mxu0 0.0
    %1279 = vmatpush1.xpose.msra.mxu0 0.0
    %1280 = vmatprep.subr.mxu0 0.0
    %1281 = vmatpush1.xpose.msra.mxu0 0.0
    %1282 = vmatprep.subr.mxu0 0.0
    %1283 = vmatpush1.xpose.msra.mxu0 0.0
    %1284 = vmatprep.subr.mxu0 0.0
    %1285 = vmatpush1.xpose.msra.mxu0 0.0
    %1286 = vmatprep.subr.mxu0 0.0
    %1287 = vmatpush1.xpose.msra.mxu0 0.0
    %1288 = vmatprep.subr.mxu0 0.0
    %1289 = vmatpush1.xpose.msra.mxu0 0.0
    %1290 = vmatprep.subr.mxu0 0.0
    %1291 = vmatpush1.xpose.msra.mxu0 0.0
    %1292 = vmatprep.subr.mxu0 0.0
    %1293 = vmatpush1.xpose.msra.mxu0 0.0
    %1294 = vmatprep.subr.mxu0 0.0
    %1295 = vmatpush1.xpose.msra.mxu0 0.0
    %1296 = vmatprep.subr.mxu0 0.0
    %1297 = vmatpush1.xpose.msra.mxu0 %v1264
    %1298 = vmatprep.subr.mxu0 0.0
    %1299 = vmatpush2.xpose.msra.mxu0 0.0
    %1300 = vmatprep.subr.mxu0 0.0
    %1301 = vmatpush2.xpose.msra.mxu0 0.0
    %1302 = vmatprep.subr.mxu0 0.0
    %1303 = vmatpush2.xpose.msra.mxu0 0.0
    %1304 = vmatprep.subr.mxu0 0.0
    %1305 = vmatpush2.xpose.msra.mxu0 0.0
    %1306 = vmatprep.subr.mxu0 0.0
    %1307 = vmatpush2.xpose.msra.mxu0 0.0
    %1308 = vmatprep.subr.mxu0 0.0
    %1309 = vmatpush2.xpose.msra.mxu0 0.0
    %1310 = vmatprep.subr.mxu0 0.0
    %1311 = vmatpush2.xpose.msra.mxu0 0.0
    %1312 = vmatprep.subr.mxu0 0.0
    %1313 = vmatpush2.xpose.msra.mxu0 0.0
    %1314 = vmatprep.subr.mxu0 0.0
    %1315 = vmatpush2.xpose.msra.mxu0 0.0
    %1316 = vmatprep.subr.mxu0 0.0
    %1317 = vmatpush2.xpose.msra.mxu0 0.0
    %1318 = vmatprep.subr.mxu0 0.0
    %1319 = vmatpush2.xpose.msra.mxu0 0.0
    %1320 = vmatprep.subr.mxu0 0.0
    %1321 = vmatpush2.xpose.msra.mxu0 0.0
    %1322 = vmatprep.subr.mxu0 0.0
    %1323 = vmatpush2.xpose.msra.mxu0 0.0
    %1324 = vmatprep.subr.mxu0 0.0
    %1325 = vmatpush2.xpose.msra.mxu0 0.0
    %1326 = vmatprep.subr.mxu0 0.0
    %1327 = vmatpush2.xpose.msra.mxu0 0.0
    %1328 = vmatprep.subr.mxu0 0.0
    %1329 = vmatpush2.xpose.msra.mxu0 0.0
    %1330 = vmatprep.mubr.f32.mxu0 0.0
    %1331 = vmatmul.mubr.f32.gmra.mxu0 %v1262
    %v1332 = vpop.f32.mrf.mxu0
    %v1333 = vadd.f32 0.0, %v1332
    %v1334 = vpop.f32.mrf.mxu0
    %1335 = vdwg.mxu0
    %1337 = vrot.lane.b32.xlu0 %v486, 120
    %v1338 = vpop.permute.xlu0 %1337
    %v1339 = vsel %vm722, %v486, 0
    %v1341 = vsel %vm722, %v1338, 0
    %1343 = vmatprep.subr.mxu0 0.0
    %1344 = vmatpush1.xpose.msra.mxu0 0.0
    %1345 = vmatprep.subr.mxu0 0.0
    %1346 = vmatpush1.xpose.msra.mxu0 0.0
    %1347 = vmatprep.subr.mxu0 0.0
    %1348 = vmatpush1.xpose.msra.mxu0 0.0
    %1349 = vmatprep.subr.mxu0 0.0
    %1350 = vmatpush1.xpose.msra.mxu0 0.0
    %1351 = vmatprep.subr.mxu0 0.0
    %1352 = vmatpush1.xpose.msra.mxu0 0.0
    %1353 = vmatprep.subr.mxu0 0.0
    %1354 = vmatpush1.xpose.msra.mxu0 0.0
    %1355 = vmatprep.subr.mxu0 0.0
    %1356 = vmatpush1.xpose.msra.mxu0 0.0
    %1357 = vmatprep.subr.mxu0 0.0
    %1358 = vmatpush1.xpose.msra.mxu0 0.0
    %1359 = vmatprep.subr.mxu0 0.0
    %1360 = vmatpush1.xpose.msra.mxu0 0.0
    %1361 = vmatprep.subr.mxu0 0.0
    %1362 = vmatpush1.xpose.msra.mxu0 0.0
    %1363 = vmatprep.subr.mxu0 0.0
    %1364 = vmatpush1.xpose.msra.mxu0 0.0
    %1365 = vmatprep.subr.mxu0 0.0
    %1366 = vmatpush1.xpose.msra.mxu0 0.0
    %1367 = vmatprep.subr.mxu0 0.0
    %1368 = vmatpush1.xpose.msra.mxu0 0.0
    %1369 = vmatprep.subr.mxu0 0.0
    %1370 = vmatpush1.xpose.msra.mxu0 0.0
    %1371 = vmatprep.subr.mxu0 0.0
    %1372 = vmatpush1.xpose.msra.mxu0 0.0
    %1373 = vmatprep.subr.mxu0 0.0
    %1374 = vmatpush1.xpose.msra.mxu0 %v1341
    %1375 = vmatprep.subr.mxu0 0.0
    %1376 = vmatpush2.xpose.msra.mxu0 0.0
    %1377 = vmatprep.subr.mxu0 0.0
    %1378 = vmatpush2.xpose.msra.mxu0 0.0
    %1379 = vmatprep.subr.mxu0 0.0
    %1380 = vmatpush2.xpose.msra.mxu0 0.0
    %1381 = vmatprep.subr.mxu0 0.0
    %1382 = vmatpush2.xpose.msra.mxu0 0.0
    %1383 = vmatprep.subr.mxu0 0.0
    %1384 = vmatpush2.xpose.msra.mxu0 0.0
    %1385 = vmatprep.subr.mxu0 0.0
    %1386 = vmatpush2.xpose.msra.mxu0 0.0
    %1387 = vmatprep.subr.mxu0 0.0
    %1388 = vmatpush2.xpose.msra.mxu0 0.0
    %1389 = vmatprep.subr.mxu0 0.0
    %1390 = vmatpush2.xpose.msra.mxu0 0.0
    %1391 = vmatprep.subr.mxu0 0.0
    %1392 = vmatpush2.xpose.msra.mxu0 0.0
    %1393 = vmatprep.subr.mxu0 0.0
    %1394 = vmatpush2.xpose.msra.mxu0 0.0
    %1395 = vmatprep.subr.mxu0 0.0
    %1396 = vmatpush2.xpose.msra.mxu0 0.0
    %1397 = vmatprep.subr.mxu0 0.0
    %1398 = vmatpush2.xpose.msra.mxu0 0.0
    %1399 = vmatprep.subr.mxu0 0.0
    %1400 = vmatpush2.xpose.msra.mxu0 0.0
    %1401 = vmatprep.subr.mxu0 0.0
    %1402 = vmatpush2.xpose.msra.mxu0 0.0
    %1403 = vmatprep.subr.mxu0 0.0
    %1404 = vmatpush2.xpose.msra.mxu0 0.0
    %1405 = vmatprep.subr.mxu0 0.0
    %1406 = vmatpush2.xpose.msra.mxu0 0.0
    %1407 = vmatprep.mubr.f32.mxu0 0.0
    %1408 = vmatmul.mubr.f32.gmra.mxu0 %v1339
    %v1409 = vpop.f32.mrf.mxu0
    %v1410 = vadd.f32 0.0, %v1409
    %v1411 = vpop.f32.mrf.mxu0
    %1412 = vdwg.mxu0
    %1414 = vrot.lane.b32.xlu0 %v491, 120
    %v1415 = vpop.permute.xlu0 %1414
    %v1416 = vsel %vm722, %v491, 0
    %v1418 = vsel %vm722, %v1415, 0
    %1420 = vmatprep.subr.mxu0 0.0
    %1421 = vmatpush1.xpose.msra.mxu0 0.0
    %1422 = vmatprep.subr.mxu0 0.0
    %1423 = vmatpush1.xpose.msra.mxu0 0.0
    %1424 = vmatprep.subr.mxu0 0.0
    %1425 = vmatpush1.xpose.msra.mxu0 0.0
    %1426 = vmatprep.subr.mxu0 0.0
    %1427 = vmatpush1.xpose.msra.mxu0 0.0
    %1428 = vmatprep.subr.mxu0 0.0
    %1429 = vmatpush1.xpose.msra.mxu0 0.0
    %1430 = vmatprep.subr.mxu0 0.0
    %1431 = vmatpush1.xpose.msra.mxu0 0.0
    %1432 = vmatprep.subr.mxu0 0.0
    %1433 = vmatpush1.xpose.msra.mxu0 0.0
    %1434 = vmatprep.subr.mxu0 0.0
    %1435 = vmatpush1.xpose.msra.mxu0 0.0
    %1436 = vmatprep.subr.mxu0 0.0
    %1437 = vmatpush1.xpose.msra.mxu0 0.0
    %1438 = vmatprep.subr.mxu0 0.0
    %1439 = vmatpush1.xpose.msra.mxu0 0.0
    %1440 = vmatprep.subr.mxu0 0.0
    %1441 = vmatpush1.xpose.msra.mxu0 0.0
    %1442 = vmatprep.subr.mxu0 0.0
    %1443 = vmatpush1.xpose.msra.mxu0 0.0
    %1444 = vmatprep.subr.mxu0 0.0
    %1445 = vmatpush1.xpose.msra.mxu0 0.0
    %1446 = vmatprep.subr.mxu0 0.0
    %1447 = vmatpush1.xpose.msra.mxu0 0.0
    %1448 = vmatprep.subr.mxu0 0.0
    %1449 = vmatpush1.xpose.msra.mxu0 0.0
    %1450 = vmatprep.subr.mxu0 0.0
    %1451 = vmatpush1.xpose.msra.mxu0 %v1418
    %1452 = vmatprep.subr.mxu0 0.0
    %1453 = vmatpush2.xpose.msra.mxu0 0.0
    %1454 = vmatprep.subr.mxu0 0.0
    %1455 = vmatpush2.xpose.msra.mxu0 0.0
    %1456 = vmatprep.subr.mxu0 0.0
    %1457 = vmatpush2.xpose.msra.mxu0 0.0
    %1458 = vmatprep.subr.mxu0 0.0
    %1459 = vmatpush2.xpose.msra.mxu0 0.0
    %1460 = vmatprep.subr.mxu0 0.0
    %1461 = vmatpush2.xpose.msra.mxu0 0.0
    %1462 = vmatprep.subr.mxu0 0.0
    %1463 = vmatpush2.xpose.msra.mxu0 0.0
    %1464 = vmatprep.subr.mxu0 0.0
    %1465 = vmatpush2.xpose.msra.mxu0 0.0
    %1466 = vmatprep.subr.mxu0 0.0
    %1467 = vmatpush2.xpose.msra.mxu0 0.0
    %1468 = vmatprep.subr.mxu0 0.0
    %1469 = vmatpush2.xpose.msra.mxu0 0.0
    %1470 = vmatprep.subr.mxu0 0.0
    %1471 = vmatpush2.xpose.msra.mxu0 0.0
    %1472 = vmatprep.subr.mxu0 0.0
    %1473 = vmatpush2.xpose.msra.mxu0 0.0
    %1474 = vmatprep.subr.mxu0 0.0
    %1475 = vmatpush2.xpose.msra.mxu0 0.0
    %1476 = vmatprep.subr.mxu0 0.0
    %1477 = vmatpush2.xpose.msra.mxu0 0.0
    %1478 = vmatprep.subr.mxu0 0.0
    %1479 = vmatpush2.xpose.msra.mxu0 0.0
    %1480 = vmatprep.subr.mxu0 0.0
    %1481 = vmatpush2.xpose.msra.mxu0 0.0
    %1482 = vmatprep.subr.mxu0 0.0
    %1483 = vmatpush2.xpose.msra.mxu0 0.0
    %1484 = vmatprep.mubr.f32.mxu0 0.0
    %1485 = vmatmul.mubr.f32.gmra.mxu0 %v1416
    %v1486 = vpop.f32.mrf.mxu0
    %v1487 = vadd.f32 0.0, %v1486
    %v1488 = vpop.f32.mrf.mxu0
    %1489 = vdwg.mxu0
    %1491 = vrot.lane.b32.xlu0 %v561, 120
    %v1492 = vpop.permute.xlu0 %1491
    %v1493 = vsel %vm722, %v561, 0
    %v1495 = vsel %vm722, %v1492, 0
    %1497 = vmatprep.subr.mxu0 0.0
    %1498 = vmatpush1.xpose.msra.mxu0 0.0
    %1499 = vmatprep.subr.mxu0 0.0
    %1500 = vmatpush1.xpose.msra.mxu0 0.0
    %1501 = vmatprep.subr.mxu0 0.0
    %1502 = vmatpush1.xpose.msra.mxu0 0.0
    %1503 = vmatprep.subr.mxu0 0.0
    %1504 = vmatpush1.xpose.msra.mxu0 0.0
    %1505 = vmatprep.subr.mxu0 0.0
    %1506 = vmatpush1.xpose.msra.mxu0 0.0
    %1507 = vmatprep.subr.mxu0 0.0
    %1508 = vmatpush1.xpose.msra.mxu0 0.0
    %1509 = vmatprep.subr.mxu0 0.0
    %1510 = vmatpush1.xpose.msra.mxu0 0.0
    %1511 = vmatprep.subr.mxu0 0.0
    %1512 = vmatpush1.xpose.msra.mxu0 0.0
    %1513 = vmatprep.subr.mxu0 0.0
    %1514 = vmatpush1.xpose.msra.mxu0 0.0
    %1515 = vmatprep.subr.mxu0 0.0
    %1516 = vmatpush1.xpose.msra.mxu0 0.0
    %1517 = vmatprep.subr.mxu0 0.0
    %1518 = vmatpush1.xpose.msra.mxu0 0.0
    %1519 = vmatprep.subr.mxu0 0.0
    %1520 = vmatpush1.xpose.msra.mxu0 0.0
    %1521 = vmatprep.subr.mxu0 0.0
    %1522 = vmatpush1.xpose.msra.mxu0 0.0
    %1523 = vmatprep.subr.mxu0 0.0
    %1524 = vmatpush1.xpose.msra.mxu0 0.0
    %1525 = vmatprep.subr.mxu0 0.0
    %1526 = vmatpush1.xpose.msra.mxu0 0.0
    %1527 = vmatprep.subr.mxu0 0.0
    %1528 = vmatpush1.xpose.msra.mxu0 %v1495
    %1529 = vmatprep.subr.mxu0 0.0
    %1530 = vmatpush2.xpose.msra.mxu0 0.0
    %1531 = vmatprep.subr.mxu0 0.0
    %1532 = vmatpush2.xpose.msra.mxu0 0.0
    %1533 = vmatprep.subr.mxu0 0.0
    %1534 = vmatpush2.xpose.msra.mxu0 0.0
    %1535 = vmatprep.subr.mxu0 0.0
    %1536 = vmatpush2.xpose.msra.mxu0 0.0
    %1537 = vmatprep.subr.mxu0 0.0
    %1538 = vmatpush2.xpose.msra.mxu0 0.0
    %1539 = vmatprep.subr.mxu0 0.0
    %1540 = vmatpush2.xpose.msra.mxu0 0.0
    %1541 = vmatprep.subr.mxu0 0.0
    %1542 = vmatpush2.xpose.msra.mxu0 0.0
    %1543 = vmatprep.subr.mxu0 0.0
    %1544 = vmatpush2.xpose.msra.mxu0 0.0
    %1545 = vmatprep.subr.mxu0 0.0
    %1546 = vmatpush2.xpose.msra.mxu0 0.0
    %1547 = vmatprep.subr.mxu0 0.0
    %1548 = vmatpush2.xpose.msra.mxu0 0.0
    %1549 = vmatprep.subr.mxu0 0.0
    %1550 = vmatpush2.xpose.msra.mxu0 0.0
    %1551 = vmatprep.subr.mxu0 0.0
    %1552 = vmatpush2.xpose.msra.mxu0 0.0
    %1553 = vmatprep.subr.mxu0 0.0
    %1554 = vmatpush2.xpose.msra.mxu0 0.0
    %1555 = vmatprep.subr.mxu0 0.0
    %1556 = vmatpush2.xpose.msra.mxu0 0.0
    %1557 = vmatprep.subr.mxu0 0.0
    %1558 = vmatpush2.xpose.msra.mxu0 0.0
    %1559 = vmatprep.subr.mxu0 0.0
    %1560 = vmatpush2.xpose.msra.mxu0 0.0
    %1561 = vmatprep.mubr.f32.mxu0 0.0
    %1562 = vmatmul.mubr.f32.gmra.mxu0 %v1493
    %v1563 = vpop.f32.mrf.mxu0
    %v1564 = vadd.f32 0.0, %v1563
    %v1565 = vpop.f32.mrf.mxu0
    %1566 = vdwg.mxu0
    %1568 = vrot.lane.b32.xlu0 %v566, 120
    %v1569 = vpop.permute.xlu0 %1568
    %v1570 = vsel %vm722, %v566, 0
    %v1572 = vsel %vm722, %v1569, 0
    %1574 = vmatprep.subr.mxu0 0.0
    %1575 = vmatpush1.xpose.msra.mxu0 0.0
    %1576 = vmatprep.subr.mxu0 0.0
    %1577 = vmatpush1.xpose.msra.mxu0 0.0
    %1578 = vmatprep.subr.mxu0 0.0
    %1579 = vmatpush1.xpose.msra.mxu0 0.0
    %1580 = vmatprep.subr.mxu0 0.0
    %1581 = vmatpush1.xpose.msra.mxu0 0.0
    %1582 = vmatprep.subr.mxu0 0.0
    %1583 = vmatpush1.xpose.msra.mxu0 0.0
    %1584 = vmatprep.subr.mxu0 0.0
    %1585 = vmatpush1.xpose.msra.mxu0 0.0
    %1586 = vmatprep.subr.mxu0 0.0
    %1587 = vmatpush1.xpose.msra.mxu0 0.0
    %1588 = vmatprep.subr.mxu0 0.0
    %1589 = vmatpush1.xpose.msra.mxu0 0.0
    %1590 = vmatprep.subr.mxu0 0.0
    %1591 = vmatpush1.xpose.msra.mxu0 0.0
    %1592 = vmatprep.subr.mxu0 0.0
    %1593 = vmatpush1.xpose.msra.mxu0 0.0
    %1594 = vmatprep.subr.mxu0 0.0
    %1595 = vmatpush1.xpose.msra.mxu0 0.0
    %1596 = vmatprep.subr.mxu0 0.0
    %1597 = vmatpush1.xpose.msra.mxu0 0.0
    %1598 = vmatprep.subr.mxu0 0.0
    %1599 = vmatpush1.xpose.msra.mxu0 0.0
    %1600 = vmatprep.subr.mxu0 0.0
    %1601 = vmatpush1.xpose.msra.mxu0 0.0
    %1602 = vmatprep.subr.mxu0 0.0
    %1603 = vmatpush1.xpose.msra.mxu0 0.0
    %1604 = vmatprep.subr.mxu0 0.0
    %1605 = vmatpush1.xpose.msra.mxu0 %v1572
    %1606 = vmatprep.subr.mxu0 0.0
    %1607 = vmatpush2.xpose.msra.mxu0 0.0
    %1608 = vmatprep.subr.mxu0 0.0
    %1609 = vmatpush2.xpose.msra.mxu0 0.0
    %1610 = vmatprep.subr.mxu0 0.0
    %1611 = vmatpush2.xpose.msra.mxu0 0.0
    %1612 = vmatprep.subr.mxu0 0.0
    %1613 = vmatpush2.xpose.msra.mxu0 0.0
    %1614 = vmatprep.subr.mxu0 0.0
    %1615 = vmatpush2.xpose.msra.mxu0 0.0
    %1616 = vmatprep.subr.mxu0 0.0
    %1617 = vmatpush2.xpose.msra.mxu0 0.0
    %1618 = vmatprep.subr.mxu0 0.0
    %1619 = vmatpush2.xpose.msra.mxu0 0.0
    %1620 = vmatprep.subr.mxu0 0.0
    %1621 = vmatpush2.xpose.msra.mxu0 0.0
    %1622 = vmatprep.subr.mxu0 0.0
    %1623 = vmatpush2.xpose.msra.mxu0 0.0
    %1624 = vmatprep.subr.mxu0 0.0
    %1625 = vmatpush2.xpose.msra.mxu0 0.0
    %1626 = vmatprep.subr.mxu0 0.0
    %1627 = vmatpush2.xpose.msra.mxu0 0.0
    %1628 = vmatprep.subr.mxu0 0.0
    %1629 = vmatpush2.xpose.msra.mxu0 0.0
    %1630 = vmatprep.subr.mxu0 0.0
    %1631 = vmatpush2.xpose.msra.mxu0 0.0
    %1632 = vmatprep.subr.mxu0 0.0
    %1633 = vmatpush2.xpose.msra.mxu0 0.0
    %1634 = vmatprep.subr.mxu0 0.0
    %1635 = vmatpush2.xpose.msra.mxu0 0.0
    %1636 = vmatprep.subr.mxu0 0.0
    %1637 = vmatpush2.xpose.msra.mxu0 0.0
    %1638 = vmatprep.mubr.f32.mxu0 0.0
    %1639 = vmatmul.mubr.f32.gmra.mxu0 %v1570
    %v1640 = vpop.f32.mrf.mxu0
    %v1641 = vadd.f32 0.0, %v1640
    %v1642 = vpop.f32.mrf.mxu0
    %1643 = vdwg.mxu0
    %1645 = vrot.lane.b32.xlu0 %v636, 120
    %v1646 = vpop.permute.xlu0 %1645
    %v1647 = vsel %vm722, %v636, 0
    %v1649 = vsel %vm722, %v1646, 0
    %1651 = vmatprep.subr.mxu0 0.0
    %1652 = vmatpush1.xpose.msra.mxu0 0.0
    %1653 = vmatprep.subr.mxu0 0.0
    %1654 = vmatpush1.xpose.msra.mxu0 0.0
    %1655 = vmatprep.subr.mxu0 0.0
    %1656 = vmatpush1.xpose.msra.mxu0 0.0
    %1657 = vmatprep.subr.mxu0 0.0
    %1658 = vmatpush1.xpose.msra.mxu0 0.0
    %1659 = vmatprep.subr.mxu0 0.0
    %1660 = vmatpush1.xpose.msra.mxu0 0.0
    %1661 = vmatprep.subr.mxu0 0.0
    %1662 = vmatpush1.xpose.msra.mxu0 0.0
    %1663 = vmatprep.subr.mxu0 0.0
    %1664 = vmatpush1.xpose.msra.mxu0 0.0
    %1665 = vmatprep.subr.mxu0 0.0
    %1666 = vmatpush1.xpose.msra.mxu0 0.0
    %1667 = vmatprep.subr.mxu0 0.0
    %1668 = vmatpush1.xpose.msra.mxu0 0.0
    %1669 = vmatprep.subr.mxu0 0.0
    %1670 = vmatpush1.xpose.msra.mxu0 0.0
    %1671 = vmatprep.subr.mxu0 0.0
    %1672 = vmatpush1.xpose.msra.mxu0 0.0
    %1673 = vmatprep.subr.mxu0 0.0
    %1674 = vmatpush1.xpose.msra.mxu0 0.0
    %1675 = vmatprep.subr.mxu0 0.0
    %1676 = vmatpush1.xpose.msra.mxu0 0.0
    %1677 = vmatprep.subr.mxu0 0.0
    %1678 = vmatpush1.xpose.msra.mxu0 0.0
    %1679 = vmatprep.subr.mxu0 0.0
    %1680 = vmatpush1.xpose.msra.mxu0 0.0
    %1681 = vmatprep.subr.mxu0 0.0
    %1682 = vmatpush1.xpose.msra.mxu0 %v1649
    %1683 = vmatprep.subr.mxu0 0.0
    %1684 = vmatpush2.xpose.msra.mxu0 0.0
    %1685 = vmatprep.subr.mxu0 0.0
    %1686 = vmatpush2.xpose.msra.mxu0 0.0
    %1687 = vmatprep.subr.mxu0 0.0
    %1688 = vmatpush2.xpose.msra.mxu0 0.0
    %1689 = vmatprep.subr.mxu0 0.0
    %1690 = vmatpush2.xpose.msra.mxu0 0.0
    %1691 = vmatprep.subr.mxu0 0.0
    %1692 = vmatpush2.xpose.msra.mxu0 0.0
    %1693 = vmatprep.subr.mxu0 0.0
    %1694 = vmatpush2.xpose.msra.mxu0 0.0
    %1695 = vmatprep.subr.mxu0 0.0
    %1696 = vmatpush2.xpose.msra.mxu0 0.0
    %1697 = vmatprep.subr.mxu0 0.0
    %1698 = vmatpush2.xpose.msra.mxu0 0.0
    %1699 = vmatprep.subr.mxu0 0.0
    %1700 = vmatpush2.xpose.msra.mxu0 0.0
    %1701 = vmatprep.subr.mxu0 0.0
    %1702 = vmatpush2.xpose.msra.mxu0 0.0
    %1703 = vmatprep.subr.mxu0 0.0
    %1704 = vmatpush2.xpose.msra.mxu0 0.0
    %1705 = vmatprep.subr.mxu0 0.0
    %1706 = vmatpush2.xpose.msra.mxu0 0.0
    %1707 = vmatprep.subr.mxu0 0.0
    %1708 = vmatpush2.xpose.msra.mxu0 0.0
    %1709 = vmatprep.subr.mxu0 0.0
    %1710 = vmatpush2.xpose.msra.mxu0 0.0
    %1711 = vmatprep.subr.mxu0 0.0
    %1712 = vmatpush2.xpose.msra.mxu0 0.0
    %1713 = vmatprep.subr.mxu0 0.0
    %1714 = vmatpush2.xpose.msra.mxu0 0.0
    %1715 = vmatprep.mubr.f32.mxu0 0.0
    %1716 = vmatmul.mubr.f32.gmra.mxu0 %v1647
    %v1717 = vpop.f32.mrf.mxu0
    %v1718 = vadd.f32 0.0, %v1717
    %v1719 = vpop.f32.mrf.mxu0
    %1720 = vdwg.mxu0
    %1722 = vrot.lane.b32.xlu0 %v641, 120
    %v1723 = vpop.permute.xlu0 %1722
    %v1724 = vsel %vm722, %v641, 0
    %v1726 = vsel %vm722, %v1723, 0
    %1728 = vmatprep.subr.mxu0 0.0
    %1729 = vmatpush1.xpose.msra.mxu0 0.0
    %1730 = vmatprep.subr.mxu0 0.0
    %1731 = vmatpush1.xpose.msra.mxu0 0.0
    %1732 = vmatprep.subr.mxu0 0.0
    %1733 = vmatpush1.xpose.msra.mxu0 0.0
    %1734 = vmatprep.subr.mxu0 0.0
    %1735 = vmatpush1.xpose.msra.mxu0 0.0
    %1736 = vmatprep.subr.mxu0 0.0
    %1737 = vmatpush1.xpose.msra.mxu0 0.0
    %1738 = vmatprep.subr.mxu0 0.0
    %1739 = vmatpush1.xpose.msra.mxu0 0.0
    %1740 = vmatprep.subr.mxu0 0.0
    %1741 = vmatpush1.xpose.msra.mxu0 0.0
    %1742 = vmatprep.subr.mxu0 0.0
    %1743 = vmatpush1.xpose.msra.mxu0 0.0
    %1744 = vmatprep.subr.mxu0 0.0
    %1745 = vmatpush1.xpose.msra.mxu0 0.0
    %1746 = vmatprep.subr.mxu0 0.0
    %1747 = vmatpush1.xpose.msra.mxu0 0.0
    %1748 = vmatprep.subr.mxu0 0.0
    %1749 = vmatpush1.xpose.msra.mxu0 0.0
    %1750 = vmatprep.subr.mxu0 0.0
    %1751 = vmatpush1.xpose.msra.mxu0 0.0
    %1752 = vmatprep.subr.mxu0 0.0
    %1753 = vmatpush1.xpose.msra.mxu0 0.0
    %1754 = vmatprep.subr.mxu0 0.0
    %1755 = vmatpush1.xpose.msra.mxu0 0.0
    %1756 = vmatprep.subr.mxu0 0.0
    %1757 = vmatpush1.xpose.msra.mxu0 0.0
    %1758 = vmatprep.subr.mxu0 0.0
    %1759 = vmatpush1.xpose.msra.mxu0 %v1726
    %1760 = vmatprep.subr.mxu0 0.0
    %1761 = vmatpush2.xpose.msra.mxu0 0.0
    %1762 = vmatprep.subr.mxu0 0.0
    %1763 = vmatpush2.xpose.msra.mxu0 0.0
    %1764 = vmatprep.subr.mxu0 0.0
    %1765 = vmatpush2.xpose.msra.mxu0 0.0
    %1766 = vmatprep.subr.mxu0 0.0
    %1767 = vmatpush2.xpose.msra.mxu0 0.0
    %1768 = vmatprep.subr.mxu0 0.0
    %1769 = vmatpush2.xpose.msra.mxu0 0.0
    %1770 = vmatprep.subr.mxu0 0.0
    %1771 = vmatpush2.xpose.msra.mxu0 0.0
    %1772 = vmatprep.subr.mxu0 0.0
    %1773 = vmatpush2.xpose.msra.mxu0 0.0
    %1774 = vmatprep.subr.mxu0 0.0
    %1775 = vmatpush2.xpose.msra.mxu0 0.0
    %1776 = vmatprep.subr.mxu0 0.0
    %1777 = vmatpush2.xpose.msra.mxu0 0.0
    %1778 = vmatprep.subr.mxu0 0.0
    %1779 = vmatpush2.xpose.msra.mxu0 0.0
    %1780 = vmatprep.subr.mxu0 0.0
    %1781 = vmatpush2.xpose.msra.mxu0 0.0
    %1782 = vmatprep.subr.mxu0 0.0
    %1783 = vmatpush2.xpose.msra.mxu0 0.0
    %1784 = vmatprep.subr.mxu0 0.0
    %1785 = vmatpush2.xpose.msra.mxu0 0.0
    %1786 = vmatprep.subr.mxu0 0.0
    %1787 = vmatpush2.xpose.msra.mxu0 0.0
    %1788 = vmatprep.subr.mxu0 0.0
    %1789 = vmatpush2.xpose.msra.mxu0 0.0
    %1790 = vmatprep.subr.mxu0 0.0
    %1791 = vmatpush2.xpose.msra.mxu0 0.0
    %1792 = vmatprep.mubr.f32.mxu0 0.0
    %1793 = vmatmul.mubr.f32.gmra.mxu0 %v1724
    %v1794 = vpop.f32.mrf.mxu0
    %v1795 = vadd.f32 0.0, %v1794
    %v1796 = vpop.f32.mrf.mxu0
    %1797 = vdwg.mxu0
    %1799 = vrot.lane.b32.xlu0 %v711, 120
    %v1800 = vpop.permute.xlu0 %1799
    %v1801 = vsel %vm722, %v711, 0
    %v1803 = vsel %vm722, %v1800, 0
    %1805 = vmatprep.subr.mxu0 0.0
    %1806 = vmatpush1.xpose.msra.mxu0 0.0
    %1807 = vmatprep.subr.mxu0 0.0
    %1808 = vmatpush1.xpose.msra.mxu0 0.0
    %1809 = vmatprep.subr.mxu0 0.0
    %1810 = vmatpush1.xpose.msra.mxu0 0.0
    %1811 = vmatprep.subr.mxu0 0.0
    %1812 = vmatpush1.xpose.msra.mxu0 0.0
    %1813 = vmatprep.subr.mxu0 0.0
    %1814 = vmatpush1.xpose.msra.mxu0 0.0
    %1815 = vmatprep.subr.mxu0 0.0
    %1816 = vmatpush1.xpose.msra.mxu0 0.0
    %1817 = vmatprep.subr.mxu0 0.0
    %1818 = vmatpush1.xpose.msra.mxu0 0.0
    %1819 = vmatprep.subr.mxu0 0.0
    %1820 = vmatpush1.xpose.msra.mxu0 0.0
    %1821 = vmatprep.subr.mxu0 0.0
    %1822 = vmatpush1.xpose.msra.mxu0 0.0
    %1823 = vmatprep.subr.mxu0 0.0
    %1824 = vmatpush1.xpose.msra.mxu0 0.0
    %1825 = vmatprep.subr.mxu0 0.0
    %1826 = vmatpush1.xpose.msra.mxu0 0.0
    %1827 = vmatprep.subr.mxu0 0.0
    %1828 = vmatpush1.xpose.msra.mxu0 0.0
    %1829 = vmatprep.subr.mxu0 0.0
    %1830 = vmatpush1.xpose.msra.mxu0 0.0
    %1831 = vmatprep.subr.mxu0 0.0
    %1832 = vmatpush1.xpose.msra.mxu0 0.0
    %1833 = vmatprep.subr.mxu0 0.0
    %1834 = vmatpush1.xpose.msra.mxu0 0.0
    %1835 = vmatprep.subr.mxu0 0.0
    %1836 = vmatpush1.xpose.msra.mxu0 %v1803
    %1837 = vmatprep.subr.mxu0 0.0
    %1838 = vmatpush2.xpose.msra.mxu0 0.0
    %1839 = vmatprep.subr.mxu0 0.0
    %1840 = vmatpush2.xpose.msra.mxu0 0.0
    %1841 = vmatprep.subr.mxu0 0.0
    %1842 = vmatpush2.xpose.msra.mxu0 0.0
    %1843 = vmatprep.subr.mxu0 0.0
    %1844 = vmatpush2.xpose.msra.mxu0 0.0
    %1845 = vmatprep.subr.mxu0 0.0
    %1846 = vmatpush2.xpose.msra.mxu0 0.0
    %1847 = vmatprep.subr.mxu0 0.0
    %1848 = vmatpush2.xpose.msra.mxu0 0.0
    %1849 = vmatprep.subr.mxu0 0.0
    %1850 = vmatpush2.xpose.msra.mxu0 0.0
    %1851 = vmatprep.subr.mxu0 0.0
    %1852 = vmatpush2.xpose.msra.mxu0 0.0
    %1853 = vmatprep.subr.mxu0 0.0
    %1854 = vmatpush2.xpose.msra.mxu0 0.0
    %1855 = vmatprep.subr.mxu0 0.0
    %1856 = vmatpush2.xpose.msra.mxu0 0.0
    %1857 = vmatprep.subr.mxu0 0.0
    %1858 = vmatpush2.xpose.msra.mxu0 0.0
    %1859 = vmatprep.subr.mxu0 0.0
    %1860 = vmatpush2.xpose.msra.mxu0 0.0
    %1861 = vmatprep.subr.mxu0 0.0
    %1862 = vmatpush2.xpose.msra.mxu0 0.0
    %1863 = vmatprep.subr.mxu0 0.0
    %1864 = vmatpush2.xpose.msra.mxu0 0.0
    %1865 = vmatprep.subr.mxu0 0.0
    %1866 = vmatpush2.xpose.msra.mxu0 0.0
    %1867 = vmatprep.subr.mxu0 0.0
    %1868 = vmatpush2.xpose.msra.mxu0 0.0
    %1869 = vmatprep.mubr.f32.mxu0 0.0
    %1870 = vmatmul.mubr.f32.gmra.mxu0 %v1801
    %v1871 = vpop.f32.mrf.mxu0
    %v1872 = vadd.f32 0.0, %v1871
    %v1873 = vpop.f32.mrf.mxu0
    %1874 = vdwg.mxu0
    %1876 = vrot.lane.b32.xlu0 %v716, 120
    %v1877 = vpop.permute.xlu0 %1876
    %v1878 = vsel %vm722, %v716, 0
    %v1880 = vsel %vm722, %v1877, 0
    %1882 = vmatprep.subr.mxu0 0.0
    %1883 = vmatpush1.xpose.msra.mxu0 0.0
    %1884 = vmatprep.subr.mxu0 0.0
    %1885 = vmatpush1.xpose.msra.mxu0 0.0
    %1886 = vmatprep.subr.mxu0 0.0
    %1887 = vmatpush1.xpose.msra.mxu0 0.0
    %1888 = vmatprep.subr.mxu0 0.0
    %1889 = vmatpush1.xpose.msra.mxu0 0.0
    %1890 = vmatprep.subr.mxu0 0.0
    %1891 = vmatpush1.xpose.msra.mxu0 0.0
    %1892 = vmatprep.subr.mxu0 0.0
    %1893 = vmatpush1.xpose.msra.mxu0 0.0
    %1894 = vmatprep.subr.mxu0 0.0
    %1895 = vmatpush1.xpose.msra.mxu0 0.0
    %1896 = vmatprep.subr.mxu0 0.0
    %1897 = vmatpush1.xpose.msra.mxu0 0.0
    %1898 = vmatprep.subr.mxu0 0.0
    %1899 = vmatpush1.xpose.msra.mxu0 0.0
    %1900 = vmatprep.subr.mxu0 0.0
    %1901 = vmatpush1.xpose.msra.mxu0 0.0
    %1902 = vmatprep.subr.mxu0 0.0
    %1903 = vmatpush1.xpose.msra.mxu0 0.0
    %1904 = vmatprep.subr.mxu0 0.0
    %1905 = vmatpush1.xpose.msra.mxu0 0.0
    %1906 = vmatprep.subr.mxu0 0.0
    %1907 = vmatpush1.xpose.msra.mxu0 0.0
    %1908 = vmatprep.subr.mxu0 0.0
    %1909 = vmatpush1.xpose.msra.mxu0 0.0
    %1910 = vmatprep.subr.mxu0 0.0
    %1911 = vmatpush1.xpose.msra.mxu0 0.0
    %1912 = vmatprep.subr.mxu0 0.0
    %1913 = vmatpush1.xpose.msra.mxu0 %v1880
    %1914 = vmatprep.subr.mxu0 0.0
    %1915 = vmatpush2.xpose.msra.mxu0 0.0
    %1916 = vmatprep.subr.mxu0 0.0
    %1917 = vmatpush2.xpose.msra.mxu0 0.0
    %1918 = vmatprep.subr.mxu0 0.0
    %1919 = vmatpush2.xpose.msra.mxu0 0.0
    %1920 = vmatprep.subr.mxu0 0.0
    %1921 = vmatpush2.xpose.msra.mxu0 0.0
    %1922 = vmatprep.subr.mxu0 0.0
    %1923 = vmatpush2.xpose.msra.mxu0 0.0
    %1924 = vmatprep.subr.mxu0 0.0
    %1925 = vmatpush2.xpose.msra.mxu0 0.0
    %1926 = vmatprep.subr.mxu0 0.0
    %1927 = vmatpush2.xpose.msra.mxu0 0.0
    %1928 = vmatprep.subr.mxu0 0.0
    %1929 = vmatpush2.xpose.msra.mxu0 0.0
    %1930 = vmatprep.subr.mxu0 0.0
    %1931 = vmatpush2.xpose.msra.mxu0 0.0
    %1932 = vmatprep.subr.mxu0 0.0
    %1933 = vmatpush2.xpose.msra.mxu0 0.0
    %1934 = vmatprep.subr.mxu0 0.0
    %1935 = vmatpush2.xpose.msra.mxu0 0.0
    %1936 = vmatprep.subr.mxu0 0.0
    %1937 = vmatpush2.xpose.msra.mxu0 0.0
    %1938 = vmatprep.subr.mxu0 0.0
    %1939 = vmatpush2.xpose.msra.mxu0 0.0
    %1940 = vmatprep.subr.mxu0 0.0
    %1941 = vmatpush2.xpose.msra.mxu0 0.0
    %1942 = vmatprep.subr.mxu0 0.0
    %1943 = vmatpush2.xpose.msra.mxu0 0.0
    %1944 = vmatprep.subr.mxu0 0.0
    %1945 = vmatpush2.xpose.msra.mxu0 0.0
    %1946 = vmatprep.mubr.f32.mxu0 0.0
    %1947 = vmatmul.mubr.f32.gmra.mxu0 %v1878
    %v1948 = vpop.f32.mrf.mxu0
    %v1949 = vadd.f32 0.0, %v1948
    %v1950 = vpop.f32.mrf.mxu0
    %1951 = vdwg.mxu0
    %v1952 = vmul.f32 %v794, 0.125
    %v1953 = vmul.f32 %v871, 0.125
    %v1954 = vmul.f32 %v948, 0.125
    %v1955 = vmul.f32 %v1025, 0.125
    %v1956 = vmul.f32 %v1102, 0.125
    %v1957 = vmul.f32 %v1179, 0.125
    %v1958 = vmul.f32 %v1256, 0.125
    %v1959 = vmul.f32 %v1333, 0.125
    %v1960 = vmul.f32 %v1410, 0.125
    %v1961 = vmul.f32 %v1487, 0.125
    %v1962 = vmul.f32 %v1564, 0.125
    %v1963 = vmul.f32 %v1641, 0.125
    %v1964 = vmul.f32 %v1718, 0.125
    %v1965 = vmul.f32 %v1795, 0.125
    %v1966 = vmul.f32 %v1872, 0.125
    %v1967 = vmul.f32 %v1949, 0.125
    %v1968 = vsel %vm722, %v1952, -inf
    %1969 = vmax.xlane.f32.xlu0 %v1968
    %v1970 = vpop.xlane.xlu0 %1969
    %v1971 = vsel %vm722, %v1953, -inf
    %1972 = vmax.xlane.f32.xlu0 %v1971
    %v1973 = vpop.xlane.xlu0 %1972
    %v1974 = vsel %vm722, %v1954, -inf
    %1975 = vmax.xlane.f32.xlu0 %v1974
    %v1976 = vpop.xlane.xlu0 %1975
    %v1977 = vsel %vm722, %v1955, -inf
    %1978 = vmax.xlane.f32.xlu0 %v1977
    %v1979 = vpop.xlane.xlu0 %1978
    %v1980 = vsel %vm722, %v1956, -inf
    %1981 = vmax.xlane.f32.xlu0 %v1980
    %v1982 = vpop.xlane.xlu0 %1981
    %v1983 = vsel %vm722, %v1957, -inf
    %1984 = vmax.xlane.f32.xlu0 %v1983
    %v1985 = vpop.xlane.xlu0 %1984
    %v1986 = vsel %vm722, %v1958, -inf
    %1987 = vmax.xlane.f32.xlu0 %v1986
    %v1988 = vpop.xlane.xlu0 %1987
    %v1989 = vsel %vm722, %v1959, -inf
    %1990 = vmax.xlane.f32.xlu0 %v1989
    %v1991 = vpop.xlane.xlu0 %1990
    %v1992 = vsel %vm722, %v1960, -inf
    %1993 = vmax.xlane.f32.xlu0 %v1992
    %v1994 = vpop.xlane.xlu0 %1993
    %v1995 = vsel %vm722, %v1961, -inf
    %1996 = vmax.xlane.f32.xlu0 %v1995
    %v1997 = vpop.xlane.xlu0 %1996
    %v1998 = vsel %vm722, %v1962, -inf
    %1999 = vmax.xlane.f32.xlu0 %v1998
    %v2000 = vpop.xlane.xlu0 %1999
    %v2001 = vsel %vm722, %v1963, -inf
    %2002 = vmax.xlane.f32.xlu0 %v2001
    %v2003 = vpop.xlane.xlu0 %2002
    %v2004 = vsel %vm722, %v1964, -inf
    %2005 = vmax.xlane.f32.xlu0 %v2004
    %v2006 = vpop.xlane.xlu0 %2005
    %v2007 = vsel %vm722, %v1965, -inf
    %2008 = vmax.xlane.f32.xlu0 %v2007
    %v2009 = vpop.xlane.xlu0 %2008
    %v2010 = vsel %vm722, %v1966, -inf
    %2011 = vmax.xlane.f32.xlu0 %v2010
    %v2012 = vpop.xlane.xlu0 %2011
    %v2013 = vsel %vm722, %v1967, -inf
    %2014 = vmax.xlane.f32.xlu0 %v2013
    %v2015 = vpop.xlane.xlu0 %2014
    %v2016 = vsub.f32 %v1952, %v1970
    %v2017 = vsub.f32 %v1953, %v1973
    %v2018 = vsub.f32 %v1954, %v1976
    %v2019 = vsub.f32 %v1955, %v1979
    %v2020 = vsub.f32 %v1956, %v1982
    %v2021 = vsub.f32 %v1957, %v1985
    %v2022 = vsub.f32 %v1958, %v1988
    %v2023 = vsub.f32 %v1959, %v1991
    %v2024 = vsub.f32 %v1960, %v1994
    %v2025 = vsub.f32 %v1961, %v1997
    %v2026 = vsub.f32 %v1962, %v2000
    %v2027 = vsub.f32 %v1963, %v2003
    %v2028 = vsub.f32 %v1964, %v2006
    %v2029 = vsub.f32 %v1965, %v2009
    %v2030 = vsub.f32 %v1966, %v2012
    %v2031 = vsub.f32 %v1967, %v2015
    %v2032 = vmul.f32 %v2016, 1.442695
    %v2033 = vpow.pop %v2032
    %v2034 = vmul.f32 %v2017, 1.442695
    %v2035 = vpow.pop %v2034
    %v2036 = vmul.f32 %v2018, 1.442695
    %v2037 = vpow.pop %v2036
    %v2038 = vmul.f32 %v2019, 1.442695
    %v2039 = vpow.pop %v2038
    %v2040 = vmul.f32 %v2020, 1.442695
    %v2041 = vpow.pop %v2040
    %v2042 = vmul.f32 %v2021, 1.442695
    %v2043 = vpow.pop %v2042
    %v2044 = vmul.f32 %v2022, 1.442695
    %v2045 = vpow.pop %v2044
    %v2046 = vmul.f32 %v2023, 1.442695
    %v2047 = vpow.pop %v2046
    %v2048 = vmul.f32 %v2024, 1.442695
    %v2049 = vpow.pop %v2048
    %v2050 = vmul.f32 %v2025, 1.442695
    %v2051 = vpow.pop %v2050
    %v2052 = vmul.f32 %v2026, 1.442695
    %v2053 = vpow.pop %v2052
    %v2054 = vmul.f32 %v2027, 1.442695
    %v2055 = vpow.pop %v2054
    %v2056 = vmul.f32 %v2028, 1.442695
    %v2057 = vpow.pop %v2056
    %v2058 = vmul.f32 %v2029, 1.442695
    %v2059 = vpow.pop %v2058
    %v2060 = vmul.f32 %v2030, 1.442695
    %v2061 = vpow.pop %v2060
    %v2062 = vmul.f32 %v2031, 1.442695
    %v2063 = vpow.pop %v2062
    %v2064 = vsel %vm722, %v2033, 0.0
    %2065 = vadd.xlane.f32.xlu0 %v2064
    %v2066 = vpop.xlane.xlu0 %2065
    %v2067 = vsel %vm722, %v2035, 0.0
    %2068 = vadd.xlane.f32.xlu0 %v2067
    %v2069 = vpop.xlane.xlu0 %2068
    %v2070 = vsel %vm722, %v2037, 0.0
    %2071 = vadd.xlane.f32.xlu0 %v2070
    %v2072 = vpop.xlane.xlu0 %2071
    %v2073 = vsel %vm722, %v2039, 0.0
    %2074 = vadd.xlane.f32.xlu0 %v2073
    %v2075 = vpop.xlane.xlu0 %2074
    %v2076 = vsel %vm722, %v2041, 0.0
    %2077 = vadd.xlane.f32.xlu0 %v2076
    %v2078 = vpop.xlane.xlu0 %2077
    %v2079 = vsel %vm722, %v2043, 0.0
    %2080 = vadd.xlane.f32.xlu0 %v2079
    %v2081 = vpop.xlane.xlu0 %2080
    %v2082 = vsel %vm722, %v2045, 0.0
    %2083 = vadd.xlane.f32.xlu0 %v2082
    %v2084 = vpop.xlane.xlu0 %2083
    %v2085 = vsel %vm722, %v2047, 0.0
    %2086 = vadd.xlane.f32.xlu0 %v2085
    %v2087 = vpop.xlane.xlu0 %2086
    %v2088 = vsel %vm722, %v2049, 0.0
    %2089 = vadd.xlane.f32.xlu0 %v2088
    %v2090 = vpop.xlane.xlu0 %2089
    %v2091 = vsel %vm722, %v2051, 0.0
    %2092 = vadd.xlane.f32.xlu0 %v2091
    %v2093 = vpop.xlane.xlu0 %2092
    %v2094 = vsel %vm722, %v2053, 0.0
    %2095 = vadd.xlane.f32.xlu0 %v2094
    %v2096 = vpop.xlane.xlu0 %2095
    %v2097 = vsel %vm722, %v2055, 0.0
    %2098 = vadd.xlane.f32.xlu0 %v2097
    %v2099 = vpop.xlane.xlu0 %2098
    %v2100 = vsel %vm722, %v2057, 0.0
    %2101 = vadd.xlane.f32.xlu0 %v2100
    %v2102 = vpop.xlane.xlu0 %2101
    %v2103 = vsel %vm722, %v2059, 0.0
    %2104 = vadd.xlane.f32.xlu0 %v2103
    %v2105 = vpop.xlane.xlu0 %2104
    %v2106 = vsel %vm722, %v2061, 0.0
    %2107 = vadd.xlane.f32.xlu0 %v2106
    %v2108 = vpop.xlane.xlu0 %2107
    %v2109 = vsel %vm722, %v2063, 0.0
    %2110 = vadd.xlane.f32.xlu0 %v2109
    %v2111 = vpop.xlane.xlu0 %2110
    %v2112 = vrcp.pop %v2066
    %v2113 = vrcp.pop %v2069
    %v2114 = vrcp.pop %v2072
    %v2115 = vrcp.pop %v2075
    %v2116 = vrcp.pop %v2078
    %v2117 = vrcp.pop %v2081
    %v2118 = vrcp.pop %v2084
    %v2119 = vrcp.pop %v2087
    %v2120 = vrcp.pop %v2090
    %v2121 = vrcp.pop %v2093
    %v2122 = vrcp.pop %v2096
    %v2123 = vrcp.pop %v2099
    %v2124 = vrcp.pop %v2102
    %v2125 = vrcp.pop %v2105
    %v2126 = vrcp.pop %v2108
    %v2127 = vrcp.pop %v2111
    %v2128 = vmul.f32 %v2033, %v2112
    %v2129 = vmul.f32 %v2035, %v2113
    %v2130 = vmul.f32 %v2037, %v2114
    %v2131 = vmul.f32 %v2039, %v2115
    %v2132 = vmul.f32 %v2041, %v2116
    %v2133 = vmul.f32 %v2043, %v2117
    %v2134 = vmul.f32 %v2045, %v2118
    %v2135 = vmul.f32 %v2047, %v2119
    %v2136 = vmul.f32 %v2049, %v2120
    %v2137 = vmul.f32 %v2051, %v2121
    %v2138 = vmul.f32 %v2053, %v2122
    %v2139 = vmul.f32 %v2055, %v2123
    %v2140 = vmul.f32 %v2057, %v2124
    %v2141 = vmul.f32 %v2059, %v2125
    %v2142 = vmul.f32 %v2061, %v2126
    %v2143 = vmul.f32 %v2063, %v2127
    %2144 = vrot.lane.b32.xlu0 %v186, 112
    %v2145 = vpop.permute.xlu0 %2144
    %v2148 = vsel %vm722, %v2128, 0
    %2150 = vmatprep.subr.mxu0 0.0
    %2151 = vmatpush1.msra.mxu0 0.0
    %2152 = vmatprep.subr.mxu0 0.0
    %2153 = vmatpush1.msra.mxu0 0.0
    %2154 = vmatprep.subr.mxu0 0.0
    %2155 = vmatpush1.msra.mxu0 0.0
    %2156 = vmatprep.subr.mxu0 0.0
    %2157 = vmatpush1.msra.mxu0 0.0
    %2158 = vmatprep.subr.mxu0 0.0
    %2159 = vmatpush1.msra.mxu0 0.0
    %2160 = vmatprep.subr.mxu0 0.0
    %2161 = vmatpush1.msra.mxu0 0.0
    %2162 = vmatprep.subr.mxu0 0.0
    %2163 = vmatpush1.msra.mxu0 0.0
    %2164 = vmatprep.subr.mxu0 0.0
    %2165 = vmatpush1.msra.mxu0 0.0
    %2166 = vmatprep.subr.mxu0 0.0
    %2167 = vmatpush1.msra.mxu0 0.0
    %2168 = vmatprep.subr.mxu0 0.0
    %2169 = vmatpush1.msra.mxu0 0.0
    %2170 = vmatprep.subr.mxu0 0.0
    %2171 = vmatpush1.msra.mxu0 0.0
    %2172 = vmatprep.subr.mxu0 0.0
    %2173 = vmatpush1.msra.mxu0 0.0
    %2174 = vmatprep.subr.mxu0 0.0
    %2175 = vmatpush1.msra.mxu0 0.0
    %2176 = vmatprep.subr.mxu0 0.0
    %2177 = vmatpush1.msra.mxu0 0.0
    %2178 = vmatprep.subr.mxu0 0.0
    %2179 = vmatpush1.msra.mxu0 0.0
    %2180 = vmatprep.subr.mxu0 0.0
    %2181 = vmatpush1.msra.mxu0 %v2145
    %2182 = vmatprep.subr.mxu0 0.0
    %2183 = vmatpush2.msra.mxu0 0.0
    %2184 = vmatprep.subr.mxu0 0.0
    %2185 = vmatpush2.msra.mxu0 0.0
    %2186 = vmatprep.subr.mxu0 0.0
    %2187 = vmatpush2.msra.mxu0 0.0
    %2188 = vmatprep.subr.mxu0 0.0
    %2189 = vmatpush2.msra.mxu0 0.0
    %2190 = vmatprep.subr.mxu0 0.0
    %2191 = vmatpush2.msra.mxu0 0.0
    %2192 = vmatprep.subr.mxu0 0.0
    %2193 = vmatpush2.msra.mxu0 0.0
    %2194 = vmatprep.subr.mxu0 0.0
    %2195 = vmatpush2.msra.mxu0 0.0
    %2196 = vmatprep.subr.mxu0 0.0
    %2197 = vmatpush2.msra.mxu0 0.0
    %2198 = vmatprep.subr.mxu0 0.0
    %2199 = vmatpush2.msra.mxu0 0.0
    %2200 = vmatprep.subr.mxu0 0.0
    %2201 = vmatpush2.msra.mxu0 0.0
    %2202 = vmatprep.subr.mxu0 0.0
    %2203 = vmatpush2.msra.mxu0 0.0
    %2204 = vmatprep.subr.mxu0 0.0
    %2205 = vmatpush2.msra.mxu0 0.0
    %2206 = vmatprep.subr.mxu0 0.0
    %2207 = vmatpush2.msra.mxu0 0.0
    %2208 = vmatprep.subr.mxu0 0.0
    %2209 = vmatpush2.msra.mxu0 0.0
    %2210 = vmatprep.subr.mxu0 0.0
    %2211 = vmatpush2.msra.mxu0 0.0
    %2212 = vmatprep.subr.mxu0 0.0
    %2213 = vmatpush2.msra.mxu0 0.0
    %2214 = vmatprep.mubr.f32.mxu0 0.0
    %2215 = vmatmul.mubr.f32.gmra.mxu0 %v2148
    %v2216 = vpop.f32.mrf.mxu0
    %v2217 = vadd.f32 0.0, %v2216
    %v2218 = vpop.f32.mrf.mxu0
    %2219 = vdwg.mxu0
    %2220 = vrot.lane.b32.xlu0 %v191, 112
    %v2221 = vpop.permute.xlu0 %2220
    %v2224 = vsel %vm722, %v2129, 0
    %2226 = vmatprep.subr.mxu0 0.0
    %2227 = vmatpush1.msra.mxu0 0.0
    %2228 = vmatprep.subr.mxu0 0.0
    %2229 = vmatpush1.msra.mxu0 0.0
    %2230 = vmatprep.subr.mxu0 0.0
    %2231 = vmatpush1.msra.mxu0 0.0
    %2232 = vmatprep.subr.mxu0 0.0
    %2233 = vmatpush1.msra.mxu0 0.0
    %2234 = vmatprep.subr.mxu0 0.0
    %2235 = vmatpush1.msra.mxu0 0.0
    %2236 = vmatprep.subr.mxu0 0.0
    %2237 = vmatpush1.msra.mxu0 0.0
    %2238 = vmatprep.subr.mxu0 0.0
    %2239 = vmatpush1.msra.mxu0 0.0
    %2240 = vmatprep.subr.mxu0 0.0
    %2241 = vmatpush1.msra.mxu0 0.0
    %2242 = vmatprep.subr.mxu0 0.0
    %2243 = vmatpush1.msra.mxu0 0.0
    %2244 = vmatprep.subr.mxu0 0.0
    %2245 = vmatpush1.msra.mxu0 0.0
    %2246 = vmatprep.subr.mxu0 0.0
    %2247 = vmatpush1.msra.mxu0 0.0
    %2248 = vmatprep.subr.mxu0 0.0
    %2249 = vmatpush1.msra.mxu0 0.0
    %2250 = vmatprep.subr.mxu0 0.0
    %2251 = vmatpush1.msra.mxu0 0.0
    %2252 = vmatprep.subr.mxu0 0.0
    %2253 = vmatpush1.msra.mxu0 0.0
    %2254 = vmatprep.subr.mxu0 0.0
    %2255 = vmatpush1.msra.mxu0 0.0
    %2256 = vmatprep.subr.mxu0 0.0
    %2257 = vmatpush1.msra.mxu0 %v2221
    %2258 = vmatprep.subr.mxu0 0.0
    %2259 = vmatpush2.msra.mxu0 0.0
    %2260 = vmatprep.subr.mxu0 0.0
    %2261 = vmatpush2.msra.mxu0 0.0
    %2262 = vmatprep.subr.mxu0 0.0
    %2263 = vmatpush2.msra.mxu0 0.0
    %2264 = vmatprep.subr.mxu0 0.0
    %2265 = vmatpush2.msra.mxu0 0.0
    %2266 = vmatprep.subr.mxu0 0.0
    %2267 = vmatpush2.msra.mxu0 0.0
    %2268 = vmatprep.subr.mxu0 0.0
    %2269 = vmatpush2.msra.mxu0 0.0
    %2270 = vmatprep.subr.mxu0 0.0
    %2271 = vmatpush2.msra.mxu0 0.0
    %2272 = vmatprep.subr.mxu0 0.0
    %2273 = vmatpush2.msra.mxu0 0.0
    %2274 = vmatprep.subr.mxu0 0.0
    %2275 = vmatpush2.msra.mxu0 0.0
    %2276 = vmatprep.subr.mxu0 0.0
    %2277 = vmatpush2.msra.mxu0 0.0
    %2278 = vmatprep.subr.mxu0 0.0
    %2279 = vmatpush2.msra.mxu0 0.0
    %2280 = vmatprep.subr.mxu0 0.0
    %2281 = vmatpush2.msra.mxu0 0.0
    %2282 = vmatprep.subr.mxu0 0.0
    %2283 = vmatpush2.msra.mxu0 0.0
    %2284 = vmatprep.subr.mxu0 0.0
    %2285 = vmatpush2.msra.mxu0 0.0
    %2286 = vmatprep.subr.mxu0 0.0
    %2287 = vmatpush2.msra.mxu0 0.0
    %2288 = vmatprep.subr.mxu0 0.0
    %2289 = vmatpush2.msra.mxu0 0.0
    %2290 = vmatprep.mubr.f32.mxu0 0.0
    %2291 = vmatmul.mubr.f32.gmra.mxu0 %v2224
    %v2292 = vpop.f32.mrf.mxu0
    %v2293 = vadd.f32 0.0, %v2292
    %v2294 = vpop.f32.mrf.mxu0
    %2295 = vdwg.mxu0
    %2296 = vrot.lane.b32.xlu0 %v261, 112
    %v2297 = vpop.permute.xlu0 %2296
    %v2300 = vsel %vm722, %v2130, 0
    %2302 = vmatprep.subr.mxu0 0.0
    %2303 = vmatpush1.msra.mxu0 0.0
    %2304 = vmatprep.subr.mxu0 0.0
    %2305 = vmatpush1.msra.mxu0 0.0
    %2306 = vmatprep.subr.mxu0 0.0
    %2307 = vmatpush1.msra.mxu0 0.0
    %2308 = vmatprep.subr.mxu0 0.0
    %2309 = vmatpush1.msra.mxu0 0.0
    %2310 = vmatprep.subr.mxu0 0.0
    %2311 = vmatpush1.msra.mxu0 0.0
    %2312 = vmatprep.subr.mxu0 0.0
    %2313 = vmatpush1.msra.mxu0 0.0
    %2314 = vmatprep.subr.mxu0 0.0
    %2315 = vmatpush1.msra.mxu0 0.0
    %2316 = vmatprep.subr.mxu0 0.0
    %2317 = vmatpush1.msra.mxu0 0.0
    %2318 = vmatprep.subr.mxu0 0.0
    %2319 = vmatpush1.msra.mxu0 0.0
    %2320 = vmatprep.subr.mxu0 0.0
    %2321 = vmatpush1.msra.mxu0 0.0
    %2322 = vmatprep.subr.mxu0 0.0
    %2323 = vmatpush1.msra.mxu0 0.0
    %2324 = vmatprep.subr.mxu0 0.0
    %2325 = vmatpush1.msra.mxu0 0.0
    %2326 = vmatprep.subr.mxu0 0.0
    %2327 = vmatpush1.msra.mxu0 0.0
    %2328 = vmatprep.subr.mxu0 0.0
    %2329 = vmatpush1.msra.mxu0 0.0
    %2330 = vmatprep.subr.mxu0 0.0
    %2331 = vmatpush1.msra.mxu0 0.0
    %2332 = vmatprep.subr.mxu0 0.0
    %2333 = vmatpush1.msra.mxu0 %v2297
    %2334 = vmatprep.subr.mxu0 0.0
    %2335 = vmatpush2.msra.mxu0 0.0
    %2336 = vmatprep.subr.mxu0 0.0
    %2337 = vmatpush2.msra.mxu0 0.0
    %2338 = vmatprep.subr.mxu0 0.0
    %2339 = vmatpush2.msra.mxu0 0.0
    %2340 = vmatprep.subr.mxu0 0.0
    %2341 = vmatpush2.msra.mxu0 0.0
    %2342 = vmatprep.subr.mxu0 0.0
    %2343 = vmatpush2.msra.mxu0 0.0
    %2344 = vmatprep.subr.mxu0 0.0
    %2345 = vmatpush2.msra.mxu0 0.0
    %2346 = vmatprep.subr.mxu0 0.0
    %2347 = vmatpush2.msra.mxu0 0.0
    %2348 = vmatprep.subr.mxu0 0.0
    %2349 = vmatpush2.msra.mxu0 0.0
    %2350 = vmatprep.subr.mxu0 0.0
    %2351 = vmatpush2.msra.mxu0 0.0
    %2352 = vmatprep.subr.mxu0 0.0
    %2353 = vmatpush2.msra.mxu0 0.0
    %2354 = vmatprep.subr.mxu0 0.0
    %2355 = vmatpush2.msra.mxu0 0.0
    %2356 = vmatprep.subr.mxu0 0.0
    %2357 = vmatpush2.msra.mxu0 0.0
    %2358 = vmatprep.subr.mxu0 0.0
    %2359 = vmatpush2.msra.mxu0 0.0
    %2360 = vmatprep.subr.mxu0 0.0
    %2361 = vmatpush2.msra.mxu0 0.0
    %2362 = vmatprep.subr.mxu0 0.0
    %2363 = vmatpush2.msra.mxu0 0.0
    %2364 = vmatprep.subr.mxu0 0.0
    %2365 = vmatpush2.msra.mxu0 0.0
    %2366 = vmatprep.mubr.f32.mxu0 0.0
    %2367 = vmatmul.mubr.f32.gmra.mxu0 %v2300
    %v2368 = vpop.f32.mrf.mxu0
    %v2369 = vadd.f32 0.0, %v2368
    %v2370 = vpop.f32.mrf.mxu0
    %2371 = vdwg.mxu0
    %2372 = vrot.lane.b32.xlu0 %v266, 112
    %v2373 = vpop.permute.xlu0 %2372
    %v2376 = vsel %vm722, %v2131, 0
    %2378 = vmatprep.subr.mxu0 0.0
    %2379 = vmatpush1.msra.mxu0 0.0
    %2380 = vmatprep.subr.mxu0 0.0
    %2381 = vmatpush1.msra.mxu0 0.0
    %2382 = vmatprep.subr.mxu0 0.0
    %2383 = vmatpush1.msra.mxu0 0.0
    %2384 = vmatprep.subr.mxu0 0.0
    %2385 = vmatpush1.msra.mxu0 0.0
    %2386 = vmatprep.subr.mxu0 0.0
    %2387 = vmatpush1.msra.mxu0 0.0
    %2388 = vmatprep.subr.mxu0 0.0
    %2389 = vmatpush1.msra.mxu0 0.0
    %2390 = vmatprep.subr.mxu0 0.0
    %2391 = vmatpush1.msra.mxu0 0.0
    %2392 = vmatprep.subr.mxu0 0.0
    %2393 = vmatpush1.msra.mxu0 0.0
    %2394 = vmatprep.subr.mxu0 0.0
    %2395 = vmatpush1.msra.mxu0 0.0
    %2396 = vmatprep.subr.mxu0 0.0
    %2397 = vmatpush1.msra.mxu0 0.0
    %2398 = vmatprep.subr.mxu0 0.0
    %2399 = vmatpush1.msra.mxu0 0.0
    %2400 = vmatprep.subr.mxu0 0.0
    %2401 = vmatpush1.msra.mxu0 0.0
    %2402 = vmatprep.subr.mxu0 0.0
    %2403 = vmatpush1.msra.mxu0 0.0
    %2404 = vmatprep.subr.mxu0 0.0
    %2405 = vmatpush1.msra.mxu0 0.0
    %2406 = vmatprep.subr.mxu0 0.0
    %2407 = vmatpush1.msra.mxu0 0.0
    %2408 = vmatprep.subr.mxu0 0.0
    %2409 = vmatpush1.msra.mxu0 %v2373
    %2410 = vmatprep.subr.mxu0 0.0
    %2411 = vmatpush2.msra.mxu0 0.0
    %2412 = vmatprep.subr.mxu0 0.0
    %2413 = vmatpush2.msra.mxu0 0.0
    %2414 = vmatprep.subr.mxu0 0.0
    %2415 = vmatpush2.msra.mxu0 0.0
    %2416 = vmatprep.subr.mxu0 0.0
    %2417 = vmatpush2.msra.mxu0 0.0
    %2418 = vmatprep.subr.mxu0 0.0
    %2419 = vmatpush2.msra.mxu0 0.0
    %2420 = vmatprep.subr.mxu0 0.0
    %2421 = vmatpush2.msra.mxu0 0.0
    %2422 = vmatprep.subr.mxu0 0.0
    %2423 = vmatpush2.msra.mxu0 0.0
    %2424 = vmatprep.subr.mxu0 0.0
    %2425 = vmatpush2.msra.mxu0 0.0
    %2426 = vmatprep.subr.mxu0 0.0
    %2427 = vmatpush2.msra.mxu0 0.0
    %2428 = vmatprep.subr.mxu0 0.0
    %2429 = vmatpush2.msra.mxu0 0.0
    %2430 = vmatprep.subr.mxu0 0.0
    %2431 = vmatpush2.msra.mxu0 0.0
    %2432 = vmatprep.subr.mxu0 0.0
    %2433 = vmatpush2.msra.mxu0 0.0
    %2434 = vmatprep.subr.mxu0 0.0
    %2435 = vmatpush2.msra.mxu0 0.0
    %2436 = vmatprep.subr.mxu0 0.0
    %2437 = vmatpush2.msra.mxu0 0.0
    %2438 = vmatprep.subr.mxu0 0.0
    %2439 = vmatpush2.msra.mxu0 0.0
    %2440 = vmatprep.subr.mxu0 0.0
    %2441 = vmatpush2.msra.mxu0 0.0
    %2442 = vmatprep.mubr.f32.mxu0 0.0
    %2443 = vmatmul.mubr.f32.gmra.mxu0 %v2376
    %v2444 = vpop.f32.mrf.mxu0
    %v2445 = vadd.f32 0.0, %v2444
    %v2446 = vpop.f32.mrf.mxu0
    %2447 = vdwg.mxu0
    %2448 = vrot.lane.b32.xlu0 %v336, 112
    %v2449 = vpop.permute.xlu0 %2448
    %v2452 = vsel %vm722, %v2132, 0
    %2454 = vmatprep.subr.mxu0 0.0
    %2455 = vmatpush1.msra.mxu0 0.0
    %2456 = vmatprep.subr.mxu0 0.0
    %2457 = vmatpush1.msra.mxu0 0.0
    %2458 = vmatprep.subr.mxu0 0.0
    %2459 = vmatpush1.msra.mxu0 0.0
    %2460 = vmatprep.subr.mxu0 0.0
    %2461 = vmatpush1.msra.mxu0 0.0
    %2462 = vmatprep.subr.mxu0 0.0
    %2463 = vmatpush1.msra.mxu0 0.0
    %2464 = vmatprep.subr.mxu0 0.0
    %2465 = vmatpush1.msra.mxu0 0.0
    %2466 = vmatprep.subr.mxu0 0.0
    %2467 = vmatpush1.msra.mxu0 0.0
    %2468 = vmatprep.subr.mxu0 0.0
    %2469 = vmatpush1.msra.mxu0 0.0
    %2470 = vmatprep.subr.mxu0 0.0
    %2471 = vmatpush1.msra.mxu0 0.0
    %2472 = vmatprep.subr.mxu0 0.0
    %2473 = vmatpush1.msra.mxu0 0.0
    %2474 = vmatprep.subr.mxu0 0.0
    %2475 = vmatpush1.msra.mxu0 0.0
    %2476 = vmatprep.subr.mxu0 0.0
    %2477 = vmatpush1.msra.mxu0 0.0
    %2478 = vmatprep.subr.mxu0 0.0
    %2479 = vmatpush1.msra.mxu0 0.0
    %2480 = vmatprep.subr.mxu0 0.0
    %2481 = vmatpush1.msra.mxu0 0.0
    %2482 = vmatprep.subr.mxu0 0.0
    %2483 = vmatpush1.msra.mxu0 0.0
    %2484 = vmatprep.subr.mxu0 0.0
    %2485 = vmatpush1.msra.mxu0 %v2449
    %2486 = vmatprep.subr.mxu0 0.0
    %2487 = vmatpush2.msra.mxu0 0.0
    %2488 = vmatprep.subr.mxu0 0.0
    %2489 = vmatpush2.msra.mxu0 0.0
    %2490 = vmatprep.subr.mxu0 0.0
    %2491 = vmatpush2.msra.mxu0 0.0
    %2492 = vmatprep.subr.mxu0 0.0
    %2493 = vmatpush2.msra.mxu0 0.0
    %2494 = vmatprep.subr.mxu0 0.0
    %2495 = vmatpush2.msra.mxu0 0.0
    %2496 = vmatprep.subr.mxu0 0.0
    %2497 = vmatpush2.msra.mxu0 0.0
    %2498 = vmatprep.subr.mxu0 0.0
    %2499 = vmatpush2.msra.mxu0 0.0
    %2500 = vmatprep.subr.mxu0 0.0
    %2501 = vmatpush2.msra.mxu0 0.0
    %2502 = vmatprep.subr.mxu0 0.0
    %2503 = vmatpush2.msra.mxu0 0.0
    %2504 = vmatprep.subr.mxu0 0.0
    %2505 = vmatpush2.msra.mxu0 0.0
    %2506 = vmatprep.subr.mxu0 0.0
    %2507 = vmatpush2.msra.mxu0 0.0
    %2508 = vmatprep.subr.mxu0 0.0
    %2509 = vmatpush2.msra.mxu0 0.0
    %2510 = vmatprep.subr.mxu0 0.0
    %2511 = vmatpush2.msra.mxu0 0.0
    %2512 = vmatprep.subr.mxu0 0.0
    %2513 = vmatpush2.msra.mxu0 0.0
    %2514 = vmatprep.subr.mxu0 0.0
    %2515 = vmatpush2.msra.mxu0 0.0
    %2516 = vmatprep.subr.mxu0 0.0
    %2517 = vmatpush2.msra.mxu0 0.0
    %2518 = vmatprep.mubr.f32.mxu0 0.0
    %2519 = vmatmul.mubr.f32.gmra.mxu0 %v2452
    %v2520 = vpop.f32.mrf.mxu0
    %v2521 = vadd.f32 0.0, %v2520
    %v2522 = vpop.f32.mrf.mxu0
    %2523 = vdwg.mxu0
    %2524 = vrot.lane.b32.xlu0 %v341, 112
    %v2525 = vpop.permute.xlu0 %2524
    %v2528 = vsel %vm722, %v2133, 0
    %2530 = vmatprep.subr.mxu0 0.0
    %2531 = vmatpush1.msra.mxu0 0.0
    %2532 = vmatprep.subr.mxu0 0.0
    %2533 = vmatpush1.msra.mxu0 0.0
    %2534 = vmatprep.subr.mxu0 0.0
    %2535 = vmatpush1.msra.mxu0 0.0
    %2536 = vmatprep.subr.mxu0 0.0
    %2537 = vmatpush1.msra.mxu0 0.0
    %2538 = vmatprep.subr.mxu0 0.0
    %2539 = vmatpush1.msra.mxu0 0.0
    %2540 = vmatprep.subr.mxu0 0.0
    %2541 = vmatpush1.msra.mxu0 0.0
    %2542 = vmatprep.subr.mxu0 0.0
    %2543 = vmatpush1.msra.mxu0 0.0
    %2544 = vmatprep.subr.mxu0 0.0
    %2545 = vmatpush1.msra.mxu0 0.0
    %2546 = vmatprep.subr.mxu0 0.0
    %2547 = vmatpush1.msra.mxu0 0.0
    %2548 = vmatprep.subr.mxu0 0.0
    %2549 = vmatpush1.msra.mxu0 0.0
    %2550 = vmatprep.subr.mxu0 0.0
    %2551 = vmatpush1.msra.mxu0 0.0
    %2552 = vmatprep.subr.mxu0 0.0
    %2553 = vmatpush1.msra.mxu0 0.0
    %2554 = vmatprep.subr.mxu0 0.0
    %2555 = vmatpush1.msra.mxu0 0.0
    %2556 = vmatprep.subr.mxu0 0.0
    %2557 = vmatpush1.msra.mxu0 0.0
    %2558 = vmatprep.subr.mxu0 0.0
    %2559 = vmatpush1.msra.mxu0 0.0
    %2560 = vmatprep.subr.mxu0 0.0
    %2561 = vmatpush1.msra.mxu0 %v2525
    %2562 = vmatprep.subr.mxu0 0.0
    %2563 = vmatpush2.msra.mxu0 0.0
    %2564 = vmatprep.subr.mxu0 0.0
    %2565 = vmatpush2.msra.mxu0 0.0
    %2566 = vmatprep.subr.mxu0 0.0
    %2567 = vmatpush2.msra.mxu0 0.0
    %2568 = vmatprep.subr.mxu0 0.0
    %2569 = vmatpush2.msra.mxu0 0.0
    %2570 = vmatprep.subr.mxu0 0.0
    %2571 = vmatpush2.msra.mxu0 0.0
    %2572 = vmatprep.subr.mxu0 0.0
    %2573 = vmatpush2.msra.mxu0 0.0
    %2574 = vmatprep.subr.mxu0 0.0
    %2575 = vmatpush2.msra.mxu0 0.0
    %2576 = vmatprep.subr.mxu0 0.0
    %2577 = vmatpush2.msra.mxu0 0.0
    %2578 = vmatprep.subr.mxu0 0.0
    %2579 = vmatpush2.msra.mxu0 0.0
    %2580 = vmatprep.subr.mxu0 0.0
    %2581 = vmatpush2.msra.mxu0 0.0
    %2582 = vmatprep.subr.mxu0 0.0
    %2583 = vmatpush2.msra.mxu0 0.0
    %2584 = vmatprep.subr.mxu0 0.0
    %2585 = vmatpush2.msra.mxu0 0.0
    %2586 = vmatprep.subr.mxu0 0.0
    %2587 = vmatpush2.msra.mxu0 0.0
    %2588 = vmatprep.subr.mxu0 0.0
    %2589 = vmatpush2.msra.mxu0 0.0
    %2590 = vmatprep.subr.mxu0 0.0
    %2591 = vmatpush2.msra.mxu0 0.0
    %2592 = vmatprep.subr.mxu0 0.0
    %2593 = vmatpush2.msra.mxu0 0.0
    %2594 = vmatprep.mubr.f32.mxu0 0.0
    %2595 = vmatmul.mubr.f32.gmra.mxu0 %v2528
    %v2596 = vpop.f32.mrf.mxu0
    %v2597 = vadd.f32 0.0, %v2596
    %v2598 = vpop.f32.mrf.mxu0
    %2599 = vdwg.mxu0
    %2600 = vrot.lane.b32.xlu0 %v411, 112
    %v2601 = vpop.permute.xlu0 %2600
    %v2604 = vsel %vm722, %v2134, 0
    %2606 = vmatprep.subr.mxu0 0.0
    %2607 = vmatpush1.msra.mxu0 0.0
    %2608 = vmatprep.subr.mxu0 0.0
    %2609 = vmatpush1.msra.mxu0 0.0
    %2610 = vmatprep.subr.mxu0 0.0
    %2611 = vmatpush1.msra.mxu0 0.0
    %2612 = vmatprep.subr.mxu0 0.0
    %2613 = vmatpush1.msra.mxu0 0.0
    %2614 = vmatprep.subr.mxu0 0.0
    %2615 = vmatpush1.msra.mxu0 0.0
    %2616 = vmatprep.subr.mxu0 0.0
    %2617 = vmatpush1.msra.mxu0 0.0
    %2618 = vmatprep.subr.mxu0 0.0
    %2619 = vmatpush1.msra.mxu0 0.0
    %2620 = vmatprep.subr.mxu0 0.0
    %2621 = vmatpush1.msra.mxu0 0.0
    %2622 = vmatprep.subr.mxu0 0.0
    %2623 = vmatpush1.msra.mxu0 0.0
    %2624 = vmatprep.subr.mxu0 0.0
    %2625 = vmatpush1.msra.mxu0 0.0
    %2626 = vmatprep.subr.mxu0 0.0
    %2627 = vmatpush1.msra.mxu0 0.0
    %2628 = vmatprep.subr.mxu0 0.0
    %2629 = vmatpush1.msra.mxu0 0.0
    %2630 = vmatprep.subr.mxu0 0.0
    %2631 = vmatpush1.msra.mxu0 0.0
    %2632 = vmatprep.subr.mxu0 0.0
    %2633 = vmatpush1.msra.mxu0 0.0
    %2634 = vmatprep.subr.mxu0 0.0
    %2635 = vmatpush1.msra.mxu0 0.0
    %2636 = vmatprep.subr.mxu0 0.0
    %2637 = vmatpush1.msra.mxu0 %v2601
    %2638 = vmatprep.subr.mxu0 0.0
    %2639 = vmatpush2.msra.mxu0 0.0
    %2640 = vmatprep.subr.mxu0 0.0
    %2641 = vmatpush2.msra.mxu0 0.0
    %2642 = vmatprep.subr.mxu0 0.0
    %2643 = vmatpush2.msra.mxu0 0.0
    %2644 = vmatprep.subr.mxu0 0.0
    %2645 = vmatpush2.msra.mxu0 0.0
    %2646 = vmatprep.subr.mxu0 0.0
    %2647 = vmatpush2.msra.mxu0 0.0
    %2648 = vmatprep.subr.mxu0 0.0
    %2649 = vmatpush2.msra.mxu0 0.0
    %2650 = vmatprep.subr.mxu0 0.0
    %2651 = vmatpush2.msra.mxu0 0.0
    %2652 = vmatprep.subr.mxu0 0.0
    %2653 = vmatpush2.msra.mxu0 0.0
    %2654 = vmatprep.subr.mxu0 0.0
    %2655 = vmatpush2.msra.mxu0 0.0
    %2656 = vmatprep.subr.mxu0 0.0
    %2657 = vmatpush2.msra.mxu0 0.0
    %2658 = vmatprep.subr.mxu0 0.0
    %2659 = vmatpush2.msra.mxu0 0.0
    %2660 = vmatprep.subr.mxu0 0.0
    %2661 = vmatpush2.msra.mxu0 0.0
    %2662 = vmatprep.subr.mxu0 0.0
    %2663 = vmatpush2.msra.mxu0 0.0
    %2664 = vmatprep.subr.mxu0 0.0
    %2665 = vmatpush2.msra.mxu0 0.0
    %2666 = vmatprep.subr.mxu0 0.0
    %2667 = vmatpush2.msra.mxu0 0.0
    %2668 = vmatprep.subr.mxu0 0.0
    %2669 = vmatpush2.msra.mxu0 0.0
    %2670 = vmatprep.mubr.f32.mxu0 0.0
    %2671 = vmatmul.mubr.f32.gmra.mxu0 %v2604
    %v2672 = vpop.f32.mrf.mxu0
    %v2673 = vadd.f32 0.0, %v2672
    %v2674 = vpop.f32.mrf.mxu0
    %2675 = vdwg.mxu0
    %2676 = vrot.lane.b32.xlu0 %v416, 112
    %v2677 = vpop.permute.xlu0 %2676
    %v2680 = vsel %vm722, %v2135, 0
    %2682 = vmatprep.subr.mxu0 0.0
    %2683 = vmatpush1.msra.mxu0 0.0
    %2684 = vmatprep.subr.mxu0 0.0
    %2685 = vmatpush1.msra.mxu0 0.0
    %2686 = vmatprep.subr.mxu0 0.0
    %2687 = vmatpush1.msra.mxu0 0.0
    %2688 = vmatprep.subr.mxu0 0.0
    %2689 = vmatpush1.msra.mxu0 0.0
    %2690 = vmatprep.subr.mxu0 0.0
    %2691 = vmatpush1.msra.mxu0 0.0
    %2692 = vmatprep.subr.mxu0 0.0
    %2693 = vmatpush1.msra.mxu0 0.0
    %2694 = vmatprep.subr.mxu0 0.0
    %2695 = vmatpush1.msra.mxu0 0.0
    %2696 = vmatprep.subr.mxu0 0.0
    %2697 = vmatpush1.msra.mxu0 0.0
    %2698 = vmatprep.subr.mxu0 0.0
    %2699 = vmatpush1.msra.mxu0 0.0
    %2700 = vmatprep.subr.mxu0 0.0
    %2701 = vmatpush1.msra.mxu0 0.0
    %2702 = vmatprep.subr.mxu0 0.0
    %2703 = vmatpush1.msra.mxu0 0.0
    %2704 = vmatprep.subr.mxu0 0.0
    %2705 = vmatpush1.msra.mxu0 0.0
    %2706 = vmatprep.subr.mxu0 0.0
    %2707 = vmatpush1.msra.mxu0 0.0
    %2708 = vmatprep.subr.mxu0 0.0
    %2709 = vmatpush1.msra.mxu0 0.0
    %2710 = vmatprep.subr.mxu0 0.0
    %2711 = vmatpush1.msra.mxu0 0.0
    %2712 = vmatprep.subr.mxu0 0.0
    %2713 = vmatpush1.msra.mxu0 %v2677
    %2714 = vmatprep.subr.mxu0 0.0
    %2715 = vmatpush2.msra.mxu0 0.0
    %2716 = vmatprep.subr.mxu0 0.0
    %2717 = vmatpush2.msra.mxu0 0.0
    %2718 = vmatprep.subr.mxu0 0.0
    %2719 = vmatpush2.msra.mxu0 0.0
    %2720 = vmatprep.subr.mxu0 0.0
    %2721 = vmatpush2.msra.mxu0 0.0
    %2722 = vmatprep.subr.mxu0 0.0
    %2723 = vmatpush2.msra.mxu0 0.0
    %2724 = vmatprep.subr.mxu0 0.0
    %2725 = vmatpush2.msra.mxu0 0.0
    %2726 = vmatprep.subr.mxu0 0.0
    %2727 = vmatpush2.msra.mxu0 0.0
    %2728 = vmatprep.subr.mxu0 0.0
    %2729 = vmatpush2.msra.mxu0 0.0
    %2730 = vmatprep.subr.mxu0 0.0
    %2731 = vmatpush2.msra.mxu0 0.0
    %2732 = vmatprep.subr.mxu0 0.0
    %2733 = vmatpush2.msra.mxu0 0.0
    %2734 = vmatprep.subr.mxu0 0.0
    %2735 = vmatpush2.msra.mxu0 0.0
    %2736 = vmatprep.subr.mxu0 0.0
    %2737 = vmatpush2.msra.mxu0 0.0
    %2738 = vmatprep.subr.mxu0 0.0
    %2739 = vmatpush2.msra.mxu0 0.0
    %2740 = vmatprep.subr.mxu0 0.0
    %2741 = vmatpush2.msra.mxu0 0.0
    %2742 = vmatprep.subr.mxu0 0.0
    %2743 = vmatpush2.msra.mxu0 0.0
    %2744 = vmatprep.subr.mxu0 0.0
    %2745 = vmatpush2.msra.mxu0 0.0
    %2746 = vmatprep.mubr.f32.mxu0 0.0
    %2747 = vmatmul.mubr.f32.gmra.mxu0 %v2680
    %v2748 = vpop.f32.mrf.mxu0
    %v2749 = vadd.f32 0.0, %v2748
    %v2750 = vpop.f32.mrf.mxu0
    %2751 = vdwg.mxu0
    %2752 = vrot.lane.b32.xlu0 %v486, 112
    %v2753 = vpop.permute.xlu0 %2752
    %v2756 = vsel %vm722, %v2136, 0
    %2758 = vmatprep.subr.mxu0 0.0
    %2759 = vmatpush1.msra.mxu0 0.0
    %2760 = vmatprep.subr.mxu0 0.0
    %2761 = vmatpush1.msra.mxu0 0.0
    %2762 = vmatprep.subr.mxu0 0.0
    %2763 = vmatpush1.msra.mxu0 0.0
    %2764 = vmatprep.subr.mxu0 0.0
    %2765 = vmatpush1.msra.mxu0 0.0
    %2766 = vmatprep.subr.mxu0 0.0
    %2767 = vmatpush1.msra.mxu0 0.0
    %2768 = vmatprep.subr.mxu0 0.0
    %2769 = vmatpush1.msra.mxu0 0.0
    %2770 = vmatprep.subr.mxu0 0.0
    %2771 = vmatpush1.msra.mxu0 0.0
    %2772 = vmatprep.subr.mxu0 0.0
    %2773 = vmatpush1.msra.mxu0 0.0
    %2774 = vmatprep.subr.mxu0 0.0
    %2775 = vmatpush1.msra.mxu0 0.0
    %2776 = vmatprep.subr.mxu0 0.0
    %2777 = vmatpush1.msra.mxu0 0.0
    %2778 = vmatprep.subr.mxu0 0.0
    %2779 = vmatpush1.msra.mxu0 0.0
    %2780 = vmatprep.subr.mxu0 0.0
    %2781 = vmatpush1.msra.mxu0 0.0
    %2782 = vmatprep.subr.mxu0 0.0
    %2783 = vmatpush1.msra.mxu0 0.0
    %2784 = vmatprep.subr.mxu0 0.0
    %2785 = vmatpush1.msra.mxu0 0.0
    %2786 = vmatprep.subr.mxu0 0.0
    %2787 = vmatpush1.msra.mxu0 0.0
    %2788 = vmatprep.subr.mxu0 0.0
    %2789 = vmatpush1.msra.mxu0 %v2753
    %2790 = vmatprep.subr.mxu0 0.0
    %2791 = vmatpush2.msra.mxu0 0.0
    %2792 = vmatprep.subr.mxu0 0.0
    %2793 = vmatpush2.msra.mxu0 0.0
    %2794 = vmatprep.subr.mxu0 0.0
    %2795 = vmatpush2.msra.mxu0 0.0
    %2796 = vmatprep.subr.mxu0 0.0
    %2797 = vmatpush2.msra.mxu0 0.0
    %2798 = vmatprep.subr.mxu0 0.0
    %2799 = vmatpush2.msra.mxu0 0.0
    %2800 = vmatprep.subr.mxu0 0.0
    %2801 = vmatpush2.msra.mxu0 0.0
    %2802 = vmatprep.subr.mxu0 0.0
    %2803 = vmatpush2.msra.mxu0 0.0
    %2804 = vmatprep.subr.mxu0 0.0
    %2805 = vmatpush2.msra.mxu0 0.0
    %2806 = vmatprep.subr.mxu0 0.0
    %2807 = vmatpush2.msra.mxu0 0.0
    %2808 = vmatprep.subr.mxu0 0.0
    %2809 = vmatpush2.msra.mxu0 0.0
    %2810 = vmatprep.subr.mxu0 0.0
    %2811 = vmatpush2.msra.mxu0 0.0
    %2812 = vmatprep.subr.mxu0 0.0
    %2813 = vmatpush2.msra.mxu0 0.0
    %2814 = vmatprep.subr.mxu0 0.0
    %2815 = vmatpush2.msra.mxu0 0.0
    %2816 = vmatprep.subr.mxu0 0.0
    %2817 = vmatpush2.msra.mxu0 0.0
    %2818 = vmatprep.subr.mxu0 0.0
    %2819 = vmatpush2.msra.mxu0 0.0
    %2820 = vmatprep.subr.mxu0 0.0
    %2821 = vmatpush2.msra.mxu0 0.0
    %2822 = vmatprep.mubr.f32.mxu0 0.0
    %2823 = vmatmul.mubr.f32.gmra.mxu0 %v2756
    %v2824 = vpop.f32.mrf.mxu0
    %v2825 = vadd.f32 0.0, %v2824
    %v2826 = vpop.f32.mrf.mxu0
    %2827 = vdwg.mxu0
    %2828 = vrot.lane.b32.xlu0 %v491, 112
    %v2829 = vpop.permute.xlu0 %2828
    %v2832 = vsel %vm722, %v2137, 0
    %2834 = vmatprep.subr.mxu0 0.0
    %2835 = vmatpush1.msra.mxu0 0.0
    %2836 = vmatprep.subr.mxu0 0.0
    %2837 = vmatpush1.msra.mxu0 0.0
    %2838 = vmatprep.subr.mxu0 0.0
    %2839 = vmatpush1.msra.mxu0 0.0
    %2840 = vmatprep.subr.mxu0 0.0
    %2841 = vmatpush1.msra.mxu0 0.0
    %2842 = vmatprep.subr.mxu0 0.0
    %2843 = vmatpush1.msra.mxu0 0.0
    %2844 = vmatprep.subr.mxu0 0.0
    %2845 = vmatpush1.msra.mxu0 0.0
    %2846 = vmatprep.subr.mxu0 0.0
    %2847 = vmatpush1.msra.mxu0 0.0
    %2848 = vmatprep.subr.mxu0 0.0
    %2849 = vmatpush1.msra.mxu0 0.0
    %2850 = vmatprep.subr.mxu0 0.0
    %2851 = vmatpush1.msra.mxu0 0.0
    %2852 = vmatprep.subr.mxu0 0.0
    %2853 = vmatpush1.msra.mxu0 0.0
    %2854 = vmatprep.subr.mxu0 0.0
    %2855 = vmatpush1.msra.mxu0 0.0
    %2856 = vmatprep.subr.mxu0 0.0
    %2857 = vmatpush1.msra.mxu0 0.0
    %2858 = vmatprep.subr.mxu0 0.0
    %2859 = vmatpush1.msra.mxu0 0.0
    %2860 = vmatprep.subr.mxu0 0.0
    %2861 = vmatpush1.msra.mxu0 0.0
    %2862 = vmatprep.subr.mxu0 0.0
    %2863 = vmatpush1.msra.mxu0 0.0
    %2864 = vmatprep.subr.mxu0 0.0
    %2865 = vmatpush1.msra.mxu0 %v2829
    %2866 = vmatprep.subr.mxu0 0.0
    %2867 = vmatpush2.msra.mxu0 0.0
    %2868 = vmatprep.subr.mxu0 0.0
    %2869 = vmatpush2.msra.mxu0 0.0
    %2870 = vmatprep.subr.mxu0 0.0
    %2871 = vmatpush2.msra.mxu0 0.0
    %2872 = vmatprep.subr.mxu0 0.0
    %2873 = vmatpush2.msra.mxu0 0.0
    %2874 = vmatprep.subr.mxu0 0.0
    %2875 = vmatpush2.msra.mxu0 0.0
    %2876 = vmatprep.subr.mxu0 0.0
    %2877 = vmatpush2.msra.mxu0 0.0
    %2878 = vmatprep.subr.mxu0 0.0
    %2879 = vmatpush2.msra.mxu0 0.0
    %2880 = vmatprep.subr.mxu0 0.0
    %2881 = vmatpush2.msra.mxu0 0.0
    %2882 = vmatprep.subr.mxu0 0.0
    %2883 = vmatpush2.msra.mxu0 0.0
    %2884 = vmatprep.subr.mxu0 0.0
    %2885 = vmatpush2.msra.mxu0 0.0
    %2886 = vmatprep.subr.mxu0 0.0
    %2887 = vmatpush2.msra.mxu0 0.0
    %2888 = vmatprep.subr.mxu0 0.0
    %2889 = vmatpush2.msra.mxu0 0.0
    %2890 = vmatprep.subr.mxu0 0.0
    %2891 = vmatpush2.msra.mxu0 0.0
    %2892 = vmatprep.subr.mxu0 0.0
    %2893 = vmatpush2.msra.mxu0 0.0
    %2894 = vmatprep.subr.mxu0 0.0
    %2895 = vmatpush2.msra.mxu0 0.0
    %2896 = vmatprep.subr.mxu0 0.0
    %2897 = vmatpush2.msra.mxu0 0.0
    %2898 = vmatprep.mubr.f32.mxu0 0.0
    %2899 = vmatmul.mubr.f32.gmra.mxu0 %v2832
    %v2900 = vpop.f32.mrf.mxu0
    %v2901 = vadd.f32 0.0, %v2900
    %v2902 = vpop.f32.mrf.mxu0
    %2903 = vdwg.mxu0
    %2904 = vrot.lane.b32.xlu0 %v561, 112
    %v2905 = vpop.permute.xlu0 %2904
    %v2908 = vsel %vm722, %v2138, 0
    %2910 = vmatprep.subr.mxu0 0.0
    %2911 = vmatpush1.msra.mxu0 0.0
    %2912 = vmatprep.subr.mxu0 0.0
    %2913 = vmatpush1.msra.mxu0 0.0
    %2914 = vmatprep.subr.mxu0 0.0
    %2915 = vmatpush1.msra.mxu0 0.0
    %2916 = vmatprep.subr.mxu0 0.0
    %2917 = vmatpush1.msra.mxu0 0.0
    %2918 = vmatprep.subr.mxu0 0.0
    %2919 = vmatpush1.msra.mxu0 0.0
    %2920 = vmatprep.subr.mxu0 0.0
    %2921 = vmatpush1.msra.mxu0 0.0
    %2922 = vmatprep.subr.mxu0 0.0
    %2923 = vmatpush1.msra.mxu0 0.0
    %2924 = vmatprep.subr.mxu0 0.0
    %2925 = vmatpush1.msra.mxu0 0.0
    %2926 = vmatprep.subr.mxu0 0.0
    %2927 = vmatpush1.msra.mxu0 0.0
    %2928 = vmatprep.subr.mxu0 0.0
    %2929 = vmatpush1.msra.mxu0 0.0
    %2930 = vmatprep.subr.mxu0 0.0
    %2931 = vmatpush1.msra.mxu0 0.0
    %2932 = vmatprep.subr.mxu0 0.0
    %2933 = vmatpush1.msra.mxu0 0.0
    %2934 = vmatprep.subr.mxu0 0.0
    %2935 = vmatpush1.msra.mxu0 0.0
    %2936 = vmatprep.subr.mxu0 0.0
    %2937 = vmatpush1.msra.mxu0 0.0
    %2938 = vmatprep.subr.mxu0 0.0
    %2939 = vmatpush1.msra.mxu0 0.0
    %2940 = vmatprep.subr.mxu0 0.0
    %2941 = vmatpush1.msra.mxu0 %v2905
    %2942 = vmatprep.subr.mxu0 0.0
    %2943 = vmatpush2.msra.mxu0 0.0
    %2944 = vmatprep.subr.mxu0 0.0
    %2945 = vmatpush2.msra.mxu0 0.0
    %2946 = vmatprep.subr.mxu0 0.0
    %2947 = vmatpush2.msra.mxu0 0.0
    %2948 = vmatprep.subr.mxu0 0.0
    %2949 = vmatpush2.msra.mxu0 0.0
    %2950 = vmatprep.subr.mxu0 0.0
    %2951 = vmatpush2.msra.mxu0 0.0
    %2952 = vmatprep.subr.mxu0 0.0
    %2953 = vmatpush2.msra.mxu0 0.0
    %2954 = vmatprep.subr.mxu0 0.0
    %2955 = vmatpush2.msra.mxu0 0.0
    %2956 = vmatprep.subr.mxu0 0.0
    %2957 = vmatpush2.msra.mxu0 0.0
    %2958 = vmatprep.subr.mxu0 0.0
    %2959 = vmatpush2.msra.mxu0 0.0
    %2960 = vmatprep.subr.mxu0 0.0
    %2961 = vmatpush2.msra.mxu0 0.0
    %2962 = vmatprep.subr.mxu0 0.0
    %2963 = vmatpush2.msra.mxu0 0.0
    %2964 = vmatprep.subr.mxu0 0.0
    %2965 = vmatpush2.msra.mxu0 0.0
    %2966 = vmatprep.subr.mxu0 0.0
    %2967 = vmatpush2.msra.mxu0 0.0
    %2968 = vmatprep.subr.mxu0 0.0
    %2969 = vmatpush2.msra.mxu0 0.0
    %2970 = vmatprep.subr.mxu0 0.0
    %2971 = vmatpush2.msra.mxu0 0.0
    %2972 = vmatprep.subr.mxu0 0.0
    %2973 = vmatpush2.msra.mxu0 0.0
    %2974 = vmatprep.mubr.f32.mxu0 0.0
    %2975 = vmatmul.mubr.f32.gmra.mxu0 %v2908
    %v2976 = vpop.f32.mrf.mxu0
    %v2977 = vadd.f32 0.0, %v2976
    %v2978 = vpop.f32.mrf.mxu0
    %2979 = vdwg.mxu0
    %2980 = vrot.lane.b32.xlu0 %v566, 112
    %v2981 = vpop.permute.xlu0 %2980
    %v2984 = vsel %vm722, %v2139, 0
    %2986 = vmatprep.subr.mxu0 0.0
    %2987 = vmatpush1.msra.mxu0 0.0
    %2988 = vmatprep.subr.mxu0 0.0
    %2989 = vmatpush1.msra.mxu0 0.0
    %2990 = vmatprep.subr.mxu0 0.0
    %2991 = vmatpush1.msra.mxu0 0.0
    %2992 = vmatprep.subr.mxu0 0.0
    %2993 = vmatpush1.msra.mxu0 0.0
    %2994 = vmatprep.subr.mxu0 0.0
    %2995 = vmatpush1.msra.mxu0 0.0
    %2996 = vmatprep.subr.mxu0 0.0
    %2997 = vmatpush1.msra.mxu0 0.0
    %2998 = vmatprep.subr.mxu0 0.0
    %2999 = vmatpush1.msra.mxu0 0.0
    %3000 = vmatprep.subr.mxu0 0.0
    %3001 = vmatpush1.msra.mxu0 0.0
    %3002 = vmatprep.subr.mxu0 0.0
    %3003 = vmatpush1.msra.mxu0 0.0
    %3004 = vmatprep.subr.mxu0 0.0
    %3005 = vmatpush1.msra.mxu0 0.0
    %3006 = vmatprep.subr.mxu0 0.0
    %3007 = vmatpush1.msra.mxu0 0.0
    %3008 = vmatprep.subr.mxu0 0.0
    %3009 = vmatpush1.msra.mxu0 0.0
    %3010 = vmatprep.subr.mxu0 0.0
    %3011 = vmatpush1.msra.mxu0 0.0
    %3012 = vmatprep.subr.mxu0 0.0
    %3013 = vmatpush1.msra.mxu0 0.0
    %3014 = vmatprep.subr.mxu0 0.0
    %3015 = vmatpush1.msra.mxu0 0.0
    %3016 = vmatprep.subr.mxu0 0.0
    %3017 = vmatpush1.msra.mxu0 %v2981
    %3018 = vmatprep.subr.mxu0 0.0
    %3019 = vmatpush2.msra.mxu0 0.0
    %3020 = vmatprep.subr.mxu0 0.0
    %3021 = vmatpush2.msra.mxu0 0.0
    %3022 = vmatprep.subr.mxu0 0.0
    %3023 = vmatpush2.msra.mxu0 0.0
    %3024 = vmatprep.subr.mxu0 0.0
    %3025 = vmatpush2.msra.mxu0 0.0
    %3026 = vmatprep.subr.mxu0 0.0
    %3027 = vmatpush2.msra.mxu0 0.0
    %3028 = vmatprep.subr.mxu0 0.0
    %3029 = vmatpush2.msra.mxu0 0.0
    %3030 = vmatprep.subr.mxu0 0.0
    %3031 = vmatpush2.msra.mxu0 0.0
    %3032 = vmatprep.subr.mxu0 0.0
    %3033 = vmatpush2.msra.mxu0 0.0
    %3034 = vmatprep.subr.mxu0 0.0
    %3035 = vmatpush2.msra.mxu0 0.0
    %3036 = vmatprep.subr.mxu0 0.0
    %3037 = vmatpush2.msra.mxu0 0.0
    %3038 = vmatprep.subr.mxu0 0.0
    %3039 = vmatpush2.msra.mxu0 0.0
    %3040 = vmatprep.subr.mxu0 0.0
    %3041 = vmatpush2.msra.mxu0 0.0
    %3042 = vmatprep.subr.mxu0 0.0
    %3043 = vmatpush2.msra.mxu0 0.0
    %3044 = vmatprep.subr.mxu0 0.0
    %3045 = vmatpush2.msra.mxu0 0.0
    %3046 = vmatprep.subr.mxu0 0.0
    %3047 = vmatpush2.msra.mxu0 0.0
    %3048 = vmatprep.subr.mxu0 0.0
    %3049 = vmatpush2.msra.mxu0 0.0
    %3050 = vmatprep.mubr.f32.mxu0 0.0
    %3051 = vmatmul.mubr.f32.gmra.mxu0 %v2984
    %v3052 = vpop.f32.mrf.mxu0
    %v3053 = vadd.f32 0.0, %v3052
    %v3054 = vpop.f32.mrf.mxu0
    %3055 = vdwg.mxu0
    %3056 = vrot.lane.b32.xlu0 %v636, 112
    %v3057 = vpop.permute.xlu0 %3056
    %v3060 = vsel %vm722, %v2140, 0
    %3062 = vmatprep.subr.mxu0 0.0
    %3063 = vmatpush1.msra.mxu0 0.0
    %3064 = vmatprep.subr.mxu0 0.0
    %3065 = vmatpush1.msra.mxu0 0.0
    %3066 = vmatprep.subr.mxu0 0.0
    %3067 = vmatpush1.msra.mxu0 0.0
    %3068 = vmatprep.subr.mxu0 0.0
    %3069 = vmatpush1.msra.mxu0 0.0
    %3070 = vmatprep.subr.mxu0 0.0
    %3071 = vmatpush1.msra.mxu0 0.0
    %3072 = vmatprep.subr.mxu0 0.0
    %3073 = vmatpush1.msra.mxu0 0.0
    %3074 = vmatprep.subr.mxu0 0.0
    %3075 = vmatpush1.msra.mxu0 0.0
    %3076 = vmatprep.subr.mxu0 0.0
    %3077 = vmatpush1.msra.mxu0 0.0
    %3078 = vmatprep.subr.mxu0 0.0
    %3079 = vmatpush1.msra.mxu0 0.0
    %3080 = vmatprep.subr.mxu0 0.0
    %3081 = vmatpush1.msra.mxu0 0.0
    %3082 = vmatprep.subr.mxu0 0.0
    %3083 = vmatpush1.msra.mxu0 0.0
    %3084 = vmatprep.subr.mxu0 0.0
    %3085 = vmatpush1.msra.mxu0 0.0
    %3086 = vmatprep.subr.mxu0 0.0
    %3087 = vmatpush1.msra.mxu0 0.0
    %3088 = vmatprep.subr.mxu0 0.0
    %3089 = vmatpush1.msra.mxu0 0.0
    %3090 = vmatprep.subr.mxu0 0.0
    %3091 = vmatpush1.msra.mxu0 0.0
    %3092 = vmatprep.subr.mxu0 0.0
    %3093 = vmatpush1.msra.mxu0 %v3057
    %3094 = vmatprep.subr.mxu0 0.0
    %3095 = vmatpush2.msra.mxu0 0.0
    %3096 = vmatprep.subr.mxu0 0.0
    %3097 = vmatpush2.msra.mxu0 0.0
    %3098 = vmatprep.subr.mxu0 0.0
    %3099 = vmatpush2.msra.mxu0 0.0
    %3100 = vmatprep.subr.mxu0 0.0
    %3101 = vmatpush2.msra.mxu0 0.0
    %3102 = vmatprep.subr.mxu0 0.0
    %3103 = vmatpush2.msra.mxu0 0.0
    %3104 = vmatprep.subr.mxu0 0.0
    %3105 = vmatpush2.msra.mxu0 0.0
    %3106 = vmatprep.subr.mxu0 0.0
    %3107 = vmatpush2.msra.mxu0 0.0
    %3108 = vmatprep.subr.mxu0 0.0
    %3109 = vmatpush2.msra.mxu0 0.0
    %3110 = vmatprep.subr.mxu0 0.0
    %3111 = vmatpush2.msra.mxu0 0.0
    %3112 = vmatprep.subr.mxu0 0.0
    %3113 = vmatpush2.msra.mxu0 0.0
    %3114 = vmatprep.subr.mxu0 0.0
    %3115 = vmatpush2.msra.mxu0 0.0
    %3116 = vmatprep.subr.mxu0 0.0
    %3117 = vmatpush2.msra.mxu0 0.0
    %3118 = vmatprep.subr.mxu0 0.0
    %3119 = vmatpush2.msra.mxu0 0.0
    %3120 = vmatprep.subr.mxu0 0.0
    %3121 = vmatpush2.msra.mxu0 0.0
    %3122 = vmatprep.subr.mxu0 0.0
    %3123 = vmatpush2.msra.mxu0 0.0
    %3124 = vmatprep.subr.mxu0 0.0
    %3125 = vmatpush2.msra.mxu0 0.0
    %3126 = vmatprep.mubr.f32.mxu0 0.0
    %3127 = vmatmul.mubr.f32.gmra.mxu0 %v3060
    %v3128 = vpop.f32.mrf.mxu0
    %v3129 = vadd.f32 0.0, %v3128
    %v3130 = vpop.f32.mrf.mxu0
    %3131 = vdwg.mxu0
    %3132 = vrot.lane.b32.xlu0 %v641, 112
    %v3133 = vpop.permute.xlu0 %3132
    %v3136 = vsel %vm722, %v2141, 0
    %3138 = vmatprep.subr.mxu0 0.0
    %3139 = vmatpush1.msra.mxu0 0.0
    %3140 = vmatprep.subr.mxu0 0.0
    %3141 = vmatpush1.msra.mxu0 0.0
    %3142 = vmatprep.subr.mxu0 0.0
    %3143 = vmatpush1.msra.mxu0 0.0
    %3144 = vmatprep.subr.mxu0 0.0
    %3145 = vmatpush1.msra.mxu0 0.0
    %3146 = vmatprep.subr.mxu0 0.0
    %3147 = vmatpush1.msra.mxu0 0.0
    %3148 = vmatprep.subr.mxu0 0.0
    %3149 = vmatpush1.msra.mxu0 0.0
    %3150 = vmatprep.subr.mxu0 0.0
    %3151 = vmatpush1.msra.mxu0 0.0
    %3152 = vmatprep.subr.mxu0 0.0
    %3153 = vmatpush1.msra.mxu0 0.0
    %3154 = vmatprep.subr.mxu0 0.0
    %3155 = vmatpush1.msra.mxu0 0.0
    %3156 = vmatprep.subr.mxu0 0.0
    %3157 = vmatpush1.msra.mxu0 0.0
    %3158 = vmatprep.subr.mxu0 0.0
    %3159 = vmatpush1.msra.mxu0 0.0
    %3160 = vmatprep.subr.mxu0 0.0
    %3161 = vmatpush1.msra.mxu0 0.0
    %3162 = vmatprep.subr.mxu0 0.0
    %3163 = vmatpush1.msra.mxu0 0.0
    %3164 = vmatprep.subr.mxu0 0.0
    %3165 = vmatpush1.msra.mxu0 0.0
    %3166 = vmatprep.subr.mxu0 0.0
    %3167 = vmatpush1.msra.mxu0 0.0
    %3168 = vmatprep.subr.mxu0 0.0
    %3169 = vmatpush1.msra.mxu0 %v3133
    %3170 = vmatprep.subr.mxu0 0.0
    %3171 = vmatpush2.msra.mxu0 0.0
    %3172 = vmatprep.subr.mxu0 0.0
    %3173 = vmatpush2.msra.mxu0 0.0
    %3174 = vmatprep.subr.mxu0 0.0
    %3175 = vmatpush2.msra.mxu0 0.0
    %3176 = vmatprep.subr.mxu0 0.0
    %3177 = vmatpush2.msra.mxu0 0.0
    %3178 = vmatprep.subr.mxu0 0.0
    %3179 = vmatpush2.msra.mxu0 0.0
    %3180 = vmatprep.subr.mxu0 0.0
    %3181 = vmatpush2.msra.mxu0 0.0
    %3182 = vmatprep.subr.mxu0 0.0
    %3183 = vmatpush2.msra.mxu0 0.0
    %3184 = vmatprep.subr.mxu0 0.0
    %3185 = vmatpush2.msra.mxu0 0.0
    %3186 = vmatprep.subr.mxu0 0.0
    %3187 = vmatpush2.msra.mxu0 0.0
    %3188 = vmatprep.subr.mxu0 0.0
    %3189 = vmatpush2.msra.mxu0 0.0
    %3190 = vmatprep.subr.mxu0 0.0
    %3191 = vmatpush2.msra.mxu0 0.0
    %3192 = vmatprep.subr.mxu0 0.0
    %3193 = vmatpush2.msra.mxu0 0.0
    %3194 = vmatprep.subr.mxu0 0.0
    %3195 = vmatpush2.msra.mxu0 0.0
    %3196 = vmatprep.subr.mxu0 0.0
    %3197 = vmatpush2.msra.mxu0 0.0
    %3198 = vmatprep.subr.mxu0 0.0
    %3199 = vmatpush2.msra.mxu0 0.0
    %3200 = vmatprep.subr.mxu0 0.0
    %3201 = vmatpush2.msra.mxu0 0.0
    %3202 = vmatprep.mubr.f32.mxu0 0.0
    %3203 = vmatmul.mubr.f32.gmra.mxu0 %v3136
    %v3204 = vpop.f32.mrf.mxu0
    %v3205 = vadd.f32 0.0, %v3204
    %v3206 = vpop.f32.mrf.mxu0
    %3207 = vdwg.mxu0
    %3208 = vrot.lane.b32.xlu0 %v711, 112
    %v3209 = vpop.permute.xlu0 %3208
    %v3212 = vsel %vm722, %v2142, 0
    %3214 = vmatprep.subr.mxu0 0.0
    %3215 = vmatpush1.msra.mxu0 0.0
    %3216 = vmatprep.subr.mxu0 0.0
    %3217 = vmatpush1.msra.mxu0 0.0
    %3218 = vmatprep.subr.mxu0 0.0
    %3219 = vmatpush1.msra.mxu0 0.0
    %3220 = vmatprep.subr.mxu0 0.0
    %3221 = vmatpush1.msra.mxu0 0.0
    %3222 = vmatprep.subr.mxu0 0.0
    %3223 = vmatpush1.msra.mxu0 0.0
    %3224 = vmatprep.subr.mxu0 0.0
    %3225 = vmatpush1.msra.mxu0 0.0
    %3226 = vmatprep.subr.mxu0 0.0
    %3227 = vmatpush1.msra.mxu0 0.0
    %3228 = vmatprep.subr.mxu0 0.0
    %3229 = vmatpush1.msra.mxu0 0.0
    %3230 = vmatprep.subr.mxu0 0.0
    %3231 = vmatpush1.msra.mxu0 0.0
    %3232 = vmatprep.subr.mxu0 0.0
    %3233 = vmatpush1.msra.mxu0 0.0
    %3234 = vmatprep.subr.mxu0 0.0
    %3235 = vmatpush1.msra.mxu0 0.0
    %3236 = vmatprep.subr.mxu0 0.0
    %3237 = vmatpush1.msra.mxu0 0.0
    %3238 = vmatprep.subr.mxu0 0.0
    %3239 = vmatpush1.msra.mxu0 0.0
    %3240 = vmatprep.subr.mxu0 0.0
    %3241 = vmatpush1.msra.mxu0 0.0
    %3242 = vmatprep.subr.mxu0 0.0
    %3243 = vmatpush1.msra.mxu0 0.0
    %3244 = vmatprep.subr.mxu0 0.0
    %3245 = vmatpush1.msra.mxu0 %v3209
    %3246 = vmatprep.subr.mxu0 0.0
    %3247 = vmatpush2.msra.mxu0 0.0
    %3248 = vmatprep.subr.mxu0 0.0
    %3249 = vmatpush2.msra.mxu0 0.0
    %3250 = vmatprep.subr.mxu0 0.0
    %3251 = vmatpush2.msra.mxu0 0.0
    %3252 = vmatprep.subr.mxu0 0.0
    %3253 = vmatpush2.msra.mxu0 0.0
    %3254 = vmatprep.subr.mxu0 0.0
    %3255 = vmatpush2.msra.mxu0 0.0
    %3256 = vmatprep.subr.mxu0 0.0
    %3257 = vmatpush2.msra.mxu0 0.0
    %3258 = vmatprep.subr.mxu0 0.0
    %3259 = vmatpush2.msra.mxu0 0.0
    %3260 = vmatprep.subr.mxu0 0.0
    %3261 = vmatpush2.msra.mxu0 0.0
    %3262 = vmatprep.subr.mxu0 0.0
    %3263 = vmatpush2.msra.mxu0 0.0
    %3264 = vmatprep.subr.mxu0 0.0
    %3265 = vmatpush2.msra.mxu0 0.0
    %3266 = vmatprep.subr.mxu0 0.0
    %3267 = vmatpush2.msra.mxu0 0.0
    %3268 = vmatprep.subr.mxu0 0.0
    %3269 = vmatpush2.msra.mxu0 0.0
    %3270 = vmatprep.subr.mxu0 0.0
    %3271 = vmatpush2.msra.mxu0 0.0
    %3272 = vmatprep.subr.mxu0 0.0
    %3273 = vmatpush2.msra.mxu0 0.0
    %3274 = vmatprep.subr.mxu0 0.0
    %3275 = vmatpush2.msra.mxu0 0.0
    %3276 = vmatprep.subr.mxu0 0.0
    %3277 = vmatpush2.msra.mxu0 0.0
    %3278 = vmatprep.mubr.f32.mxu0 0.0
    %3279 = vmatmul.mubr.f32.gmra.mxu0 %v3212
    %v3280 = vpop.f32.mrf.mxu0
    %v3281 = vadd.f32 0.0, %v3280
    %v3282 = vpop.f32.mrf.mxu0
    %3283 = vdwg.mxu0
    %3284 = vrot.lane.b32.xlu0 %v716, 112
    %v3285 = vpop.permute.xlu0 %3284
    %v3288 = vsel %vm722, %v2143, 0
    %3290 = vmatprep.subr.mxu0 0.0
    %3291 = vmatpush1.msra.mxu0 0.0
    %3292 = vmatprep.subr.mxu0 0.0
    %3293 = vmatpush1.msra.mxu0 0.0
    %3294 = vmatprep.subr.mxu0 0.0
    %3295 = vmatpush1.msra.mxu0 0.0
    %3296 = vmatprep.subr.mxu0 0.0
    %3297 = vmatpush1.msra.mxu0 0.0
    %3298 = vmatprep.subr.mxu0 0.0
    %3299 = vmatpush1.msra.mxu0 0.0
    %3300 = vmatprep.subr.mxu0 0.0
    %3301 = vmatpush1.msra.mxu0 0.0
    %3302 = vmatprep.subr.mxu0 0.0
    %3303 = vmatpush1.msra.mxu0 0.0
    %3304 = vmatprep.subr.mxu0 0.0
    %3305 = vmatpush1.msra.mxu0 0.0
    %3306 = vmatprep.subr.mxu0 0.0
    %3307 = vmatpush1.msra.mxu0 0.0
    %3308 = vmatprep.subr.mxu0 0.0
    %3309 = vmatpush1.msra.mxu0 0.0
    %3310 = vmatprep.subr.mxu0 0.0
    %3311 = vmatpush1.msra.mxu0 0.0
    %3312 = vmatprep.subr.mxu0 0.0
    %3313 = vmatpush1.msra.mxu0 0.0
    %3314 = vmatprep.subr.mxu0 0.0
    %3315 = vmatpush1.msra.mxu0 0.0
    %3316 = vmatprep.subr.mxu0 0.0
    %3317 = vmatpush1.msra.mxu0 0.0
    %3318 = vmatprep.subr.mxu0 0.0
    %3319 = vmatpush1.msra.mxu0 0.0
    %3320 = vmatprep.subr.mxu0 0.0
    %3321 = vmatpush1.msra.mxu0 %v3285
    %3322 = vmatprep.subr.mxu0 0.0
    %3323 = vmatpush2.msra.mxu0 0.0
    %3324 = vmatprep.subr.mxu0 0.0
    %3325 = vmatpush2.msra.mxu0 0.0
    %3326 = vmatprep.subr.mxu0 0.0
    %3327 = vmatpush2.msra.mxu0 0.0
    %3328 = vmatprep.subr.mxu0 0.0
    %3329 = vmatpush2.msra.mxu0 0.0
    %3330 = vmatprep.subr.mxu0 0.0
    %3331 = vmatpush2.msra.mxu0 0.0
    %3332 = vmatprep.subr.mxu0 0.0
    %3333 = vmatpush2.msra.mxu0 0.0
    %3334 = vmatprep.subr.mxu0 0.0
    %3335 = vmatpush2.msra.mxu0 0.0
    %3336 = vmatprep.subr.mxu0 0.0
    %3337 = vmatpush2.msra.mxu0 0.0
    %3338 = vmatprep.subr.mxu0 0.0
    %3339 = vmatpush2.msra.mxu0 0.0
    %3340 = vmatprep.subr.mxu0 0.0
    %3341 = vmatpush2.msra.mxu0 0.0
    %3342 = vmatprep.subr.mxu0 0.0
    %3343 = vmatpush2.msra.mxu0 0.0
    %3344 = vmatprep.subr.mxu0 0.0
    %3345 = vmatpush2.msra.mxu0 0.0
    %3346 = vmatprep.subr.mxu0 0.0
    %3347 = vmatpush2.msra.mxu0 0.0
    %3348 = vmatprep.subr.mxu0 0.0
    %3349 = vmatpush2.msra.mxu0 0.0
    %3350 = vmatprep.subr.mxu0 0.0
    %3351 = vmatpush2.msra.mxu0 0.0
    %3352 = vmatprep.subr.mxu0 0.0
    %3353 = vmatpush2.msra.mxu0 0.0
    %3354 = vmatprep.mubr.f32.mxu0 0.0
    %3355 = vmatmul.mubr.f32.gmra.mxu0 %v3288
    %v3356 = vpop.f32.mrf.mxu0
    %v3357 = vadd.f32 0.0, %v3356
    %v3358 = vpop.f32.mrf.mxu0
    %3359 = vdwg.mxu0
    %vm3360 = vcmask 392192
    %v3361 = vsel %vm3360, %v2217, 0.0
    %v3362 = vsel %vm3360, %v2369, 0.0
    %v3363 = vadd.f32 %v3361, %v3362
    %v3364 = vsel %vm3360, %v2521, 0.0
    %v3365 = vadd.f32 %v3363, %v3364
    %v3366 = vsel %vm3360, %v2673, 0.0
    %v3367 = vadd.f32 %v3365, %v3366
    %v3368 = vsel %vm3360, %v2825, 0.0
    %v3369 = vadd.f32 %v3367, %v3368
    %v3370 = vsel %vm3360, %v2977, 0.0
    %v3371 = vadd.f32 %v3369, %v3370
    %v3372 = vsel %vm3360, %v3129, 0.0
    %v3373 = vadd.f32 %v3371, %v3372
    %v3374 = vsel %vm3360, %v3281, 0.0
    %v3375 = vadd.f32 %v3373, %v3374
    %v3376 = vsel %vm3360, %v2293, 0.0
    %v3377 = vsel %vm3360, %v2445, 0.0
    %v3378 = vadd.f32 %v3376, %v3377
    %v3379 = vsel %vm3360, %v2597, 0.0
    %v3380 = vadd.f32 %v3378, %v3379
    %v3381 = vsel %vm3360, %v2749, 0.0
    %v3382 = vadd.f32 %v3380, %v3381
    %v3383 = vsel %vm3360, %v2901, 0.0
    %v3384 = vadd.f32 %v3382, %v3383
    %v3385 = vsel %vm3360, %v3053, 0.0
    %v3386 = vadd.f32 %v3384, %v3385
    %v3387 = vsel %vm3360, %v3205, 0.0
    %v3388 = vadd.f32 %v3386, %v3387
    %v3389 = vsel %vm3360, %v3357, 0.0
    %v3390 = vadd.f32 %v3388, %v3389
    %3391 = vmatprep.subr.mxu0 0.0
    %3392 = vmatpush1.msra.mxu0 0.0
    %3393 = vmatprep.subr.mxu0 0.0
    %3394 = vmatpush1.msra.mxu0 0.0
    %3395 = vmatprep.subr.mxu0 0.0
    %3396 = vmatpush1.msra.mxu0 0.0
    %3397 = vmatprep.subr.mxu0 0.0
    %3398 = vmatpush1.msra.mxu0 0.0
    %3399 = vmatprep.subr.mxu0 0.0
    %3400 = vmatpush1.msra.mxu0 0.0
    %3401 = vmatprep.subr.mxu0 0.0
    %3402 = vmatpush1.msra.mxu0 0.0
    %3403 = vmatprep.subr.mxu0 0.0
    %3404 = vmatpush1.msra.mxu0 0.0
    %3405 = vmatprep.subr.mxu0 0.0
    %3406 = vmatpush1.msra.mxu0 0.0
    %3407 = vmatprep.subr.mxu0 0.0
    %3408 = vmatpush1.msra.mxu0 0.0
    %3409 = vmatprep.subr.mxu0 0.0
    %3410 = vmatpush1.msra.mxu0 %v104
    %3411 = vmatprep.subr.mxu0 0.0
    %3412 = vmatpush1.msra.mxu0 %v103
    %3413 = vmatprep.subr.mxu0 0.0
    %3414 = vmatpush1.msra.mxu0 %v102
    %3415 = vmatprep.subr.mxu0 0.0
    %3416 = vmatpush1.msra.mxu0 %v101
    %3417 = vmatprep.subr.mxu0 0.0
    %3418 = vmatpush1.msra.mxu0 %v100
    %3419 = vmatprep.subr.mxu0 0.0
    %3420 = vmatpush1.msra.mxu0 %v99
    %3421 = vmatprep.subr.mxu0 0.0
    %3422 = vmatpush1.msra.mxu0 %v98
    %3423 = vmatprep.subr.mxu0 0.0
    %3424 = vmatpush2.msra.mxu0 0.0
    %3425 = vmatprep.subr.mxu0 0.0
    %3426 = vmatpush2.msra.mxu0 0.0
    %3427 = vmatprep.subr.mxu0 0.0
    %3428 = vmatpush2.msra.mxu0 0.0
    %3429 = vmatprep.subr.mxu0 0.0
    %3430 = vmatpush2.msra.mxu0 0.0
    %3431 = vmatprep.subr.mxu0 0.0
    %3432 = vmatpush2.msra.mxu0 0.0
    %3433 = vmatprep.subr.mxu0 0.0
    %3434 = vmatpush2.msra.mxu0 0.0
    %3435 = vmatprep.subr.mxu0 0.0
    %3436 = vmatpush2.msra.mxu0 0.0
    %3437 = vmatprep.subr.mxu0 0.0
    %3438 = vmatpush2.msra.mxu0 0.0
    %3439 = vmatprep.subr.mxu0 0.0
    %3440 = vmatpush2.msra.mxu0 0.0
    %3441 = vmatprep.subr.mxu0 0.0
    %3442 = vmatpush2.msra.mxu0 0.0
    %3443 = vmatprep.subr.mxu0 0.0
    %3444 = vmatpush2.msra.mxu0 0.0
    %3445 = vmatprep.subr.mxu0 0.0
    %3446 = vmatpush2.msra.mxu0 0.0
    %3447 = vmatprep.subr.mxu0 0.0
    %3448 = vmatpush2.msra.mxu0 0.0
    %3449 = vmatprep.subr.mxu0 0.0
    %3450 = vmatpush2.msra.mxu0 0.0
    %3451 = vmatprep.subr.mxu0 0.0
    %3452 = vmatpush2.msra.mxu0 0.0
    %3453 = vmatprep.subr.mxu0 0.0
    %3454 = vmatpush2.msra.mxu0 0.0
    %3455 = vmatprep.mubr.f32.mxu0 0.0
    %3456 = vmatmul.mubr.f32.gmra.mxu0 %v114
    %v3457 = vpop.f32.mrf.mxu0
    %v3458 = vadd.f32 0.0, %v3457
    %v3459 = vpop.f32.mrf.mxu0
    %3460 = vmatprep.mubr.f32.mxu0 0.0
    %3461 = vmatmul.mubr.f32.gmra.mxu0 %v117
    %v3462 = vpop.f32.mrf.mxu0
    %v3463 = vadd.f32 0.0, %v3462
    %v3464 = vpop.f32.mrf.mxu0
    %3465 = vdwg.mxu0
    %v3466 = vadd.f32 %v3375, %v3458
    %v3467 = vadd.f32 %v3390, %v3463
    %v3468 = vmax.f32 %v3466, 0.0
    %v3469 = vmax.f32 %v3467, 0.0
    %v3470 = vlaneseq
    %v3471 = vshrl.u32 %v3470, 7
    %v3472 = vsub.s32 0, %v3471
    %v3473 = vrot.slane %v111, %v3472
    %v3475 = vsel %vm3360, %v3468, 0
    %v3478 = vsel %vm3360, %v3469, 0
    %3480 = vmatprep.subr.mxu0 0.0
    %3481 = vmatpush1.msra.mxu0 0.0
    %3482 = vmatprep.subr.mxu0 0.0
    %3483 = vmatpush1.msra.mxu0 0.0
    %3484 = vmatprep.subr.mxu0 0.0
    %3485 = vmatpush1.msra.mxu0 0.0
    %3486 = vmatprep.subr.mxu0 0.0
    %3487 = vmatpush1.msra.mxu0 0.0
    %3488 = vmatprep.subr.mxu0 0.0
    %3489 = vmatpush1.msra.mxu0 0.0
    %3490 = vmatprep.subr.mxu0 0.0
    %3491 = vmatpush1.msra.mxu0 0.0
    %3492 = vmatprep.subr.mxu0 0.0
    %3493 = vmatpush1.msra.mxu0 0.0
    %3494 = vmatprep.subr.mxu0 0.0
    %3495 = vmatpush1.msra.mxu0 0.0
    %3496 = vmatprep.subr.mxu0 0.0
    %3497 = vmatpush1.msra.mxu0 0.0
    %3498 = vmatprep.subr.mxu0 0.0
    %3499 = vmatpush1.msra.mxu0 0.0
    %3500 = vmatprep.subr.mxu0 0.0
    %3501 = vmatpush1.msra.mxu0 %v110
    %3502 = vmatprep.subr.mxu0 0.0
    %3503 = vmatpush1.msra.mxu0 %v109
    %3504 = vmatprep.subr.mxu0 0.0
    %3505 = vmatpush1.msra.mxu0 %v108
    %3506 = vmatprep.subr.mxu0 0.0
    %3507 = vmatpush1.msra.mxu0 %v107
    %3508 = vmatprep.subr.mxu0 0.0
    %3509 = vmatpush1.msra.mxu0 %v106
    %3510 = vmatprep.subr.mxu0 0.0
    %3511 = vmatpush1.msra.mxu0 %v105
    %3512 = vmatprep.subr.mxu0 0.0
    %3513 = vmatpush2.msra.mxu0 0.0
    %3514 = vmatprep.subr.mxu0 0.0
    %3515 = vmatpush2.msra.mxu0 0.0
    %3516 = vmatprep.subr.mxu0 0.0
    %3517 = vmatpush2.msra.mxu0 0.0
    %3518 = vmatprep.subr.mxu0 0.0
    %3519 = vmatpush2.msra.mxu0 0.0
    %3520 = vmatprep.subr.mxu0 0.0
    %3521 = vmatpush2.msra.mxu0 0.0
    %3522 = vmatprep.subr.mxu0 0.0
    %3523 = vmatpush2.msra.mxu0 0.0
    %3524 = vmatprep.subr.mxu0 0.0
    %3525 = vmatpush2.msra.mxu0 0.0
    %3526 = vmatprep.subr.mxu0 0.0
    %3527 = vmatpush2.msra.mxu0 0.0
    %3528 = vmatprep.subr.mxu0 0.0
    %3529 = vmatpush2.msra.mxu0 0.0
    %3530 = vmatprep.subr.mxu0 0.0
    %3531 = vmatpush2.msra.mxu0 0.0
    %3532 = vmatprep.subr.mxu0 0.0
    %3533 = vmatpush2.msra.mxu0 0.0
    %3534 = vmatprep.subr.mxu0 0.0
    %3535 = vmatpush2.msra.mxu0 0.0
    %3536 = vmatprep.subr.mxu0 0.0
    %3537 = vmatpush2.msra.mxu0 0.0
    %3538 = vmatprep.subr.mxu0 0.0
    %3539 = vmatpush2.msra.mxu0 0.0
    %3540 = vmatprep.subr.mxu0 0.0
    %3541 = vmatpush2.msra.mxu0 0.0
    %3542 = vmatprep.subr.mxu0 0.0
    %3543 = vmatpush2.msra.mxu0 0.0
    %3544 = vmatprep.mubr.f32.mxu0 0.0
    %3545 = vmatmul.mubr.f32.gmra.mxu0 %v3475
    %v3546 = vpop.f32.mrf.mxu0
    %v3547 = vadd.f32 %v3473, %v3546
    %v3548 = vpop.f32.mrf.mxu0
    %3549 = vmatprep.mubr.f32.mxu0 0.0
    %3550 = vmatmul.mubr.f32.gmra.mxu0 %v3478
    %v3551 = vpop.f32.mrf.mxu0
    %v3552 = vadd.f32 %v3473, %v3551
    %v3553 = vpop.f32.mrf.mxu0
    %3554 = vdwg.mxu0
    %3555 = vst [vmem:[#allocation7] sm:$0xff] %v3547
    %3556 = vst [vmem:[#allocation7 + $0x8] sm:$0xff] %v3552
    // Predicated region
    $region18: #{tpu_custom_call.1} parent=1 // pred_check
      _
    $region19: #{tpu_custom_call.1} parent=1 // pred_check_branch
      %3558 = sbr.rel (0) target = $region21
    $region20: #{tpu_custom_call.1} parent=1 // pred_region
      %s3560 = ssub.s32 256, 256
      %3561 = vsyncadd [#allocation4], %s3560
      %s3562 = sshll.u32 [#allocation7], 4
      %s3563 = int_to_ptr.vmem [resolvable:$true] %s3562
      %3568 = dma.vmem_to_hbm [thread:$0]  %s3563, 256, %s2, [#allocation4], 128, 128, 8
    $region21: #{tpu_custom_call.1} parent=1 // pred_fallthru
      _
    // Predicated region
    $region22: #{tpu_custom_call.1} parent=1 // pred_check
      _
    $region23: #{tpu_custom_call.1} parent=1 // pred_check_branch
      %3570 = sbr.rel (0) target = $region25
    $region24: #{tpu_custom_call.1} parent=1 // pred_region
      %3571 = dma.done [#allocation4], 256
    $region25: #{tpu_custom_call.1} parent=1 // pred_fallthru
      _
    %3572 = vsyncpa [#allocation3], 1
    %3573 = vsyncpa [#allocation6], 1
    %3574 = vsyncpa [#allocation4], 1

</llo_original>
